<compile_context>
chip_gen: v7x
topology: tpu7x:2x2x1
jax: 0.10.0
libtpu: 0.0.40
codegen_flags: <defaults>
</compile_context>

<pallas_src>
import jax
import jax.numpy as jnp
from jax import lax
from jax.experimental import pallas as pl
from jax.experimental.pallas import tpu as pltpu

KERNEL_SIZE = 3
NUM_CHANNELS = 64
REDUCTION_RATIO = 16


def rcab_kernel(x_ref, w1_ref, b1_ref, w2_ref, b2_ref,
                wd_ref, bd_ref, wu_ref, bu_ref, o_ref, pad_ref, win_ref):
    """One grid step handles a block of images of shape (Bb, H, W, C)."""
    Bb, H, W, C = x_ref.shape
    Hp = H + 2
    HW = H * W

    # Zero the padded scratch once per grid step (cheap). Only the 1-px border
    # needs to stay zero; the interior is fully overwritten by every conv call.
    pad_ref[...] = jnp.zeros_like(pad_ref)

    def conv3x3(inp_hwc_f32, w_ref, b_ref):
        # Interior write (border stays zero).
        pad_ref[1:1 + H, 1:1 + W, :] = inp_hwc_f32
        # Stage the 3 dx-shifted windows side by side (lane blocks of C), bf16.
        for dx in range(KERNEL_SIZE):
            win_ref[:, dx * C:(dx + 1) * C] = (
                pad_ref[:, dx:dx + W, :].reshape(Hp * W, C)
                .astype(jnp.bfloat16))
        # 3 deep-K matmuls (K = 3*C), one per dy; dy taps are sublane-aligned
        # row slices (offsets 0, W, 2W) of the staged window buffer.
        acc = jnp.zeros((HW, C), jnp.float32)
        for dy in range(KERNEL_SIZE):
            acc = acc + jnp.dot(win_ref[dy * W:dy * W + HW, :], w_ref[dy],
                                preferred_element_type=jnp.float32)
        return acc + b_ref[...]                            # (HW, C) f32

    for i in range(Bb):
        x_img = x_ref[i]                                   # (H, W, C) f32

        # feature extractor: conv3x3 -> ReLU -> conv3x3
        h1 = jnp.maximum(conv3x3(x_img, w1_ref, b1_ref), 0.0)       # (HW, C)
        res = conv3x3(h1.reshape(H, W, C), w2_ref, b2_ref)          # (HW, C)

        # channel attention: GAP -> 1x1 down -> ReLU -> 1x1 up -> sigmoid
        pooled = jnp.mean(res, axis=0, keepdims=True)               # (1, C)
        z = jnp.maximum(
            jnp.dot(pooled, wd_ref[...],
                    preferred_element_type=jnp.float32) + bd_ref[...], 0.0)
        s = jax.nn.sigmoid(
            jnp.dot(z, wu_ref[...],
                    preferred_element_type=jnp.float32) + bu_ref[...])

        out = x_img.reshape(HW, C) + res * s
        o_ref[i] = out.reshape(H, W, C).astype(o_ref.dtype)


def _pick_block_n(n):
    # Batch a few images per grid step, but keep >=2 grid steps when possible
    # so both TensorCores (megacore / v7x) get work.
    for d in (4, 3, 2):
        if n % d == 0 and n // d >= 2:
            return d
    return 1


def rcab_forward(x_nchw, params, block_n=None):
    """x_nchw: (N, C, H, W) float32.  params: tuple in kernel layout."""
    w1, b1, w2, b2, wd, bd, wu, bu = params
    N, C, H, W = x_nchw.shape
    Cr = wd.shape[-1]
    if block_n is None:
        block_n = _pick_block_n(N)
    assert N % block_n == 0

    x = jnp.transpose(x_nchw, (0, 2, 3, 1))                # -> NHWC

    out = pl.pallas_call(
        rcab_kernel,
        out_shape=jax.ShapeDtypeStruct((N, H, W, C), x.dtype),
        grid_spec=pltpu.PrefetchScalarGridSpec(
            num_scalar_prefetch=0,
            grid=(N // block_n,),
            in_specs=[
                pl.BlockSpec((block_n, H, W, C), lambda n: (n, 0, 0, 0)),
                pl.BlockSpec((KERNEL_SIZE, KERNEL_SIZE * C, C),
                             lambda n: (0, 0, 0)),                    # w1 bf16
                pl.BlockSpec((1, C), lambda n: (0, 0)),               # b1
                pl.BlockSpec((KERNEL_SIZE, KERNEL_SIZE * C, C),
                             lambda n: (0, 0, 0)),                    # w2 bf16
                pl.BlockSpec((1, C), lambda n: (0, 0)),               # b2
                pl.BlockSpec((C, Cr), lambda n: (0, 0)),              # wd
                pl.BlockSpec((1, Cr), lambda n: (0, 0)),              # bd
                pl.BlockSpec((Cr, C), lambda n: (0, 0)),              # wu
                pl.BlockSpec((1, C), lambda n: (0, 0)),               # bu
            ],
            out_specs=pl.BlockSpec((block_n, H, W, C),
                                   lambda n: (n, 0, 0, 0)),
            scratch_shapes=[
                pltpu.VMEM((H + 2, W + 2, C), jnp.float32),            # pad
                pltpu.VMEM(((H + 2) * W, KERNEL_SIZE * C), jnp.bfloat16),  # win
            ],
        ),
        compiler_params=pltpu.CompilerParams(
            dimension_semantics=("parallel",),
            vmem_limit_bytes=32 * 1024 * 1024),
    )(x, w1, b1, w2, b2, wd, bd, wu, bu)

    return jnp.transpose(out, (0, 3, 1, 2))                # -> NCHW


def ref_forward(x, w1o, b1, w2o, b2, wdo, bd, wuo, bu):
    """Pure-JAX NCHW reference matching the PyTorch module.

    The feature-extractor inputs/weights are rounded to bf16 (math in f32,
    HIGHEST precision) to mirror the kernel's bf16 MXU inputs with f32
    accumulation; the residual add and channel attention stay f32."""
    def q(t):
        return t.astype(jnp.bfloat16).astype(jnp.float32)

    def conv(inp, w, b, pad):
        y = lax.conv_general_dilated(
            inp, w, (1, 1), [(pad, pad), (pad, pad)],
            dimension_numbers=('NCHW', 'OIHW', 'NCHW'),
            precision=lax.Precision.HIGHEST)
        return y + b[None, :, None, None]

    h1 = jnp.maximum(conv(q(x), q(w1o), b1, 1), 0.0)
    res = conv(q(h1), q(w2o), b2, 1)
    pooled = jnp.mean(res, axis=(2, 3), keepdims=True)
    z = jnp.maximum(conv(pooled, wdo, bd, 0), 0.0)
    s = jax.nn.sigmoid(conv(z, wuo, bu, 0))
    return x + res * s


if __name__ == "__main__":
    # Module-consistent small shapes: C must be NUM_CHANNELS=64 so the
    # reduction_ratio=16 bottleneck (64 -> 4 -> 64) is exact.
    N, C, H, W = 2, NUM_CHANNELS, 16, 16
    Cr = C // REDUCTION_RATIO

    key = jax.random.PRNGKey(0)
    keys = jax.random.split(key, 9)

    x = jax.random.normal(keys[0], (N, C, H, W), jnp.float32)

    # deterministic synthetic parameters (PyTorch OIHW conventions)
    w1_oihw = 0.05 * jax.random.normal(keys[1], (C, C, 3, 3), jnp.float32)
    b1 = 0.05 * jax.random.normal(keys[2], (C,), jnp.float32)
    w2_oihw = 0.05 * jax.random.normal(keys[3], (C, C, 3, 3), jnp.float32)
    b2 = 0.05 * jax.random.normal(keys[4], (C,), jnp.float32)
    wd_oihw = 0.05 * jax.random.normal(keys[5], (Cr, C, 1, 1), jnp.float32)
    bd = 0.05 * jax.random.normal(keys[6], (Cr,), jnp.float32)
    wu_oihw = 0.05 * jax.random.normal(keys[7], (C, Cr, 1, 1), jnp.float32)
    bu = 0.05 * jax.random.normal(keys[8], (C,), jnp.float32)

    # kernel layout:
    #   3x3 convs: OIHW -> (kH, kW, Cin, Cout) -> fused (kH, kW*Cin, Cout), bf16
    #   1x1 convs: (Cin, Cout), f32
    def fuse3x3(w_oihw):
        w_k = jnp.transpose(w_oihw, (2, 3, 1, 0))          # (kH, kW, Cin, Cout)
        return w_k.reshape(KERNEL_SIZE, KERNEL_SIZE * C, C).astype(jnp.bfloat16)

    params = (
        fuse3x3(w1_oihw), b1.reshape(1, C),
        fuse3x3(w2_oihw), b2.reshape(1, C),
        wd_oihw[:, :, 0, 0].T, bd.reshape(1, Cr),
        wu_oihw[:, :, 0, 0].T, bu.reshape(1, C),
    )

    out = rcab_forward(x, params)
    out = jax.block_until_ready(out)

    ref = ref_forward(x, w1_oihw, b1, w2_oihw, b2, wd_oihw, bd, wu_oihw, bu)
    assert out.shape == (N, C, H, W)
    assert jnp.allclose(out, ref, atol=2e-3, rtol=2e-3), (
        "mismatch vs reference: max abs diff = "
        + str(float(jnp.max(jnp.abs(out - ref)))))

    print("KERNEL_OK")
</pallas_src>

<mosaic_0001>
module attributes {stable_mosaic.version = 11 : i64} {
  func.func @rcab_kernel(%arg0: i32, %arg1: memref<1x16x16x64xf32, #tpu.memory_space<vmem>>, %arg2: memref<3x192x64xbf16, #tpu.memory_space<vmem>>, %arg3: memref<1x64xf32, #tpu.memory_space<vmem>>, %arg4: memref<3x192x64xbf16, #tpu.memory_space<vmem>>, %arg5: memref<1x64xf32, #tpu.memory_space<vmem>>, %arg6: memref<64x4xf32, #tpu.memory_space<vmem>>, %arg7: memref<1x4xf32, #tpu.memory_space<vmem>>, %arg8: memref<4x64xf32, #tpu.memory_space<vmem>>, %arg9: memref<1x64xf32, #tpu.memory_space<vmem>>, %arg10: memref<1x16x16x64xf32, #tpu.memory_space<vmem>>, %arg11: memref<18x18x64xf32, #tpu.memory_space<vmem>>, %arg12: memref<288x192xbf16, #tpu.memory_space<vmem>>) attributes {dimension_semantics = [#tpu.dimension_semantics<parallel>], iteration_bounds = array<i64: 2>, scalar_prefetch = 0 : i64, scratch_operands = 2 : i64, tpu.core_type = #tpu.core_type<tc>, window_params = [{transform_indices = @transform_0, window_bounds = array<i64: 1, 16, 16, 64>}, {pipeline_mode = #tpu.pipeline_mode<synchronous>, transform_indices = @transform_1, window_bounds = array<i64: 3, 192, 64>}, {pipeline_mode = #tpu.pipeline_mode<synchronous>, transform_indices = @transform_2, window_bounds = array<i64: 1, 64>}, {pipeline_mode = #tpu.pipeline_mode<synchronous>, transform_indices = @transform_3, window_bounds = array<i64: 3, 192, 64>}, {pipeline_mode = #tpu.pipeline_mode<synchronous>, transform_indices = @transform_4, window_bounds = array<i64: 1, 64>}, {pipeline_mode = #tpu.pipeline_mode<synchronous>, transform_indices = @transform_5, window_bounds = array<i64: 64, 4>}, {pipeline_mode = #tpu.pipeline_mode<synchronous>, transform_indices = @transform_6, window_bounds = array<i64: 1, 4>}, {pipeline_mode = #tpu.pipeline_mode<synchronous>, transform_indices = @transform_7, window_bounds = array<i64: 4, 64>}, {pipeline_mode = #tpu.pipeline_mode<synchronous>, transform_indices = @transform_8, window_bounds = array<i64: 1, 64>}, {transform_indices = @transform_9, window_bounds = array<i64: 1, 16, 16, 64>}]} {
    %cst = arith.constant 0.000000e+00 : f32
    %0 = vector.broadcast %cst : f32 to vector<18x18x64xf32>
    %c0 = arith.constant 0 : index
    %c0_0 = arith.constant 0 : index
    %c0_1 = arith.constant 0 : index
    %1 = vector.load %arg11[%c0, %c0_0, %c0_1] : memref<18x18x64xf32, #tpu.memory_space<vmem>>, vector<18x18x64xf32>
    tpu.vector_store %arg11[%c0, %c0_0, %c0_1], %0 {strides = array<i32>} : memref<18x18x64xf32, #tpu.memory_space<vmem>>, vector<18x18x64xf32>,
    %c0_2 = arith.constant 0 : index
    %c0_3 = arith.constant 0 : index
    %c0_4 = arith.constant 0 : index
    %c0_5 = arith.constant 0 : index
    %2 = vector.load %arg1[%c0_2, %c0_3, %c0_4, %c0_5] : memref<1x16x16x64xf32, #tpu.memory_space<vmem>>, vector<1x16x16x64xf32>
    %3 = vector.shape_cast %2 : vector<1x16x16x64xf32> to vector<16x16x64xf32>
    %c1 = arith.constant 1 : index
    %c1_6 = arith.constant 1 : index
    %c0_7 = arith.constant 0 : index
    %4 = vector.load %arg11[%c1, %c1_6, %c0_7] : memref<18x18x64xf32, #tpu.memory_space<vmem>>, vector<16x16x64xf32>
    tpu.vector_store %arg11[%c1, %c1_6, %c0_7], %3 {strides = array<i32>} : memref<18x18x64xf32, #tpu.memory_space<vmem>>, vector<16x16x64xf32>,
    %c0_8 = arith.constant 0 : index
    %c0_9 = arith.constant 0 : index
    %c0_10 = arith.constant 0 : index
    %5 = vector.load %arg11[%c0_8, %c0_9, %c0_10] : memref<18x18x64xf32, #tpu.memory_space<vmem>>, vector<18x16x64xf32>
    %6 = vector.shape_cast %5 : vector<18x16x64xf32> to vector<288x64xf32>
    %7 = arith.truncf %6 : vector<288x64xf32> to vector<288x64xbf16>
    %c0_11 = arith.constant 0 : index
    %c0_12 = arith.constant 0 : index
    %8 = vector.load %arg12[%c0_11, %c0_12] : memref<288x192xbf16, #tpu.memory_space<vmem>>, vector<288x64xbf16>
    tpu.vector_store %arg12[%c0_11, %c0_12], %7 {strides = array<i32>} : memref<288x192xbf16, #tpu.memory_space<vmem>>, vector<288x64xbf16>,
    %c0_13 = arith.constant 0 : index
    %c1_14 = arith.constant 1 : index
    %c0_15 = arith.constant 0 : index
    %9 = vector.load %arg11[%c0_13, %c1_14, %c0_15] : memref<18x18x64xf32, #tpu.memory_space<vmem>>, vector<18x16x64xf32>
    %10 = vector.shape_cast %9 : vector<18x16x64xf32> to vector<288x64xf32>
    %11 = arith.truncf %10 : vector<288x64xf32> to vector<288x64xbf16>
    %c0_16 = arith.constant 0 : index
    %c64 = arith.constant 64 : index
    %12 = vector.load %arg12[%c0_16, %c64] : memref<288x192xbf16, #tpu.memory_space<vmem>>, vector<288x64xbf16>
    tpu.vector_store %arg12[%c0_16, %c64], %11 {strides = array<i32>} : memref<288x192xbf16, #tpu.memory_space<vmem>>, vector<288x64xbf16>,
    %c0_17 = arith.constant 0 : index
    %c2 = arith.constant 2 : index
    %c0_18 = arith.constant 0 : index
    %13 = vector.load %arg11[%c0_17, %c2, %c0_18] : memref<18x18x64xf32, #tpu.memory_space<vmem>>, vector<18x16x64xf32>
    %14 = vector.shape_cast %13 : vector<18x16x64xf32> to vector<288x64xf32>
    %15 = arith.truncf %14 : vector<288x64xf32> to vector<288x64xbf16>
    %c0_19 = arith.constant 0 : index
    %c128 = arith.constant 128 : index
    %16 = vector.load %arg12[%c0_19, %c128] : memref<288x192xbf16, #tpu.memory_space<vmem>>, vector<288x64xbf16>
    tpu.vector_store %arg12[%c0_19, %c128], %15 {strides = array<i32>} : memref<288x192xbf16, #tpu.memory_space<vmem>>, vector<288x64xbf16>,
    %cst_20 = arith.constant 0.000000e+00 : f32
    %17 = vector.broadcast %cst_20 : f32 to vector<256x64xf32>
    %c0_21 = arith.constant 0 : index
    %c0_22 = arith.constant 0 : index
    %18 = vector.load %arg12[%c0_21, %c0_22] : memref<288x192xbf16, #tpu.memory_space<vmem>>, vector<256x192xbf16>
    %c0_23 = arith.constant 0 : index
    %c0_24 = arith.constant 0 : index
    %c0_25 = arith.constant 0 : index
    %19 = vector.load %arg2[%c0_23, %c0_24, %c0_25] : memref<3x192x64xbf16, #tpu.memory_space<vmem>>, vector<1x192x64xbf16>
    %20 = vector.shape_cast %19 : vector<1x192x64xbf16> to vector<192x64xbf16>
    %cst_26 = arith.constant dense<0.000000e+00> : vector<256x64xf32>
    %21 = tpu.matmul %18, %20, %cst_26 {dimension_numbers = #tpu.dot_dimension_numbers<[1], [0], [0], [1], [0, 0, 1, 1], [], []>} : vector<256x192xbf16>, vector<192x64xbf16>, vector<256x64xf32> -> vector<256x64xf32>
    %22 = arith.addf %17, %21 : vector<256x64xf32>
    %c16 = arith.constant 16 : index
    %c0_27 = arith.constant 0 : index
    %23 = vector.load %arg12[%c16, %c0_27] : memref<288x192xbf16, #tpu.memory_space<vmem>>, vector<256x192xbf16>
    %c1_28 = arith.constant 1 : index
    %c0_29 = arith.constant 0 : index
    %c0_30 = arith.constant 0 : index
    %24 = vector.load %arg2[%c1_28, %c0_29, %c0_30] : memref<3x192x64xbf16, #tpu.memory_space<vmem>>, vector<1x192x64xbf16>
    %25 = vector.shape_cast %24 : vector<1x192x64xbf16> to vector<192x64xbf16>
    %cst_31 = arith.constant dense<0.000000e+00> : vector<256x64xf32>
    %26 = tpu.matmul %23, %25, %cst_31 {dimension_numbers = #tpu.dot_dimension_numbers<[1], [0], [0], [1], [0, 0, 1, 1], [], []>} : vector<256x192xbf16>, vector<192x64xbf16>, vector<256x64xf32> -> vector<256x64xf32>
    %27 = arith.addf %22, %26 : vector<256x64xf32>
    %c32 = arith.constant 32 : index
    %c0_32 = arith.constant 0 : index
    %28 = vector.load %arg12[%c32, %c0_32] : memref<288x192xbf16, #tpu.memory_space<vmem>>, vector<256x192xbf16>
    %c2_33 = arith.constant 2 : index
    %c0_34 = arith.constant 0 : index
    %c0_35 = arith.constant 0 : index
    %29 = vector.load %arg2[%c2_33, %c0_34, %c0_35] : memref<3x192x64xbf16, #tpu.memory_space<vmem>>, vector<1x192x64xbf16>
    %30 = vector.shape_cast %29 : vector<1x192x64xbf16> to vector<192x64xbf16>
    %cst_36 = arith.constant dense<0.000000e+00> : vector<256x64xf32>
    %31 = tpu.matmul %28, %30, %cst_36 {dimension_numbers = #tpu.dot_dimension_numbers<[1], [0], [0], [1], [0, 0, 1, 1], [], []>} : vector<256x192xbf16>, vector<192x64xbf16>, vector<256x64xf32> -> vector<256x64xf32>
    %32 = arith.addf %27, %31 : vector<256x64xf32>
    %c0_37 = arith.constant 0 : index
    %c0_38 = arith.constant 0 : index
    %33 = vector.load %arg3[%c0_37, %c0_38] : memref<1x64xf32, #tpu.memory_space<vmem>>, vector<1x64xf32>
    %34 = vector.broadcast %33 : vector<1x64xf32> to vector<256x64xf32>
    %35 = arith.addf %32, %34 : vector<256x64xf32>
    %cst_39 = arith.constant 0.000000e+00 : f32
    %36 = vector.broadcast %cst_39 : f32 to vector<256x64xf32>
    %37 = arith.maximumf %35, %36 : vector<256x64xf32>
    %38 = vector.shape_cast %37 : vector<256x64xf32> to vector<16x16x64xf32>
    %c1_40 = arith.constant 1 : index
    %c1_41 = arith.constant 1 : index
    %c0_42 = arith.constant 0 : index
    %39 = vector.load %arg11[%c1_40, %c1_41, %c0_42] : memref<18x18x64xf32, #tpu.memory_space<vmem>>, vector<16x16x64xf32>
    tpu.vector_store %arg11[%c1_40, %c1_41, %c0_42], %38 {strides = array<i32>} : memref<18x18x64xf32, #tpu.memory_space<vmem>>, vector<16x16x64xf32>,
    %c0_43 = arith.constant 0 : index
    %c0_44 = arith.constant 0 : index
    %c0_45 = arith.constant 0 : index
    %40 = vector.load %arg11[%c0_43, %c0_44, %c0_45] : memref<18x18x64xf32, #tpu.memory_space<vmem>>, vector<18x16x64xf32>
    %41 = vector.shape_cast %40 : vector<18x16x64xf32> to vector<288x64xf32>
    %42 = arith.truncf %41 : vector<288x64xf32> to vector<288x64xbf16>
    %c0_46 = arith.constant 0 : index
    %c0_47 = arith.constant 0 : index
    %43 = vector.load %arg12[%c0_46, %c0_47] : memref<288x192xbf16, #tpu.memory_space<vmem>>, vector<288x64xbf16>
    tpu.vector_store %arg12[%c0_46, %c0_47], %42 {strides = array<i32>} : memref<288x192xbf16, #tpu.memory_space<vmem>>, vector<288x64xbf16>,
    %c0_48 = arith.constant 0 : index
    %c1_49 = arith.constant 1 : index
    %c0_50 = arith.constant 0 : index
    %44 = vector.load %arg11[%c0_48, %c1_49, %c0_50] : memref<18x18x64xf32, #tpu.memory_space<vmem>>, vector<18x16x64xf32>
    %45 = vector.shape_cast %44 : vector<18x16x64xf32> to vector<288x64xf32>
    %46 = arith.truncf %45 : vector<288x64xf32> to vector<288x64xbf16>
    %c0_51 = arith.constant 0 : index
    %c64_52 = arith.constant 64 : index
    %47 = vector.load %arg12[%c0_51, %c64_52] : memref<288x192xbf16, #tpu.memory_space<vmem>>, vector<288x64xbf16>
    tpu.vector_store %arg12[%c0_51, %c64_52], %46 {strides = array<i32>} : memref<288x192xbf16, #tpu.memory_space<vmem>>, vector<288x64xbf16>,
    %c0_53 = arith.constant 0 : index
    %c2_54 = arith.constant 2 : index
    %c0_55 = arith.constant 0 : index
    %48 = vector.load %arg11[%c0_53, %c2_54, %c0_55] : memref<18x18x64xf32, #tpu.memory_space<vmem>>, vector<18x16x64xf32>
    %49 = vector.shape_cast %48 : vector<18x16x64xf32> to vector<288x64xf32>
    %50 = arith.truncf %49 : vector<288x64xf32> to vector<288x64xbf16>
    %c0_56 = arith.constant 0 : index
    %c128_57 = arith.constant 128 : index
    %51 = vector.load %arg12[%c0_56, %c128_57] : memref<288x192xbf16, #tpu.memory_space<vmem>>, vector<288x64xbf16>
    tpu.vector_store %arg12[%c0_56, %c128_57], %50 {strides = array<i32>} : memref<288x192xbf16, #tpu.memory_space<vmem>>, vector<288x64xbf16>,
    %cst_58 = arith.constant 0.000000e+00 : f32
    %52 = vector.broadcast %cst_58 : f32 to vector<256x64xf32>
    %c0_59 = arith.constant 0 : index
    %c0_60 = arith.constant 0 : index
    %53 = vector.load %arg12[%c0_59, %c0_60] : memref<288x192xbf16, #tpu.memory_space<vmem>>, vector<256x192xbf16>
    %c0_61 = arith.constant 0 : index
    %c0_62 = arith.constant 0 : index
    %c0_63 = arith.constant 0 : index
    %54 = vector.load %arg4[%c0_61, %c0_62, %c0_63] : memref<3x192x64xbf16, #tpu.memory_space<vmem>>, vector<1x192x64xbf16>
    %55 = vector.shape_cast %54 : vector<1x192x64xbf16> to vector<192x64xbf16>
    %cst_64 = arith.constant dense<0.000000e+00> : vector<256x64xf32>
    %56 = tpu.matmul %53, %55, %cst_64 {dimension_numbers = #tpu.dot_dimension_numbers<[1], [0], [0], [1], [0, 0, 1, 1], [], []>} : vector<256x192xbf16>, vector<192x64xbf16>, vector<256x64xf32> -> vector<256x64xf32>
    %57 = arith.addf %52, %56 : vector<256x64xf32>
    %c16_65 = arith.constant 16 : index
    %c0_66 = arith.constant 0 : index
    %58 = vector.load %arg12[%c16_65, %c0_66] : memref<288x192xbf16, #tpu.memory_space<vmem>>, vector<256x192xbf16>
    %c1_67 = arith.constant 1 : index
    %c0_68 = arith.constant 0 : index
    %c0_69 = arith.constant 0 : index
    %59 = vector.load %arg4[%c1_67, %c0_68, %c0_69] : memref<3x192x64xbf16, #tpu.memory_space<vmem>>, vector<1x192x64xbf16>
    %60 = vector.shape_cast %59 : vector<1x192x64xbf16> to vector<192x64xbf16>
    %cst_70 = arith.constant dense<0.000000e+00> : vector<256x64xf32>
    %61 = tpu.matmul %58, %60, %cst_70 {dimension_numbers = #tpu.dot_dimension_numbers<[1], [0], [0], [1], [0, 0, 1, 1], [], []>} : vector<256x192xbf16>, vector<192x64xbf16>, vector<256x64xf32> -> vector<256x64xf32>
    %62 = arith.addf %57, %61 : vector<256x64xf32>
    %c32_71 = arith.constant 32 : index
    %c0_72 = arith.constant 0 : index
    %63 = vector.load %arg12[%c32_71, %c0_72] : memref<288x192xbf16, #tpu.memory_space<vmem>>, vector<256x192xbf16>
    %c2_73 = arith.constant 2 : index
    %c0_74 = arith.constant 0 : index
    %c0_75 = arith.constant 0 : index
    %64 = vector.load %arg4[%c2_73, %c0_74, %c0_75] : memref<3x192x64xbf16, #tpu.memory_space<vmem>>, vector<1x192x64xbf16>
    %65 = vector.shape_cast %64 : vector<1x192x64xbf16> to vector<192x64xbf16>
    %cst_76 = arith.constant dense<0.000000e+00> : vector<256x64xf32>
    %66 = tpu.matmul %63, %65, %cst_76 {dimension_numbers = #tpu.dot_dimension_numbers<[1], [0], [0], [1], [0, 0, 1, 1], [], []>} : vector<256x192xbf16>, vector<192x64xbf16>, vector<256x64xf32> -> vector<256x64xf32>
    %67 = arith.addf %62, %66 : vector<256x64xf32>
    %c0_77 = arith.constant 0 : index
    %c0_78 = arith.constant 0 : index
    %68 = vector.load %arg5[%c0_77, %c0_78] : memref<1x64xf32, #tpu.memory_space<vmem>>, vector<1x64xf32>
    %69 = vector.broadcast %68 : vector<1x64xf32> to vector<256x64xf32>
    %70 = arith.addf %67, %69 : vector<256x64xf32>
    %cst_79 = arith.constant dense<0.000000e+00> : vector<64xf32>
    %71 = vector.multi_reduction <add>, %70, %cst_79 [0] : vector<256x64xf32> to vector<64xf32>
    %72 = vector.shape_cast %71 : vector<64xf32> to vector<1x64xf32>
    %cst_80 = arith.constant 2.560000e+02 : f32
    %73 = vector.broadcast %cst_80 : f32 to vector<1x64xf32>
    %74 = arith.divf %72, %73 : vector<1x64xf32>
    %c0_81 = arith.constant 0 : index
    %c0_82 = arith.constant 0 : index
    %75 = vector.load %arg6[%c0_81, %c0_82] : memref<64x4xf32, #tpu.memory_space<vmem>>, vector<64x4xf32>
    %cst_83 = arith.constant dense<0.000000e+00> : vector<1x4xf32>
    %76 = tpu.matmul %74, %75, %cst_83 {dimension_numbers = #tpu.dot_dimension_numbers<[1], [0], [0], [1], [0, 0, 1, 1], [], []>} : vector<1x64xf32>, vector<64x4xf32>, vector<1x4xf32> -> vector<1x4xf32>
    %c0_84 = arith.constant 0 : index
    %c0_85 = arith.constant 0 : index
    %77 = vector.load %arg7[%c0_84, %c0_85] : memref<1x4xf32, #tpu.memory_space<vmem>>, vector<1x4xf32>
    %78 = arith.addf %76, %77 : vector<1x4xf32>
    %cst_86 = arith.constant 0.000000e+00 : f32
    %79 = vector.broadcast %cst_86 : f32 to vector<1x4xf32>
    %80 = arith.maximumf %78, %79 : vector<1x4xf32>
    %c0_87 = arith.constant 0 : index
    %c0_88 = arith.constant 0 : index
    %81 = vector.load %arg8[%c0_87, %c0_88] : memref<4x64xf32, #tpu.memory_space<vmem>>, vector<4x64xf32>
    %cst_89 = arith.constant dense<0.000000e+00> : vector<1x64xf32>
    %82 = tpu.matmul %80, %81, %cst_89 {dimension_numbers = #tpu.dot_dimension_numbers<[1], [0], [0], [1], [0, 0, 1, 1], [], []>} : vector<1x4xf32>, vector<4x64xf32>, vector<1x64xf32> -> vector<1x64xf32>
    %c0_90 = arith.constant 0 : index
    %c0_91 = arith.constant 0 : index
    %83 = vector.load %arg9[%c0_90, %c0_91] : memref<1x64xf32, #tpu.memory_space<vmem>>, vector<1x64xf32>
    %84 = arith.addf %82, %83 : vector<1x64xf32>
    %85 = arith.negf %84 : vector<1x64xf32>
    %86 = math.exp %85 : vector<1x64xf32>
    %cst_92 = arith.constant 1.000000e+00 : f32
    %87 = vector.broadcast %cst_92 : f32 to vector<1x64xf32>
    %88 = arith.addf %87, %86 : vector<1x64xf32>
    %89 = arith.divf %87, %88 : vector<1x64xf32>
    %90 = vector.shape_cast %3 : vector<16x16x64xf32> to vector<256x64xf32>
    %91 = vector.broadcast %89 : vector<1x64xf32> to vector<256x64xf32>
    %92 = arith.mulf %70, %91 : vector<256x64xf32>
    %93 = arith.addf %90, %92 : vector<256x64xf32>
    %94 = vector.shape_cast %93 : vector<256x64xf32> to vector<16x16x64xf32>
    %c0_93 = arith.constant 0 : index
    %c0_94 = arith.constant 0 : index
    %c0_95 = arith.constant 0 : index
    %c0_96 = arith.constant 0 : index
    %95 = vector.load %arg10[%c0_93, %c0_94, %c0_95, %c0_96] : memref<1x16x16x64xf32, #tpu.memory_space<vmem>>, vector<1x16x16x64xf32>
    %96 = vector.shape_cast %95 : vector<1x16x16x64xf32> to vector<16x16x64xf32>
    %97 = vector.shape_cast %94 : vector<16x16x64xf32> to vector<1x16x16x64xf32>
    tpu.vector_store %arg10[%c0_93, %c0_94, %c0_95, %c0_96], %97 {strides = array<i32>} : memref<1x16x16x64xf32, #tpu.memory_space<vmem>>, vector<1x16x16x64xf32>,
    return
  }
  func.func @transform_0(%arg0: i32) -> (i32, i32, i32, i32) {
    %c0_i32 = arith.constant 0 : i32
    %c0_i32_0 = arith.constant 0 : i32
    %c0_i32_1 = arith.constant 0 : i32
    %c0_i32_2 = arith.constant 0 : i32
    return %arg0, %c0_i32, %c0_i32_0, %c0_i32_1 : i32, i32, i32, i32
  }
  func.func @transform_1(%arg0: i32) -> (i32, i32, i32) {
    %c0_i32 = arith.constant 0 : i32
    %c0_i32_0 = arith.constant 0 : i32
    %c0_i32_1 = arith.constant 0 : i32
    %c0_i32_2 = arith.constant 0 : i32
    return %c0_i32, %c0_i32_0, %c0_i32_1 : i32, i32, i32
  }
  func.func @transform_2(%arg0: i32) -> (i32, i32) {
    %c0_i32 = arith.constant 0 : i32
    %c0_i32_0 = arith.constant 0 : i32
    %c0_i32_1 = arith.constant 0 : i32
    return %c0_i32, %c0_i32_0 : i32, i32
  }
  func.func @transform_3(%arg0: i32) -> (i32, i32, i32) {
    %c0_i32 = arith.constant 0 : i32
    %c0_i32_0 = arith.constant 0 : i32
    %c0_i32_1 = arith.constant 0 : i32
    %c0_i32_2 = arith.constant 0 : i32
    return %c0_i32, %c0_i32_0, %c0_i32_1 : i32, i32, i32
  }
  func.func @transform_4(%arg0: i32) -> (i32, i32) {
    %c0_i32 = arith.constant 0 : i32
    %c0_i32_0 = arith.constant 0 : i32
    %c0_i32_1 = arith.constant 0 : i32
    return %c0_i32, %c0_i32_0 : i32, i32
  }
  func.func @transform_5(%arg0: i32) -> (i32, i32) {
    %c0_i32 = arith.constant 0 : i32
    %c0_i32_0 = arith.constant 0 : i32
    %c0_i32_1 = arith.constant 0 : i32
    return %c0_i32, %c0_i32_0 : i32, i32
  }
  func.func @transform_6(%arg0: i32) -> (i32, i32) {
    %c0_i32 = arith.constant 0 : i32
    %c0_i32_0 = arith.constant 0 : i32
    %c0_i32_1 = arith.constant 0 : i32
    return %c0_i32, %c0_i32_0 : i32, i32
  }
  func.func @transform_7(%arg0: i32) -> (i32, i32) {
    %c0_i32 = arith.constant 0 : i32
    %c0_i32_0 = arith.constant 0 : i32
    %c0_i32_1 = arith.constant 0 : i32
    return %c0_i32, %c0_i32_0 : i32, i32
  }
  func.func @transform_8(%arg0: i32) -> (i32, i32) {
    %c0_i32 = arith.constant 0 : i32
    %c0_i32_0 = arith.constant 0 : i32
    %c0_i32_1 = arith.constant 0 : i32
    return %c0_i32, %c0_i32_0 : i32, i32
  }
  func.func @transform_9(%arg0: i32) -> (i32, i32, i32, i32) {
    %c0_i32 = arith.constant 0 : i32
    %c0_i32_0 = arith.constant 0 : i32
    %c0_i32_1 = arith.constant 0 : i32
    %c0_i32_2 = arith.constant 0 : i32
    return %arg0, %c0_i32, %c0_i32_0, %c0_i32_1 : i32, i32, i32, i32
  }
}

</mosaic_0001>

<llo_original>
// kernel: tpu_custom_call.1
$region0: #{tpu_custom_call.1}
  #allocation0 [shape = 'u32[]', space=smem, size = 0x4, offset = 0x4, fixed_abs, tag = 'smem constant byte address 0x4 - core index']
  #allocation1 [shape = 'u32[144,128]{1,0:T(1,128)}', space=vmem, size = 0x12000, scoped, tag = 'internal scratch']
  #allocation2 [shape = 'f32[18,18,64]{2,1,0:T(8,128)}', space=vmem, size = 0x36000, scoped, tag = 'scratch operand']
  #allocation3 [shape = 'bf16[288,192]{1,0:T(16,128)(2,1)}', space=vmem, size = 0x24000, scoped, tag = 'scratch operand']
  %s0 = inlined_call_operand.vmem [shape: f32[2,16,16,64], index: 0, kind: input, shape index: {}]
  %s1 = inlined_call_operand.vmem [shape: bf16[3,192,64], index: 1, kind: input, shape index: {}]
  %s2 = inlined_call_operand.vmem [shape: f32[1,64], index: 2, kind: input, shape index: {}]
  %s3 = inlined_call_operand.vmem [shape: bf16[3,192,64], index: 3, kind: input, shape index: {}]
  %s4 = inlined_call_operand.vmem [shape: f32[1,64], index: 4, kind: input, shape index: {}]
  %s5 = inlined_call_operand.vmem [shape: f32[64,4], index: 5, kind: input, shape index: {}]
  %s6 = inlined_call_operand.vmem [shape: f32[1,4], index: 6, kind: input, shape index: {}]
  %s7 = inlined_call_operand.vmem [shape: f32[4,64], index: 7, kind: input, shape index: {}]
  %s8 = inlined_call_operand.vmem [shape: f32[1,64], index: 8, kind: input, shape index: {}]
  %s9 = inlined_call_operand.hbm [shape: f32[2,16,16,64], index: 9, kind: output, shape index: {}]
  %s10 = sld [smem:[#allocation0]]
  $region69: #{tpu_custom_call.1} parent=0
    _
  %s12 = ssub.s32 1, %s10
  %s13 = scalar_select 0, %s12, %s10
  $region1: #{tpu_custom_call.1} parent=0
    #allocation4 [shape = 'u8[262144]{0}', space=vmem, size = 0x40000, scoped, tag = 'output window, operand 0']
    #allocation5 [shape = 's32[2]{0}', space=sflag, size = 0x8, scoped, tag = 'scoped memory for tpu_custom_call.1']
    %14 = vsyncpa [#allocation5], 0
    %s15 = scalar_lea.sflag [#allocation5], 1
    %16 = vsyncpa %s15, 0
    loop: start=0, step=1, limit=4
    $region2: #{tpu_custom_call.1} parent=1 // loop_pre_header
      _
    $region3: #{tpu_custom_call.1} parent=1 // loop_header
      %s18 = sphi 0, %s22
      %p19 = scmp.ge.s32.totalorder %s18, 4
      %s28 = sphi 0, %s30
      %s31 = sphi 0, %s28
      %s32 = sphi 0, %s31
      %s48 = sphi 0, %s32
      %s52 = sphi 0, %s52
      %s54 = sphi 0, %s52
      %s55 = sphi 0, %s54
      %s69 = sphi 0, %s55
      %s73 = sphi 0, %s73
      %s75 = sphi 0, %s73
      %s76 = sphi 0, %s75
      %s90 = sphi 0, %s76
      %s94 = sphi 0, %s94
      %s96 = sphi 0, %s94
      %s97 = sphi 0, %s96
      %s111 = sphi 0, %s97
      %s115 = sphi 0, %s115
      %s117 = sphi 0, %s115
      %s118 = sphi 0, %s117
      %s132 = sphi 0, %s118
      %s136 = sphi 0, %s136
      %s138 = sphi 0, %s136
      %s139 = sphi 0, %s138
      %s153 = sphi 0, %s139
      %s157 = sphi 0, %s157
      %s159 = sphi 0, %s157
      %s160 = sphi 0, %s159
      %s174 = sphi 0, %s160
      %s178 = sphi 0, %s178
      %s180 = sphi 0, %s178
      %s181 = sphi 0, %s180
      %s195 = sphi 0, %s181
      %s199 = sphi 0, %s199
      %s201 = sphi 0, %s199
      %s202 = sphi 0, %s201
      %s216 = sphi 0, %s202
      %s222 = sphi 0, %s224
      %s225 = sphi 0, %s222
      %s226 = sphi 0, %s225
      %s242 = sphi 0, %s226
    $region4: #{tpu_custom_call.1} parent=1 // loop_header_branch
      %21 = sbr.rel (%p19) target = $region8
    $region5: #{tpu_custom_call.1} parent=1 // loop_body
      %s23 = ssub.s32 %s18, 1
      %s24 = ssub.s32 %s18, 2
      %s25 = sadd.s32 %s18, 1
      %s26 = ssub.s32 %s18, %s25
      %p27 = scmp.eq.s32.totalorder %s26, 0
      %s29 = sadd.s32 %s28, 1
      %s30 = scalar_select %p27, %s28, %s29
      %p33 = pneg %p27
      %p34 = scmp.eq.s32.totalorder %s18, 1
      %p35 = por %p33, %p34
      %p36 = scmp.ne.s32.totalorder %s28, %s31
      %p37 = scmp.eq.s32.totalorder %s18, 0
      %p38 = por %p36, %p37
      %p39 = scmp.ne.s32.totalorder %s28, %s31
      %p40 = scmp.eq.s32.totalorder %s23, 1
      %p41 = por %p39, %p40
      %p42 = scmp.ne.s32.totalorder %s31, %s32
      %p43 = scmp.eq.s32.totalorder %s23, 0
      %p44 = por %p42, %p43
      %p45 = scmp.ne.s32.totalorder %s31, %s32
      %p46 = scmp.eq.s32.totalorder %s24, 1
      %p47 = por %p45, %p46
      %p49 = scmp.ne.s32.totalorder %s32, %s48
      %p50 = scmp.eq.s32.totalorder %s24, 0
      %p51 = por %p49, %p50
      %s53 = sadd.s32 %s52, 1
      %p56 = scmp.eq.s32.totalorder %s18, 1
      %p57 = scmp.ne.s32.totalorder %s52, %s54
      %p58 = scmp.eq.s32.totalorder %s18, 0
      %p59 = por %p57, %p58
      %p60 = scmp.ne.s32.totalorder %s52, %s54
      %p61 = scmp.eq.s32.totalorder %s23, 1
      %p62 = por %p60, %p61
      %p63 = scmp.ne.s32.totalorder %s54, %s55
      %p64 = scmp.eq.s32.totalorder %s23, 0
      %p65 = por %p63, %p64
      %p66 = scmp.ne.s32.totalorder %s54, %s55
      %p67 = scmp.eq.s32.totalorder %s24, 1
      %p68 = por %p66, %p67
      %p70 = scmp.ne.s32.totalorder %s55, %s69
      %p71 = scmp.eq.s32.totalorder %s24, 0
      %p72 = por %p70, %p71
      %s74 = sadd.s32 %s73, 1
      %p77 = scmp.eq.s32.totalorder %s18, 1
      %p78 = scmp.ne.s32.totalorder %s73, %s75
      %p79 = scmp.eq.s32.totalorder %s18, 0
      %p80 = por %p78, %p79
      %p81 = scmp.ne.s32.totalorder %s73, %s75
      %p82 = scmp.eq.s32.totalorder %s23, 1
      %p83 = por %p81, %p82
      %p84 = scmp.ne.s32.totalorder %s75, %s76
      %p85 = scmp.eq.s32.totalorder %s23, 0
      %p86 = por %p84, %p85
      %p87 = scmp.ne.s32.totalorder %s75, %s76
      %p88 = scmp.eq.s32.totalorder %s24, 1
      %p89 = por %p87, %p88
      %p91 = scmp.ne.s32.totalorder %s76, %s90
      %p92 = scmp.eq.s32.totalorder %s24, 0
      %p93 = por %p91, %p92
      %s95 = sadd.s32 %s94, 1
      %p98 = scmp.eq.s32.totalorder %s18, 1
      %p99 = scmp.ne.s32.totalorder %s94, %s96
      %p100 = scmp.eq.s32.totalorder %s18, 0
      %p101 = por %p99, %p100
      %p102 = scmp.ne.s32.totalorder %s94, %s96
      %p103 = scmp.eq.s32.totalorder %s23, 1
      %p104 = por %p102, %p103
      %p105 = scmp.ne.s32.totalorder %s96, %s97
      %p106 = scmp.eq.s32.totalorder %s23, 0
      %p107 = por %p105, %p106
      %p108 = scmp.ne.s32.totalorder %s96, %s97
      %p109 = scmp.eq.s32.totalorder %s24, 1
      %p110 = por %p108, %p109
      %p112 = scmp.ne.s32.totalorder %s97, %s111
      %p113 = scmp.eq.s32.totalorder %s24, 0
      %p114 = por %p112, %p113
      %s116 = sadd.s32 %s115, 1
      %p119 = scmp.eq.s32.totalorder %s18, 1
      %p120 = scmp.ne.s32.totalorder %s115, %s117
      %p121 = scmp.eq.s32.totalorder %s18, 0
      %p122 = por %p120, %p121
      %p123 = scmp.ne.s32.totalorder %s115, %s117
      %p124 = scmp.eq.s32.totalorder %s23, 1
      %p125 = por %p123, %p124
      %p126 = scmp.ne.s32.totalorder %s117, %s118
      %p127 = scmp.eq.s32.totalorder %s23, 0
      %p128 = por %p126, %p127
      %p129 = scmp.ne.s32.totalorder %s117, %s118
      %p130 = scmp.eq.s32.totalorder %s24, 1
      %p131 = por %p129, %p130
      %p133 = scmp.ne.s32.totalorder %s118, %s132
      %p134 = scmp.eq.s32.totalorder %s24, 0
      %p135 = por %p133, %p134
      %s137 = sadd.s32 %s136, 1
      %p140 = scmp.eq.s32.totalorder %s18, 1
      %p141 = scmp.ne.s32.totalorder %s136, %s138
      %p142 = scmp.eq.s32.totalorder %s18, 0
      %p143 = por %p141, %p142
      %p144 = scmp.ne.s32.totalorder %s136, %s138
      %p145 = scmp.eq.s32.totalorder %s23, 1
      %p146 = por %p144, %p145
      %p147 = scmp.ne.s32.totalorder %s138, %s139
      %p148 = scmp.eq.s32.totalorder %s23, 0
      %p149 = por %p147, %p148
      %p150 = scmp.ne.s32.totalorder %s138, %s139
      %p151 = scmp.eq.s32.totalorder %s24, 1
      %p152 = por %p150, %p151
      %p154 = scmp.ne.s32.totalorder %s139, %s153
      %p155 = scmp.eq.s32.totalorder %s24, 0
      %p156 = por %p154, %p155
      %s158 = sadd.s32 %s157, 1
      %p161 = scmp.eq.s32.totalorder %s18, 1
      %p162 = scmp.ne.s32.totalorder %s157, %s159
      %p163 = scmp.eq.s32.totalorder %s18, 0
      %p164 = por %p162, %p163
      %p165 = scmp.ne.s32.totalorder %s157, %s159
      %p166 = scmp.eq.s32.totalorder %s23, 1
      %p167 = por %p165, %p166
      %p168 = scmp.ne.s32.totalorder %s159, %s160
      %p169 = scmp.eq.s32.totalorder %s23, 0
      %p170 = por %p168, %p169
      %p171 = scmp.ne.s32.totalorder %s159, %s160
      %p172 = scmp.eq.s32.totalorder %s24, 1
      %p173 = por %p171, %p172
      %p175 = scmp.ne.s32.totalorder %s160, %s174
      %p176 = scmp.eq.s32.totalorder %s24, 0
      %p177 = por %p175, %p176
      %s179 = sadd.s32 %s178, 1
      %p182 = scmp.eq.s32.totalorder %s18, 1
      %p183 = scmp.ne.s32.totalorder %s178, %s180
      %p184 = scmp.eq.s32.totalorder %s18, 0
      %p185 = por %p183, %p184
      %p186 = scmp.ne.s32.totalorder %s178, %s180
      %p187 = scmp.eq.s32.totalorder %s23, 1
      %p188 = por %p186, %p187
      %p189 = scmp.ne.s32.totalorder %s180, %s181
      %p190 = scmp.eq.s32.totalorder %s23, 0
      %p191 = por %p189, %p190
      %p192 = scmp.ne.s32.totalorder %s180, %s181
      %p193 = scmp.eq.s32.totalorder %s24, 1
      %p194 = por %p192, %p193
      %p196 = scmp.ne.s32.totalorder %s181, %s195
      %p197 = scmp.eq.s32.totalorder %s24, 0
      %p198 = por %p196, %p197
      %s200 = sadd.s32 %s199, 1
      %p203 = scmp.eq.s32.totalorder %s18, 1
      %p204 = scmp.ne.s32.totalorder %s199, %s201
      %p205 = scmp.eq.s32.totalorder %s18, 0
      %p206 = por %p204, %p205
      %p207 = scmp.ne.s32.totalorder %s199, %s201
      %p208 = scmp.eq.s32.totalorder %s23, 1
      %p209 = por %p207, %p208
      %p210 = scmp.ne.s32.totalorder %s201, %s202
      %p211 = scmp.eq.s32.totalorder %s23, 0
      %p212 = por %p210, %p211
      %p213 = scmp.ne.s32.totalorder %s201, %s202
      %p214 = scmp.eq.s32.totalorder %s24, 1
      %p215 = por %p213, %p214
      %p217 = scmp.ne.s32.totalorder %s202, %s216
      %p218 = scmp.eq.s32.totalorder %s24, 0
      %p219 = por %p217, %p218
      %s220 = ssub.s32 %s18, %s25
      %p221 = scmp.eq.s32.totalorder %s220, 0
      %s223 = sadd.s32 %s222, 1
      %s224 = scalar_select %p221, %s222, %s223
      %p227 = pneg %p221
      %p228 = scmp.eq.s32.totalorder %s18, 1
      %p229 = por %p227, %p228
      %p230 = scmp.ne.s32.totalorder %s222, %s225
      %p231 = scmp.eq.s32.totalorder %s18, 0
      %p232 = por %p230, %p231
      %p233 = scmp.ne.s32.totalorder %s222, %s225
      %p234 = scmp.eq.s32.totalorder %s23, 1
      %p235 = por %p233, %p234
      %p236 = scmp.ne.s32.totalorder %s225, %s226
      %p237 = scmp.eq.s32.totalorder %s23, 0
      %p238 = por %p236, %p237
      %p239 = scmp.ne.s32.totalorder %s225, %s226
      %p240 = scmp.eq.s32.totalorder %s24, 1
      %p241 = por %p239, %p240
      %p243 = scmp.ne.s32.totalorder %s226, %s242
      %p244 = scmp.eq.s32.totalorder %s24, 0
      %p245 = por %p243, %p244
      %p246 = scmp.le.s32.totalorder 1, %s18
      %p247 = scmp.lt.s32.totalorder %s18, 3
      %p248 = pnand %p246, %p247
      %p249 = pneg %p248
      // Predicated region
      $region9: #{tpu_custom_call.1} parent=5 // pred_check
        _
      $region10: #{tpu_custom_call.1} parent=5 // pred_check_branch
        %251 = sbr.rel (%p248) target = $region12
      $region11: #{tpu_custom_call.1} parent=5 // pred_region
        %s252 = ssub.s32 %s18, 1
        // Predicated region
        $region13: #{tpu_custom_call.1} parent=11 // pred_check
          %p253 = pneg %p65
        $region14: #{tpu_custom_call.1} parent=11 // pred_check_branch
          %255 = sbr.rel (%p253) target = $region16
        $region15: #{tpu_custom_call.1} parent=11 // pred_region
          _
        $region16: #{tpu_custom_call.1} parent=11 // pred_fallthru
          _
        // Predicated region
        $region17: #{tpu_custom_call.1} parent=11 // pred_check
          %p256 = pneg %p86
        $region18: #{tpu_custom_call.1} parent=11 // pred_check_branch
          %258 = sbr.rel (%p256) target = $region20
        $region19: #{tpu_custom_call.1} parent=11 // pred_region
          _
        $region20: #{tpu_custom_call.1} parent=11 // pred_fallthru
          _
        // Predicated region
        $region21: #{tpu_custom_call.1} parent=11 // pred_check
          %p259 = pneg %p107
        $region22: #{tpu_custom_call.1} parent=11 // pred_check_branch
          %261 = sbr.rel (%p259) target = $region24
        $region23: #{tpu_custom_call.1} parent=11 // pred_region
          _
        $region24: #{tpu_custom_call.1} parent=11 // pred_fallthru
          _
        // Predicated region
        $region25: #{tpu_custom_call.1} parent=11 // pred_check
          %p262 = pneg %p128
        $region26: #{tpu_custom_call.1} parent=11 // pred_check_branch
          %264 = sbr.rel (%p262) target = $region28
        $region27: #{tpu_custom_call.1} parent=11 // pred_region
          _
        $region28: #{tpu_custom_call.1} parent=11 // pred_fallthru
          _
        // Predicated region
        $region29: #{tpu_custom_call.1} parent=11 // pred_check
          %p265 = pneg %p149
        $region30: #{tpu_custom_call.1} parent=11 // pred_check_branch
          %267 = sbr.rel (%p265) target = $region32
        $region31: #{tpu_custom_call.1} parent=11 // pred_region
          _
        $region32: #{tpu_custom_call.1} parent=11 // pred_fallthru
          _
        // Predicated region
        $region33: #{tpu_custom_call.1} parent=11 // pred_check
          %p268 = pneg %p170
        $region34: #{tpu_custom_call.1} parent=11 // pred_check_branch
          %270 = sbr.rel (%p268) target = $region36
        $region35: #{tpu_custom_call.1} parent=11 // pred_region
          _
        $region36: #{tpu_custom_call.1} parent=11 // pred_fallthru
          _
        // Predicated region
        $region37: #{tpu_custom_call.1} parent=11 // pred_check
          %p271 = pneg %p191
        $region38: #{tpu_custom_call.1} parent=11 // pred_check_branch
          %273 = sbr.rel (%p271) target = $region40
        $region39: #{tpu_custom_call.1} parent=11 // pred_region
          _
        $region40: #{tpu_custom_call.1} parent=11 // pred_fallthru
          _
        // Predicated region
        $region41: #{tpu_custom_call.1} parent=11 // pred_check
          %p274 = pneg %p212
        $region42: #{tpu_custom_call.1} parent=11 // pred_check_branch
          %276 = sbr.rel (%p274) target = $region44
        $region43: #{tpu_custom_call.1} parent=11 // pred_region
          _
        $region44: #{tpu_custom_call.1} parent=11 // pred_fallthru
          _
      $region12: #{tpu_custom_call.1} parent=5 // pred_fallthru
        _
      %p277 = scmp.lt.s32.totalorder %s18, 2
      // Predicated region
      $region45: #{tpu_custom_call.1} parent=5 // pred_check
        %p278 = pneg %p277
      $region46: #{tpu_custom_call.1} parent=5 // pred_check_branch
        %280 = sbr.rel (%p278) target = $region48
      $region47: #{tpu_custom_call.1} parent=5 // pred_region
        // Predicated region
        $region49: #{tpu_custom_call.1} parent=47 // pred_check
          %p281 = pneg %p38
        $region50: #{tpu_custom_call.1} parent=47 // pred_check_branch
          %283 = sbr.rel (%p281) target = $region52
        $region51: #{tpu_custom_call.1} parent=47 // pred_region
          %p284 = scmp.lt.s32.totalorder %s18, 1
          %s285 = scalar_select %p284, %s18, 1
          %s286 = smul.addr %s285, 32
          %s287 = smul.addr %s286, 8
          %s288 = scalar_lea.vmem %s0, %s287
        $region52: #{tpu_custom_call.1} parent=47 // pred_fallthru
          _
      $region48: #{tpu_custom_call.1} parent=5 // pred_fallthru
        _
      %p289 = scmp.le.s32.totalorder 1, %s18
      %p290 = scmp.lt.s32.totalorder %s18, 3
      %p291 = pnand %p289, %p290
      %p292 = pneg %p291
      // Predicated region
      $region53: #{tpu_custom_call.1} parent=5 // pred_check
        _
      $region54: #{tpu_custom_call.1} parent=5 // pred_check_branch
        %294 = sbr.rel (%p291) target = $region56
      $region55: #{tpu_custom_call.1} parent=5 // pred_region
        %s295 = ssub.s32 %s18, 1
        %p296 = scmp.lt.s32.totalorder %s23, 1
        %s297 = scalar_select %p296, %s23, 1
        %s298 = smul.addr %s297, 32
        %s299 = smul.addr %s298, 8
        %s300 = scalar_lea.vmem %s0, %s299
        %p301 = pneg %p44
        %p302 = pneg %p41
        %p303 = pneg %p65
        %p304 = pneg %p62
        %p305 = pneg %p86
        %p306 = pneg %p83
        %p307 = pneg %p107
        %p308 = pneg %p104
        %p309 = pneg %p128
        %p310 = pneg %p125
        %p311 = pneg %p149
        %p312 = pneg %p146
        %p313 = pneg %p170
        %p314 = pneg %p167
        %p315 = pneg %p191
        %p316 = pneg %p188
        %p317 = pneg %p212
        %p318 = pneg %p209
        %p319 = pneg %p238
        %p320 = pneg %p235
        %s321 = sand.u32 %s225, 1
        %s322 = scalar_lea.sflag [#allocation5], %s321
        %s323 = sand.u32 %s225, 1
        %s324 = smul.addr %s323, 256
        %s325 = scalar_lea.vmem [#allocation4], %s324
        %p326 = scmp.lt.s32.totalorder %s23, 1
        %s327 = scalar_select %p326, %s23, 1
        %s328 = smul.addr %s327, 32
        %s329 = smul.addr %s328, 8
        %s330 = scalar_lea.vmem %s0, %s329
        %vm332 = vcmask 523264
        %333 = vst.msk [vmem:[#allocation2] sm:$0xff] %vm332, 0.0
        %334 = vst.msk [vmem:[#allocation2 + $0x8] sm:$0xff] %vm332, 0.0
        %vm335 = vcmask 517120
        %336 = vst.msk [vmem:[#allocation2 + $0x10] sm:$0x3] %vm335, 0.0
        %337 = vst.msk [vmem:[#allocation2 + $0x18] sm:$0xff] %vm332, 0.0
        %338 = vst.msk [vmem:[#allocation2 + $0x20] sm:$0xff] %vm332, 0.0
        %339 = vst.msk [vmem:[#allocation2 + $0x28] sm:$0x3] %vm335, 0.0
        %340 = vst.msk [vmem:[#allocation2 + $0x30] sm:$0xff] %vm332, 0.0
        %341 = vst.msk [vmem:[#allocation2 + $0x38] sm:$0xff] %vm332, 0.0
        %342 = vst.msk [vmem:[#allocation2 + $0x40] sm:$0x3] %vm335, 0.0
        %343 = vst.msk [vmem:[#allocation2 + $0x48] sm:$0xff] %vm332, 0.0
        %344 = vst.msk [vmem:[#allocation2 + $0x50] sm:$0xff] %vm332, 0.0
        %345 = vst.msk [vmem:[#allocation2 + $0x58] sm:$0x3] %vm335, 0.0
        %346 = vst.msk [vmem:[#allocation2 + $0x60] sm:$0xff] %vm332, 0.0
        %347 = vst.msk [vmem:[#allocation2 + $0x68] sm:$0xff] %vm332, 0.0
        %348 = vst.msk [vmem:[#allocation2 + $0x70] sm:$0x3] %vm335, 0.0
        %349 = vst.msk [vmem:[#allocation2 + $0x78] sm:$0xff] %vm332, 0.0
        %350 = vst.msk [vmem:[#allocation2 + $0x80] sm:$0xff] %vm332, 0.0
        %351 = vst.msk [vmem:[#allocation2 + $0x88] sm:$0x3] %vm335, 0.0
        %352 = vst.msk [vmem:[#allocation2 + $0x90] sm:$0xff] %vm332, 0.0
        %353 = vst.msk [vmem:[#allocation2 + $0x98] sm:$0xff] %vm332, 0.0
        %354 = vst.msk [vmem:[#allocation2 + $0xa0] sm:$0x3] %vm335, 0.0
        %355 = vst.msk [vmem:[#allocation2 + $0xa8] sm:$0xff] %vm332, 0.0
        %356 = vst.msk [vmem:[#allocation2 + $0xb0] sm:$0xff] %vm332, 0.0
        %357 = vst.msk [vmem:[#allocation2 + $0xb8] sm:$0x3] %vm335, 0.0
        %358 = vst.msk [vmem:[#allocation2 + $0xc0] sm:$0xff] %vm332, 0.0
        %359 = vst.msk [vmem:[#allocation2 + $0xc8] sm:$0xff] %vm332, 0.0
        %360 = vst.msk [vmem:[#allocation2 + $0xd0] sm:$0x3] %vm335, 0.0
        %361 = vst.msk [vmem:[#allocation2 + $0xd8] sm:$0xff] %vm332, 0.0
        %362 = vst.msk [vmem:[#allocation2 + $0xe0] sm:$0xff] %vm332, 0.0
        %363 = vst.msk [vmem:[#allocation2 + $0xe8] sm:$0x3] %vm335, 0.0
        %364 = vst.msk [vmem:[#allocation2 + $0xf0] sm:$0xff] %vm332, 0.0
        %365 = vst.msk [vmem:[#allocation2 + $0xf8] sm:$0xff] %vm332, 0.0
        %366 = vst.msk [vmem:[#allocation2 + $0x100] sm:$0x3] %vm335, 0.0
        %367 = vst.msk [vmem:[#allocation2 + $0x108] sm:$0xff] %vm332, 0.0
        %368 = vst.msk [vmem:[#allocation2 + $0x110] sm:$0xff] %vm332, 0.0
        %369 = vst.msk [vmem:[#allocation2 + $0x118] sm:$0x3] %vm335, 0.0
        %370 = vst.msk [vmem:[#allocation2 + $0x120] sm:$0xff] %vm332, 0.0
        %371 = vst.msk [vmem:[#allocation2 + $0x128] sm:$0xff] %vm332, 0.0
        %372 = vst.msk [vmem:[#allocation2 + $0x130] sm:$0x3] %vm335, 0.0
        %373 = vst.msk [vmem:[#allocation2 + $0x138] sm:$0xff] %vm332, 0.0
        %374 = vst.msk [vmem:[#allocation2 + $0x140] sm:$0xff] %vm332, 0.0
        %375 = vst.msk [vmem:[#allocation2 + $0x148] sm:$0x3] %vm335, 0.0
        %376 = vst.msk [vmem:[#allocation2 + $0x150] sm:$0xff] %vm332, 0.0
        %377 = vst.msk [vmem:[#allocation2 + $0x158] sm:$0xff] %vm332, 0.0
        %378 = vst.msk [vmem:[#allocation2 + $0x160] sm:$0x3] %vm335, 0.0
        %379 = vst.msk [vmem:[#allocation2 + $0x168] sm:$0xff] %vm332, 0.0
        %380 = vst.msk [vmem:[#allocation2 + $0x170] sm:$0xff] %vm332, 0.0
        %381 = vst.msk [vmem:[#allocation2 + $0x178] sm:$0x3] %vm335, 0.0
        %382 = vst.msk [vmem:[#allocation2 + $0x180] sm:$0xff] %vm332, 0.0
        %383 = vst.msk [vmem:[#allocation2 + $0x188] sm:$0xff] %vm332, 0.0
        %384 = vst.msk [vmem:[#allocation2 + $0x190] sm:$0x3] %vm335, 0.0
        %385 = vst.msk [vmem:[#allocation2 + $0x198] sm:$0xff] %vm332, 0.0
        %386 = vst.msk [vmem:[#allocation2 + $0x1a0] sm:$0xff] %vm332, 0.0
        %387 = vst.msk [vmem:[#allocation2 + $0x1a8] sm:$0x3] %vm335, 0.0
        %v388 = vld [vmem:[%s330] sm:$0xff]
        %v389 = vld [vmem:[%s330 + $0x8] sm:$0xff]
        %v390 = vld [vmem:[%s330 + $0x10] sm:$0xff]
        %v391 = vld [vmem:[%s330 + $0x18] sm:$0xff]
        %v392 = vld [vmem:[%s330 + $0x20] sm:$0xff]
        %v393 = vld [vmem:[%s330 + $0x28] sm:$0xff]
        %v394 = vld [vmem:[%s330 + $0x30] sm:$0xff]
        %v395 = vld [vmem:[%s330 + $0x38] sm:$0xff]
        %v396 = vld [vmem:[%s330 + $0x40] sm:$0xff]
        %v397 = vld [vmem:[%s330 + $0x48] sm:$0xff]
        %v398 = vld [vmem:[%s330 + $0x50] sm:$0xff]
        %v399 = vld [vmem:[%s330 + $0x58] sm:$0xff]
        %v400 = vld [vmem:[%s330 + $0x60] sm:$0xff]
        %v401 = vld [vmem:[%s330 + $0x68] sm:$0xff]
        %v402 = vld [vmem:[%s330 + $0x70] sm:$0xff]
        %v403 = vld [vmem:[%s330 + $0x78] sm:$0xff]
        %v404 = vld [vmem:[%s330 + $0x80] sm:$0xff]
        %v405 = vld [vmem:[%s330 + $0x88] sm:$0xff]
        %v406 = vld [vmem:[%s330 + $0x90] sm:$0xff]
        %v407 = vld [vmem:[%s330 + $0x98] sm:$0xff]
        %v408 = vld [vmem:[%s330 + $0xa0] sm:$0xff]
        %v409 = vld [vmem:[%s330 + $0xa8] sm:$0xff]
        %v410 = vld [vmem:[%s330 + $0xb0] sm:$0xff]
        %v411 = vld [vmem:[%s330 + $0xb8] sm:$0xff]
        %v412 = vld [vmem:[%s330 + $0xc0] sm:$0xff]
        %v413 = vld [vmem:[%s330 + $0xc8] sm:$0xff]
        %v414 = vld [vmem:[%s330 + $0xd0] sm:$0xff]
        %v415 = vld [vmem:[%s330 + $0xd8] sm:$0xff]
        %v416 = vld [vmem:[%s330 + $0xe0] sm:$0xff]
        %v417 = vld [vmem:[%s330 + $0xe8] sm:$0xff]
        %v418 = vld [vmem:[%s330 + $0xf0] sm:$0xff]
        %v419 = vld [vmem:[%s330 + $0xf8] sm:$0xff]
        %s420 = scalar_lea.vmem [#allocation2], 24
        %421 = vst.msk [vmem:[%s420 + $0x1] sm:$0xff] %vm332, %v388
        %422 = vst.msk [vmem:[%s420 + $0x9] sm:$0xff] %vm332, %v389
        %423 = vst.msk [vmem:[%s420 + $0x19] sm:$0xff] %vm332, %v390
        %424 = vst.msk [vmem:[%s420 + $0x21] sm:$0xff] %vm332, %v391
        %425 = vst.msk [vmem:[%s420 + $0x31] sm:$0xff] %vm332, %v392
        %426 = vst.msk [vmem:[%s420 + $0x39] sm:$0xff] %vm332, %v393
        %427 = vst.msk [vmem:[%s420 + $0x49] sm:$0xff] %vm332, %v394
        %428 = vst.msk [vmem:[%s420 + $0x51] sm:$0xff] %vm332, %v395
        %429 = vst.msk [vmem:[%s420 + $0x61] sm:$0xff] %vm332, %v396
        %430 = vst.msk [vmem:[%s420 + $0x69] sm:$0xff] %vm332, %v397
        %431 = vst.msk [vmem:[%s420 + $0x79] sm:$0xff] %vm332, %v398
        %432 = vst.msk [vmem:[%s420 + $0x81] sm:$0xff] %vm332, %v399
        %433 = vst.msk [vmem:[%s420 + $0x91] sm:$0xff] %vm332, %v400
        %434 = vst.msk [vmem:[%s420 + $0x99] sm:$0xff] %vm332, %v401
        %435 = vst.msk [vmem:[%s420 + $0xa9] sm:$0xff] %vm332, %v402
        %436 = vst.msk [vmem:[%s420 + $0xb1] sm:$0xff] %vm332, %v403
        %437 = vst.msk [vmem:[%s420 + $0xc1] sm:$0xff] %vm332, %v404
        %438 = vst.msk [vmem:[%s420 + $0xc9] sm:$0xff] %vm332, %v405
        %439 = vst.msk [vmem:[%s420 + $0xd9] sm:$0xff] %vm332, %v406
        %440 = vst.msk [vmem:[%s420 + $0xe1] sm:$0xff] %vm332, %v407
        %441 = vst.msk [vmem:[%s420 + $0xf1] sm:$0xff] %vm332, %v408
        %442 = vst.msk [vmem:[%s420 + $0xf9] sm:$0xff] %vm332, %v409
        %443 = vst.msk [vmem:[%s420 + $0x109] sm:$0xff] %vm332, %v410
        %444 = vst.msk [vmem:[%s420 + $0x111] sm:$0xff] %vm332, %v411
        %445 = vst.msk [vmem:[%s420 + $0x121] sm:$0xff] %vm332, %v412
        %446 = vst.msk [vmem:[%s420 + $0x129] sm:$0xff] %vm332, %v413
        %447 = vst.msk [vmem:[%s420 + $0x139] sm:$0xff] %vm332, %v414
        %448 = vst.msk [vmem:[%s420 + $0x141] sm:$0xff] %vm332, %v415
        %449 = vst.msk [vmem:[%s420 + $0x151] sm:$0xff] %vm332, %v416
        %450 = vst.msk [vmem:[%s420 + $0x159] sm:$0xff] %vm332, %v417
        %451 = vst.msk [vmem:[%s420 + $0x169] sm:$0xff] %vm332, %v418
        %452 = vst.msk [vmem:[%s420 + $0x171] sm:$0xff] %vm332, %v419
        %v453 = vld [vmem:[#allocation2] sm:$0xff]
        %v454 = vld [vmem:[#allocation2 + $0x8] sm:$0xff]
        %v455 = vld [vmem:[#allocation2 + $0x18] sm:$0xff]
        %v456 = vld [vmem:[#allocation2 + $0x20] sm:$0xff]
        %v457 = vld [vmem:[#allocation2 + $0x30] sm:$0xff]
        %v458 = vld [vmem:[#allocation2 + $0x38] sm:$0xff]
        %v459 = vld [vmem:[#allocation2 + $0x48] sm:$0xff]
        %v460 = vld [vmem:[#allocation2 + $0x50] sm:$0xff]
        %v461 = vld [vmem:[#allocation2 + $0x60] sm:$0xff]
        %v462 = vld [vmem:[#allocation2 + $0x68] sm:$0xff]
        %v463 = vld [vmem:[#allocation2 + $0x78] sm:$0xff]
        %v464 = vld [vmem:[#allocation2 + $0x80] sm:$0xff]
        %v465 = vld [vmem:[#allocation2 + $0x90] sm:$0xff]
        %v466 = vld [vmem:[#allocation2 + $0x98] sm:$0xff]
        %v467 = vld [vmem:[#allocation2 + $0xa8] sm:$0xff]
        %v468 = vld [vmem:[#allocation2 + $0xb0] sm:$0xff]
        %v469 = vld [vmem:[#allocation2 + $0xc0] sm:$0xff]
        %v470 = vld [vmem:[#allocation2 + $0xc8] sm:$0xff]
        %v471 = vld [vmem:[#allocation2 + $0xd8] sm:$0xff]
        %v472 = vld [vmem:[#allocation2 + $0xe0] sm:$0xff]
        %v473 = vld [vmem:[#allocation2 + $0xf0] sm:$0xff]
        %v474 = vld [vmem:[#allocation2 + $0xf8] sm:$0xff]
        %v475 = vld [vmem:[#allocation2 + $0x108] sm:$0xff]
        %v476 = vld [vmem:[#allocation2 + $0x110] sm:$0xff]
        %v477 = vld [vmem:[#allocation2 + $0x120] sm:$0xff]
        %v478 = vld [vmem:[#allocation2 + $0x128] sm:$0xff]
        %v479 = vld [vmem:[#allocation2 + $0x138] sm:$0xff]
        %v480 = vld [vmem:[#allocation2 + $0x140] sm:$0xff]
        %v481 = vld [vmem:[#allocation2 + $0x150] sm:$0xff]
        %v482 = vld [vmem:[#allocation2 + $0x158] sm:$0xff]
        %v483 = vld [vmem:[#allocation2 + $0x168] sm:$0xff]
        %v484 = vld [vmem:[#allocation2 + $0x170] sm:$0xff]
        %v485 = vld [vmem:[#allocation2 + $0x180] sm:$0xff]
        %v486 = vld [vmem:[#allocation2 + $0x188] sm:$0xff]
        %v487 = vld [vmem:[#allocation2 + $0x198] sm:$0xff]
        %v488 = vld [vmem:[#allocation2 + $0x1a0] sm:$0xff]
        %v489 = vpack.c.bf16 %v454, %v453
        %v490 = vpack.c.bf16 %v456, %v455
        %v491 = vpack.c.bf16 %v458, %v457
        %v492 = vpack.c.bf16 %v460, %v459
        %v493 = vpack.c.bf16 %v462, %v461
        %v494 = vpack.c.bf16 %v464, %v463
        %v495 = vpack.c.bf16 %v466, %v465
        %v496 = vpack.c.bf16 %v468, %v467
        %v497 = vpack.c.bf16 %v470, %v469
        %v498 = vpack.c.bf16 %v472, %v471
        %v499 = vpack.c.bf16 %v474, %v473
        %v500 = vpack.c.bf16 %v476, %v475
        %v501 = vpack.c.bf16 %v478, %v477
        %v502 = vpack.c.bf16 %v480, %v479
        %v503 = vpack.c.bf16 %v482, %v481
        %v504 = vpack.c.bf16 %v484, %v483
        %v505 = vpack.c.bf16 %v486, %v485
        %v506 = vpack.c.bf16 %v488, %v487
        %507 = vst.msk [vmem:[#allocation3] sm:$0xff] %vm332, %v489
        %508 = vst.msk [vmem:[#allocation3 + $0x10] sm:$0xff] %vm332, %v490
        %509 = vst.msk [vmem:[#allocation3 + $0x20] sm:$0xff] %vm332, %v491
        %510 = vst.msk [vmem:[#allocation3 + $0x30] sm:$0xff] %vm332, %v492
        %511 = vst.msk [vmem:[#allocation3 + $0x40] sm:$0xff] %vm332, %v493
        %512 = vst.msk [vmem:[#allocation3 + $0x50] sm:$0xff] %vm332, %v494
        %513 = vst.msk [vmem:[#allocation3 + $0x60] sm:$0xff] %vm332, %v495
        %514 = vst.msk [vmem:[#allocation3 + $0x70] sm:$0xff] %vm332, %v496
        %515 = vst.msk [vmem:[#allocation3 + $0x80] sm:$0xff] %vm332, %v497
        %516 = vst.msk [vmem:[#allocation3 + $0x90] sm:$0xff] %vm332, %v498
        %517 = vst.msk [vmem:[#allocation3 + $0xa0] sm:$0xff] %vm332, %v499
        %518 = vst.msk [vmem:[#allocation3 + $0xb0] sm:$0xff] %vm332, %v500
        %519 = vst.msk [vmem:[#allocation3 + $0xc0] sm:$0xff] %vm332, %v501
        %520 = vst.msk [vmem:[#allocation3 + $0xd0] sm:$0xff] %vm332, %v502
        %521 = vst.msk [vmem:[#allocation3 + $0xe0] sm:$0xff] %vm332, %v503
        %522 = vst.msk [vmem:[#allocation3 + $0xf0] sm:$0xff] %vm332, %v504
        %523 = vst.msk [vmem:[#allocation3 + $0x100] sm:$0xff] %vm332, %v505
        %524 = vst.msk [vmem:[#allocation3 + $0x110] sm:$0xff] %vm332, %v506
        %v525 = vld [vmem:[#allocation2 + $0x1] sm:$0xff]
        %v526 = vld [vmem:[#allocation2 + $0x9] sm:$0xff]
        %v527 = vld [vmem:[#allocation2 + $0x19] sm:$0xff]
        %v528 = vld [vmem:[#allocation2 + $0x21] sm:$0xff]
        %v529 = vld [vmem:[#allocation2 + $0x31] sm:$0xff]
        %v530 = vld [vmem:[#allocation2 + $0x39] sm:$0xff]
        %v531 = vld [vmem:[#allocation2 + $0x49] sm:$0xff]
        %v532 = vld [vmem:[#allocation2 + $0x51] sm:$0xff]
        %v533 = vld [vmem:[#allocation2 + $0x61] sm:$0xff]
        %v534 = vld [vmem:[#allocation2 + $0x69] sm:$0xff]
        %v535 = vld [vmem:[#allocation2 + $0x79] sm:$0xff]
        %v536 = vld [vmem:[#allocation2 + $0x81] sm:$0xff]
        %v537 = vld [vmem:[#allocation2 + $0x91] sm:$0xff]
        %v538 = vld [vmem:[#allocation2 + $0x99] sm:$0xff]
        %v539 = vld [vmem:[#allocation2 + $0xa9] sm:$0xff]
        %v540 = vld [vmem:[#allocation2 + $0xb1] sm:$0xff]
        %v541 = vld [vmem:[#allocation2 + $0xc1] sm:$0xff]
        %v542 = vld [vmem:[#allocation2 + $0xc9] sm:$0xff]
        %v543 = vld [vmem:[#allocation2 + $0xd9] sm:$0xff]
        %v544 = vld [vmem:[#allocation2 + $0xe1] sm:$0xff]
        %v545 = vld [vmem:[#allocation2 + $0xf1] sm:$0xff]
        %v546 = vld [vmem:[#allocation2 + $0xf9] sm:$0xff]
        %v547 = vld [vmem:[#allocation2 + $0x109] sm:$0xff]
        %v548 = vld [vmem:[#allocation2 + $0x111] sm:$0xff]
        %v549 = vld [vmem:[#allocation2 + $0x121] sm:$0xff]
        %v550 = vld [vmem:[#allocation2 + $0x129] sm:$0xff]
        %v551 = vld [vmem:[#allocation2 + $0x139] sm:$0xff]
        %v552 = vld [vmem:[#allocation2 + $0x141] sm:$0xff]
        %v553 = vld [vmem:[#allocation2 + $0x151] sm:$0xff]
        %v554 = vld [vmem:[#allocation2 + $0x159] sm:$0xff]
        %v555 = vld [vmem:[#allocation2 + $0x169] sm:$0xff]
        %v556 = vld [vmem:[#allocation2 + $0x171] sm:$0xff]
        %v557 = vld [vmem:[#allocation2 + $0x181] sm:$0xff]
        %v558 = vld [vmem:[#allocation2 + $0x189] sm:$0xff]
        %v559 = vld [vmem:[#allocation2 + $0x199] sm:$0xff]
        %v560 = vld [vmem:[#allocation2 + $0x1a1] sm:$0xff]
        %v561 = vpack.c.bf16 %v526, %v525
        %v562 = vpack.c.bf16 %v528, %v527
        %v563 = vpack.c.bf16 %v530, %v529
        %v564 = vpack.c.bf16 %v532, %v531
        %v565 = vpack.c.bf16 %v534, %v533
        %v566 = vpack.c.bf16 %v536, %v535
        %v567 = vpack.c.bf16 %v538, %v537
        %v568 = vpack.c.bf16 %v540, %v539
        %v569 = vpack.c.bf16 %v542, %v541
        %v570 = vpack.c.bf16 %v544, %v543
        %v571 = vpack.c.bf16 %v546, %v545
        %v572 = vpack.c.bf16 %v548, %v547
        %v573 = vpack.c.bf16 %v550, %v549
        %v574 = vpack.c.bf16 %v552, %v551
        %v575 = vpack.c.bf16 %v554, %v553
        %v576 = vpack.c.bf16 %v556, %v555
        %v577 = vpack.c.bf16 %v558, %v557
        %v578 = vpack.c.bf16 %v560, %v559
        %597 = vrot.lane.b32.xlu0 %v561, 64
        %v598 = vpop.permute.xlu0 %597
        %599 = vrot.lane.b32.xlu0 %v562, 64
        %v600 = vpop.permute.xlu0 %599
        %601 = vrot.lane.b32.xlu0 %v563, 64
        %v602 = vpop.permute.xlu0 %601
        %603 = vrot.lane.b32.xlu0 %v564, 64
        %v604 = vpop.permute.xlu0 %603
        %605 = vrot.lane.b32.xlu0 %v565, 64
        %v606 = vpop.permute.xlu0 %605
        %607 = vrot.lane.b32.xlu0 %v566, 64
        %v608 = vpop.permute.xlu0 %607
        %609 = vrot.lane.b32.xlu0 %v567, 64
        %v610 = vpop.permute.xlu0 %609
        %611 = vrot.lane.b32.xlu0 %v568, 64
        %v612 = vpop.permute.xlu0 %611
        %613 = vrot.lane.b32.xlu0 %v569, 64
        %v614 = vpop.permute.xlu0 %613
        %615 = vrot.lane.b32.xlu0 %v570, 64
        %v616 = vpop.permute.xlu0 %615
        %617 = vrot.lane.b32.xlu0 %v571, 64
        %v618 = vpop.permute.xlu0 %617
        %619 = vrot.lane.b32.xlu0 %v572, 64
        %v620 = vpop.permute.xlu0 %619
        %621 = vrot.lane.b32.xlu0 %v573, 64
        %v622 = vpop.permute.xlu0 %621
        %623 = vrot.lane.b32.xlu0 %v574, 64
        %v624 = vpop.permute.xlu0 %623
        %625 = vrot.lane.b32.xlu0 %v575, 64
        %v626 = vpop.permute.xlu0 %625
        %627 = vrot.lane.b32.xlu0 %v576, 64
        %v628 = vpop.permute.xlu0 %627
        %629 = vrot.lane.b32.xlu0 %v577, 64
        %v630 = vpop.permute.xlu0 %629
        %631 = vrot.lane.b32.xlu0 %v578, 64
        %v632 = vpop.permute.xlu0 %631
        %vm651 = vcmask 1048064
        %652 = vst.msk [vmem:[#allocation3] sm:$0xff] %vm651, %v598
        %653 = vst.msk [vmem:[#allocation3 + $0x10] sm:$0xff] %vm651, %v600
        %654 = vst.msk [vmem:[#allocation3 + $0x20] sm:$0xff] %vm651, %v602
        %655 = vst.msk [vmem:[#allocation3 + $0x30] sm:$0xff] %vm651, %v604
        %656 = vst.msk [vmem:[#allocation3 + $0x40] sm:$0xff] %vm651, %v606
        %657 = vst.msk [vmem:[#allocation3 + $0x50] sm:$0xff] %vm651, %v608
        %658 = vst.msk [vmem:[#allocation3 + $0x60] sm:$0xff] %vm651, %v610
        %659 = vst.msk [vmem:[#allocation3 + $0x70] sm:$0xff] %vm651, %v612
        %660 = vst.msk [vmem:[#allocation3 + $0x80] sm:$0xff] %vm651, %v614
        %661 = vst.msk [vmem:[#allocation3 + $0x90] sm:$0xff] %vm651, %v616
        %662 = vst.msk [vmem:[#allocation3 + $0xa0] sm:$0xff] %vm651, %v618
        %663 = vst.msk [vmem:[#allocation3 + $0xb0] sm:$0xff] %vm651, %v620
        %664 = vst.msk [vmem:[#allocation3 + $0xc0] sm:$0xff] %vm651, %v622
        %665 = vst.msk [vmem:[#allocation3 + $0xd0] sm:$0xff] %vm651, %v624
        %666 = vst.msk [vmem:[#allocation3 + $0xe0] sm:$0xff] %vm651, %v626
        %667 = vst.msk [vmem:[#allocation3 + $0xf0] sm:$0xff] %vm651, %v628
        %668 = vst.msk [vmem:[#allocation3 + $0x100] sm:$0xff] %vm651, %v630
        %669 = vst.msk [vmem:[#allocation3 + $0x110] sm:$0xff] %vm651, %v632
        %v670 = vld [vmem:[#allocation2 + $0x2] sm:$0xff]
        %v671 = vld [vmem:[#allocation2 + $0xa] sm:$0xff]
        %v672 = vld [vmem:[#allocation2 + $0x1a] sm:$0xff]
        %v673 = vld [vmem:[#allocation2 + $0x22] sm:$0xff]
        %v674 = vld [vmem:[#allocation2 + $0x32] sm:$0xff]
        %v675 = vld [vmem:[#allocation2 + $0x3a] sm:$0xff]
        %v676 = vld [vmem:[#allocation2 + $0x4a] sm:$0xff]
        %v677 = vld [vmem:[#allocation2 + $0x52] sm:$0xff]
        %v678 = vld [vmem:[#allocation2 + $0x62] sm:$0xff]
        %v679 = vld [vmem:[#allocation2 + $0x6a] sm:$0xff]
        %v680 = vld [vmem:[#allocation2 + $0x7a] sm:$0xff]
        %v681 = vld [vmem:[#allocation2 + $0x82] sm:$0xff]
        %v682 = vld [vmem:[#allocation2 + $0x92] sm:$0xff]
        %v683 = vld [vmem:[#allocation2 + $0x9a] sm:$0xff]
        %v684 = vld [vmem:[#allocation2 + $0xaa] sm:$0xff]
        %v685 = vld [vmem:[#allocation2 + $0xb2] sm:$0xff]
        %v686 = vld [vmem:[#allocation2 + $0xc2] sm:$0xff]
        %v687 = vld [vmem:[#allocation2 + $0xca] sm:$0xff]
        %v688 = vld [vmem:[#allocation2 + $0xda] sm:$0xff]
        %v689 = vld [vmem:[#allocation2 + $0xe2] sm:$0xff]
        %v690 = vld [vmem:[#allocation2 + $0xf2] sm:$0xff]
        %v691 = vld [vmem:[#allocation2 + $0xfa] sm:$0xff]
        %v692 = vld [vmem:[#allocation2 + $0x10a] sm:$0xff]
        %v693 = vld [vmem:[#allocation2 + $0x112] sm:$0xff]
        %v694 = vld [vmem:[#allocation2 + $0x122] sm:$0xff]
        %v695 = vld [vmem:[#allocation2 + $0x12a] sm:$0xff]
        %v696 = vld [vmem:[#allocation2 + $0x13a] sm:$0xff]
        %v697 = vld [vmem:[#allocation2 + $0x142] sm:$0xff]
        %v698 = vld [vmem:[#allocation2 + $0x152] sm:$0xff]
        %v699 = vld [vmem:[#allocation2 + $0x15a] sm:$0xff]
        %v700 = vld [vmem:[#allocation2 + $0x16a] sm:$0xff]
        %v701 = vld [vmem:[#allocation2 + $0x172] sm:$0xff]
        %v702 = vld [vmem:[#allocation2 + $0x182] sm:$0xff]
        %v703 = vld [vmem:[#allocation2 + $0x18a] sm:$0xff]
        %v704 = vld [vmem:[#allocation2 + $0x19a] sm:$0xff]
        %v705 = vld [vmem:[#allocation2 + $0x1a2] sm:$0xff]
        %v706 = vpack.c.bf16 %v671, %v670
        %v707 = vpack.c.bf16 %v673, %v672
        %v708 = vpack.c.bf16 %v675, %v674
        %v709 = vpack.c.bf16 %v677, %v676
        %v710 = vpack.c.bf16 %v679, %v678
        %v711 = vpack.c.bf16 %v681, %v680
        %v712 = vpack.c.bf16 %v683, %v682
        %v713 = vpack.c.bf16 %v685, %v684
        %v714 = vpack.c.bf16 %v687, %v686
        %v715 = vpack.c.bf16 %v689, %v688
        %v716 = vpack.c.bf16 %v691, %v690
        %v717 = vpack.c.bf16 %v693, %v692
        %v718 = vpack.c.bf16 %v695, %v694
        %v719 = vpack.c.bf16 %v697, %v696
        %v720 = vpack.c.bf16 %v699, %v698
        %v721 = vpack.c.bf16 %v701, %v700
        %v722 = vpack.c.bf16 %v703, %v702
        %v723 = vpack.c.bf16 %v705, %v704
        %724 = vst.msk [vmem:[#allocation3 + $0x8] sm:$0xff] %vm332, %v706
        %725 = vst.msk [vmem:[#allocation3 + $0x18] sm:$0xff] %vm332, %v707
        %726 = vst.msk [vmem:[#allocation3 + $0x28] sm:$0xff] %vm332, %v708
        %727 = vst.msk [vmem:[#allocation3 + $0x38] sm:$0xff] %vm332, %v709
        %728 = vst.msk [vmem:[#allocation3 + $0x48] sm:$0xff] %vm332, %v710
        %729 = vst.msk [vmem:[#allocation3 + $0x58] sm:$0xff] %vm332, %v711
        %730 = vst.msk [vmem:[#allocation3 + $0x68] sm:$0xff] %vm332, %v712
        %731 = vst.msk [vmem:[#allocation3 + $0x78] sm:$0xff] %vm332, %v713
        %732 = vst.msk [vmem:[#allocation3 + $0x88] sm:$0xff] %vm332, %v714
        %733 = vst.msk [vmem:[#allocation3 + $0x98] sm:$0xff] %vm332, %v715
        %734 = vst.msk [vmem:[#allocation3 + $0xa8] sm:$0xff] %vm332, %v716
        %735 = vst.msk [vmem:[#allocation3 + $0xb8] sm:$0xff] %vm332, %v717
        %736 = vst.msk [vmem:[#allocation3 + $0xc8] sm:$0xff] %vm332, %v718
        %737 = vst.msk [vmem:[#allocation3 + $0xd8] sm:$0xff] %vm332, %v719
        %738 = vst.msk [vmem:[#allocation3 + $0xe8] sm:$0xff] %vm332, %v720
        %739 = vst.msk [vmem:[#allocation3 + $0xf8] sm:$0xff] %vm332, %v721
        %740 = vst.msk [vmem:[#allocation3 + $0x108] sm:$0xff] %vm332, %v722
        %741 = vst.msk [vmem:[#allocation3 + $0x118] sm:$0xff] %vm332, %v723
        %v742 = vld [vmem:[#allocation3] sm:$0xff]
        %v743 = vld [vmem:[#allocation3 + $0x8] sm:$0xff]
        %v744 = vld [vmem:[#allocation3 + $0x10] sm:$0xff]
        %v745 = vld [vmem:[#allocation3 + $0x18] sm:$0xff]
        %v746 = vld [vmem:[#allocation3 + $0x20] sm:$0xff]
        %v747 = vld [vmem:[#allocation3 + $0x28] sm:$0xff]
        %v748 = vld [vmem:[#allocation3 + $0x30] sm:$0xff]
        %v749 = vld [vmem:[#allocation3 + $0x38] sm:$0xff]
        %v750 = vld [vmem:[#allocation3 + $0x40] sm:$0xff]
        %v751 = vld [vmem:[#allocation3 + $0x48] sm:$0xff]
        %v752 = vld [vmem:[#allocation3 + $0x50] sm:$0xff]
        %v753 = vld [vmem:[#allocation3 + $0x58] sm:$0xff]
        %v754 = vld [vmem:[#allocation3 + $0x60] sm:$0xff]
        %v755 = vld [vmem:[#allocation3 + $0x68] sm:$0xff]
        %v756 = vld [vmem:[#allocation3 + $0x70] sm:$0xff]
        %v757 = vld [vmem:[#allocation3 + $0x78] sm:$0xff]
        %v758 = vld [vmem:[#allocation3 + $0x80] sm:$0xff]
        %v759 = vld [vmem:[#allocation3 + $0x88] sm:$0xff]
        %v760 = vld [vmem:[#allocation3 + $0x90] sm:$0xff]
        %v761 = vld [vmem:[#allocation3 + $0x98] sm:$0xff]
        %v762 = vld [vmem:[#allocation3 + $0xa0] sm:$0xff]
        %v763 = vld [vmem:[#allocation3 + $0xa8] sm:$0xff]
        %v764 = vld [vmem:[#allocation3 + $0xb0] sm:$0xff]
        %v765 = vld [vmem:[#allocation3 + $0xb8] sm:$0xff]
        %v766 = vld [vmem:[#allocation3 + $0xc0] sm:$0xff]
        %v767 = vld [vmem:[#allocation3 + $0xc8] sm:$0xff]
        %v768 = vld [vmem:[#allocation3 + $0xd0] sm:$0xff]
        %v769 = vld [vmem:[#allocation3 + $0xd8] sm:$0xff]
        %v770 = vld [vmem:[#allocation3 + $0xe0] sm:$0xff]
        %v771 = vld [vmem:[#allocation3 + $0xe8] sm:$0xff]
        %v772 = vld [vmem:[#allocation3 + $0xf0] sm:$0xff]
        %v773 = vld [vmem:[#allocation3 + $0xf8] sm:$0xff]
        %v774 = vld [vmem:[%s1] sm:$0xf]
        %v775 = vld [vmem:[%s1 + $0x4] sm:$0xf]
        %v776 = vld [vmem:[%s1 + $0x8] sm:$0xf]
        %v777 = vld [vmem:[%s1 + $0xc] sm:$0xf]
        %v778 = vld [vmem:[%s1 + $0x10] sm:$0xf]
        %v779 = vld [vmem:[%s1 + $0x14] sm:$0xf]
        %v780 = vld [vmem:[%s1 + $0x18] sm:$0xf]
        %v781 = vld [vmem:[%s1 + $0x1c] sm:$0xf]
        %v782 = vld [vmem:[%s1 + $0x20] sm:$0xf]
        %v783 = vld [vmem:[%s1 + $0x24] sm:$0xf]
        %v784 = vld [vmem:[%s1 + $0x28] sm:$0xf]
        %v785 = vld [vmem:[%s1 + $0x2c] sm:$0xf]
        %v786 = vld [vmem:[%s1 + $0x30] sm:$0xf]
        %v787 = vld [vmem:[%s1 + $0x34] sm:$0xf]
        %v788 = vld [vmem:[%s1 + $0x38] sm:$0xf]
        %v789 = vld [vmem:[%s1 + $0x3c] sm:$0xf]
        %v790 = vld [vmem:[%s1 + $0x40] sm:$0xf]
        %v791 = vld [vmem:[%s1 + $0x44] sm:$0xf]
        %v792 = vld [vmem:[%s1 + $0x48] sm:$0xf]
        %v793 = vld [vmem:[%s1 + $0x4c] sm:$0xf]
        %v794 = vld [vmem:[%s1 + $0x50] sm:$0xf]
        %v795 = vld [vmem:[%s1 + $0x54] sm:$0xf]
        %v796 = vld [vmem:[%s1 + $0x58] sm:$0xf]
        %v797 = vld [vmem:[%s1 + $0x5c] sm:$0xf]
        %v798 = vld [vmem:[#allocation3 + $0x100] sm:$0xff]
        %v799 = vld [vmem:[#allocation3 + $0x108] sm:$0xff]
        %s800 = scalar_lea.vmem %s1, 96
        %v801 = vld [vmem:[%s800] sm:$0xf]
        %v802 = vld [vmem:[%s800 + $0x4] sm:$0xf]
        %v803 = vld [vmem:[%s800 + $0x8] sm:$0xf]
        %v804 = vld [vmem:[%s800 + $0xc] sm:$0xf]
        %v805 = vld [vmem:[%s800 + $0x10] sm:$0xf]
        %v806 = vld [vmem:[%s800 + $0x14] sm:$0xf]
        %v807 = vld [vmem:[%s800 + $0x18] sm:$0xf]
        %v808 = vld [vmem:[%s800 + $0x1c] sm:$0xf]
        %v809 = vld [vmem:[%s800 + $0x20] sm:$0xf]
        %v810 = vld [vmem:[%s800 + $0x24] sm:$0xf]
        %v811 = vld [vmem:[%s800 + $0x28] sm:$0xf]
        %v812 = vld [vmem:[%s800 + $0x2c] sm:$0xf]
        %v813 = vld [vmem:[%s800 + $0x30] sm:$0xf]
        %v814 = vld [vmem:[%s800 + $0x34] sm:$0xf]
        %v815 = vld [vmem:[%s800 + $0x38] sm:$0xf]
        %v816 = vld [vmem:[%s800 + $0x3c] sm:$0xf]
        %v817 = vld [vmem:[%s800 + $0x40] sm:$0xf]
        %v818 = vld [vmem:[%s800 + $0x44] sm:$0xf]
        %v819 = vld [vmem:[%s800 + $0x48] sm:$0xf]
        %v820 = vld [vmem:[%s800 + $0x4c] sm:$0xf]
        %v821 = vld [vmem:[%s800 + $0x50] sm:$0xf]
        %v822 = vld [vmem:[%s800 + $0x54] sm:$0xf]
        %v823 = vld [vmem:[%s800 + $0x58] sm:$0xf]
        %v824 = vld [vmem:[%s800 + $0x5c] sm:$0xf]
        %v849 = vunpack.c.l.b16 %v801
        %v850 = vunpack.c.l.b16 %v802
        %v851 = vunpack.c.l.b16 %v803
        %v852 = vunpack.c.l.b16 %v804
        %v853 = vunpack.c.l.b16 %v805
        %v854 = vunpack.c.l.b16 %v806
        %v855 = vunpack.c.l.b16 %v807
        %v856 = vunpack.c.l.b16 %v808
        %v857 = vunpack.c.l.b16 %v809
        %v858 = vunpack.c.l.b16 %v810
        %v859 = vunpack.c.l.b16 %v811
        %v860 = vunpack.c.l.b16 %v812
        %v861 = vunpack.c.l.b16 %v813
        %v862 = vunpack.c.l.b16 %v814
        %v863 = vunpack.c.l.b16 %v815
        %v864 = vunpack.c.l.b16 %v816
        %v865 = vunpack.c.l.b16 %v817
        %v866 = vunpack.c.l.b16 %v818
        %v867 = vunpack.c.l.b16 %v819
        %v868 = vunpack.c.l.b16 %v820
        %v869 = vunpack.c.l.b16 %v821
        %v870 = vunpack.c.l.b16 %v822
        %v871 = vunpack.c.l.b16 %v823
        %v872 = vunpack.c.l.b16 %v824
        %v873 = vpack.c.b16 %v850, %v849
        %v874 = vpack.c.b16 %v852, %v851
        %v875 = vpack.c.b16 %v854, %v853
        %v876 = vpack.c.b16 %v856, %v855
        %v877 = vpack.c.b16 %v858, %v857
        %v878 = vpack.c.b16 %v860, %v859
        %v879 = vpack.c.b16 %v862, %v861
        %v880 = vpack.c.b16 %v864, %v863
        %v881 = vpack.c.b16 %v866, %v865
        %v882 = vpack.c.b16 %v868, %v867
        %v883 = vpack.c.b16 %v870, %v869
        %v884 = vpack.c.b16 %v872, %v871
        %v898 = vsel %vm332, %v745, 0
        %v901 = vsel %vm332, %v747, 0
        %v904 = vsel %vm332, %v749, 0
        %v907 = vsel %vm332, %v751, 0
        %v910 = vsel %vm332, %v753, 0
        %v913 = vsel %vm332, %v755, 0
        %v916 = vsel %vm332, %v757, 0
        %v919 = vsel %vm332, %v759, 0
        %v922 = vsel %vm332, %v761, 0
        %v925 = vsel %vm332, %v763, 0
        %v928 = vsel %vm332, %v765, 0
        %v931 = vsel %vm332, %v767, 0
        %v934 = vsel %vm332, %v769, 0
        %v937 = vsel %vm332, %v771, 0
        %v940 = vsel %vm332, %v773, 0
        %v943 = vsel %vm332, %v799, 0
        %945 = vmatprep.subr.bf16.mxu0 0
        %946 = vmatpush1.bf16.msra.mxu0 %v873
        %947 = vmatprep.subr.bf16.mxu0 0
        %948 = vmatpush1.bf16.msra.mxu0 %v874
        %949 = vmatprep.subr.bf16.mxu0 0
        %950 = vmatpush1.bf16.msra.mxu0 %v875
        %951 = vmatprep.subr.bf16.mxu0 0
        %952 = vmatpush1.bf16.msra.mxu0 %v876
        %953 = vmatprep.subr.bf16.mxu0 0
        %954 = vmatpush1.bf16.msra.mxu0 %v877
        %955 = vmatprep.subr.bf16.mxu0 0
        %956 = vmatpush1.bf16.msra.mxu0 %v878
        %957 = vmatprep.subr.bf16.mxu0 0
        %958 = vmatpush1.bf16.msra.mxu0 %v879
        %959 = vmatprep.subr.bf16.mxu0 0
        %960 = vmatpush1.bf16.msra.mxu0 %v880
        %961 = vmatprep.subr.bf16.mxu0 0
        %962 = vmatpush1.bf16.msra.mxu0 %v881
        %963 = vmatprep.subr.bf16.mxu0 0
        %964 = vmatpush1.bf16.msra.mxu0 %v882
        %965 = vmatprep.subr.bf16.mxu0 0
        %966 = vmatpush1.bf16.msra.mxu0 %v883
        %967 = vmatprep.subr.bf16.mxu0 0
        %968 = vmatpush1.bf16.msra.mxu0 %v884
        %969 = vmatprep.subr.bf16.mxu0 0
        %970 = vmatpush1.bf16.msra.mxu0 0
        %971 = vmatprep.subr.bf16.mxu0 0
        %972 = vmatpush1.bf16.msra.mxu0 0
        %973 = vmatprep.subr.bf16.mxu0 0
        %974 = vmatpush1.bf16.msra.mxu0 0
        %975 = vmatprep.subr.bf16.mxu0 0
        %976 = vmatpush1.bf16.msra.mxu0 0
        %977 = vmatprep.mubr.bf16.mxu0 %v898
        %978 = vmatmul.mubr.bf16.gmra.mrb[0].mxu0 %v744
        %v979 = vpop.f32.mrb[0].mxu0
        %v980 = vadd.f32 0.0, %v979
        %v981 = vpop.f32.mrb[0].mxu0
        %v982 = vpop.f32.mrb[0].mxu0
        %v983 = vadd.f32 0.0, %v982
        %v984 = vpop.f32.mrb[0].mxu0
        %985 = vmatprep.mubr.bf16.mxu0 %v901
        %986 = vmatmul.mubr.bf16.gmra.mrb[0].mxu0 %v746
        %v987 = vpop.f32.mrb[0].mxu0
        %v988 = vadd.f32 0.0, %v987
        %v989 = vpop.f32.mrb[0].mxu0
        %v990 = vpop.f32.mrb[0].mxu0
        %v991 = vadd.f32 0.0, %v990
        %v992 = vpop.f32.mrb[0].mxu0
        %993 = vmatprep.mubr.bf16.mxu0 %v904
        %994 = vmatmul.mubr.bf16.gmra.mrb[0].mxu0 %v748
        %v995 = vpop.f32.mrb[0].mxu0
        %v996 = vadd.f32 0.0, %v995
        %v997 = vpop.f32.mrb[0].mxu0
        %v998 = vpop.f32.mrb[0].mxu0
        %v999 = vadd.f32 0.0, %v998
        %v1000 = vpop.f32.mrb[0].mxu0
        %1001 = vmatprep.mubr.bf16.mxu0 %v907
        %1002 = vmatmul.mubr.bf16.gmra.mrb[0].mxu0 %v750
        %v1003 = vpop.f32.mrb[0].mxu0
        %v1004 = vadd.f32 0.0, %v1003
        %v1005 = vpop.f32.mrb[0].mxu0
        %v1006 = vpop.f32.mrb[0].mxu0
        %v1007 = vadd.f32 0.0, %v1006
        %v1008 = vpop.f32.mrb[0].mxu0
        %1009 = vmatprep.mubr.bf16.mxu0 %v910
        %1010 = vmatmul.mubr.bf16.gmra.mrb[0].mxu0 %v752
        %v1011 = vpop.f32.mrb[0].mxu0
        %v1012 = vadd.f32 0.0, %v1011
        %v1013 = vpop.f32.mrb[0].mxu0
        %v1014 = vpop.f32.mrb[0].mxu0
        %v1015 = vadd.f32 0.0, %v1014
        %v1016 = vpop.f32.mrb[0].mxu0
        %1017 = vmatprep.mubr.bf16.mxu0 %v913
        %1018 = vmatmul.mubr.bf16.gmra.mrb[0].mxu0 %v754
        %v1019 = vpop.f32.mrb[0].mxu0
        %v1020 = vadd.f32 0.0, %v1019
        %v1021 = vpop.f32.mrb[0].mxu0
        %v1022 = vpop.f32.mrb[0].mxu0
        %v1023 = vadd.f32 0.0, %v1022
        %v1024 = vpop.f32.mrb[0].mxu0
        %1025 = vmatprep.mubr.bf16.mxu0 %v916
        %1026 = vmatmul.mubr.bf16.gmra.mrb[0].mxu0 %v756
        %v1027 = vpop.f32.mrb[0].mxu0
        %v1028 = vadd.f32 0.0, %v1027
        %v1029 = vpop.f32.mrb[0].mxu0
        %v1030 = vpop.f32.mrb[0].mxu0
        %v1031 = vadd.f32 0.0, %v1030
        %v1032 = vpop.f32.mrb[0].mxu0
        %1033 = vmatprep.mubr.bf16.mxu0 %v919
        %1034 = vmatmul.mubr.bf16.gmra.mrb[0].mxu0 %v758
        %v1035 = vpop.f32.mrb[0].mxu0
        %v1036 = vadd.f32 0.0, %v1035
        %v1037 = vpop.f32.mrb[0].mxu0
        %v1038 = vpop.f32.mrb[0].mxu0
        %v1039 = vadd.f32 0.0, %v1038
        %v1040 = vpop.f32.mrb[0].mxu0
        %1041 = vmatprep.mubr.bf16.mxu0 %v922
        %1042 = vmatmul.mubr.bf16.gmra.mrb[0].mxu0 %v760
        %v1043 = vpop.f32.mrb[0].mxu0
        %v1044 = vadd.f32 0.0, %v1043
        %v1045 = vpop.f32.mrb[0].mxu0
        %v1046 = vpop.f32.mrb[0].mxu0
        %v1047 = vadd.f32 0.0, %v1046
        %v1048 = vpop.f32.mrb[0].mxu0
        %1049 = vmatprep.mubr.bf16.mxu0 %v925
        %1050 = vmatmul.mubr.bf16.gmra.mrb[0].mxu0 %v762
        %v1051 = vpop.f32.mrb[0].mxu0
        %v1052 = vadd.f32 0.0, %v1051
        %v1053 = vpop.f32.mrb[0].mxu0
        %v1054 = vpop.f32.mrb[0].mxu0
        %v1055 = vadd.f32 0.0, %v1054
        %v1056 = vpop.f32.mrb[0].mxu0
        %1057 = vmatprep.mubr.bf16.mxu0 %v928
        %1058 = vmatmul.mubr.bf16.gmra.mrb[0].mxu0 %v764
        %v1059 = vpop.f32.mrb[0].mxu0
        %v1060 = vadd.f32 0.0, %v1059
        %v1061 = vpop.f32.mrb[0].mxu0
        %v1062 = vpop.f32.mrb[0].mxu0
        %v1063 = vadd.f32 0.0, %v1062
        %v1064 = vpop.f32.mrb[0].mxu0
        %1065 = vmatprep.mubr.bf16.mxu0 %v931
        %1066 = vmatmul.mubr.bf16.gmra.mrb[0].mxu0 %v766
        %v1067 = vpop.f32.mrb[0].mxu0
        %v1068 = vadd.f32 0.0, %v1067
        %v1069 = vpop.f32.mrb[0].mxu0
        %v1070 = vpop.f32.mrb[0].mxu0
        %v1071 = vadd.f32 0.0, %v1070
        %v1072 = vpop.f32.mrb[0].mxu0
        %1073 = vmatprep.mubr.bf16.mxu0 %v934
        %1074 = vmatmul.mubr.bf16.gmra.mrb[0].mxu0 %v768
        %v1075 = vpop.f32.mrb[0].mxu0
        %v1076 = vadd.f32 0.0, %v1075
        %v1077 = vpop.f32.mrb[0].mxu0
        %v1078 = vpop.f32.mrb[0].mxu0
        %v1079 = vadd.f32 0.0, %v1078
        %v1080 = vpop.f32.mrb[0].mxu0
        %1081 = vmatprep.mubr.bf16.mxu0 %v937
        %1082 = vmatmul.mubr.bf16.gmra.mrb[0].mxu0 %v770
        %v1083 = vpop.f32.mrb[0].mxu0
        %v1084 = vadd.f32 0.0, %v1083
        %v1085 = vpop.f32.mrb[0].mxu0
        %v1086 = vpop.f32.mrb[0].mxu0
        %v1087 = vadd.f32 0.0, %v1086
        %v1088 = vpop.f32.mrb[0].mxu0
        %1089 = vmatprep.mubr.bf16.mxu0 %v940
        %1090 = vmatmul.mubr.bf16.gmra.mrb[0].mxu0 %v772
        %v1091 = vpop.f32.mrb[0].mxu0
        %v1092 = vadd.f32 0.0, %v1091
        %v1093 = vpop.f32.mrb[0].mxu0
        %v1094 = vpop.f32.mrb[0].mxu0
        %v1095 = vadd.f32 0.0, %v1094
        %v1096 = vpop.f32.mrb[0].mxu0
        %1097 = vmatprep.mubr.bf16.mxu0 %v943
        %1098 = vmatmul.mubr.bf16.gmra.mrb[0].mxu0 %v798
        %v1099 = vpop.f32.mrb[0].mxu0
        %v1100 = vadd.f32 0.0, %v1099
        %v1101 = vpop.f32.mrb[0].mxu0
        %v1102 = vpop.f32.mrb[0].mxu0
        %v1103 = vadd.f32 0.0, %v1102
        %v1104 = vpop.f32.mrb[0].mxu0
        %1105 = vdwg.mxu0
        %v1130 = vunpack.c.l.b16 %v774
        %v1131 = vunpack.c.l.b16 %v775
        %v1132 = vunpack.c.l.b16 %v776
        %v1133 = vunpack.c.l.b16 %v777
        %v1134 = vunpack.c.l.b16 %v778
        %v1135 = vunpack.c.l.b16 %v779
        %v1136 = vunpack.c.l.b16 %v780
        %v1137 = vunpack.c.l.b16 %v781
        %v1138 = vunpack.c.l.b16 %v782
        %v1139 = vunpack.c.l.b16 %v783
        %v1140 = vunpack.c.l.b16 %v784
        %v1141 = vunpack.c.l.b16 %v785
        %v1142 = vunpack.c.l.b16 %v786
        %v1143 = vunpack.c.l.b16 %v787
        %v1144 = vunpack.c.l.b16 %v788
        %v1145 = vunpack.c.l.b16 %v789
        %v1146 = vunpack.c.l.b16 %v790
        %v1147 = vunpack.c.l.b16 %v791
        %v1148 = vunpack.c.l.b16 %v792
        %v1149 = vunpack.c.l.b16 %v793
        %v1150 = vunpack.c.l.b16 %v794
        %v1151 = vunpack.c.l.b16 %v795
        %v1152 = vunpack.c.l.b16 %v796
        %v1153 = vunpack.c.l.b16 %v797
        %v1154 = vpack.c.b16 %v1131, %v1130
        %v1155 = vpack.c.b16 %v1133, %v1132
        %v1156 = vpack.c.b16 %v1135, %v1134
        %v1157 = vpack.c.b16 %v1137, %v1136
        %v1158 = vpack.c.b16 %v1139, %v1138
        %v1159 = vpack.c.b16 %v1141, %v1140
        %v1160 = vpack.c.b16 %v1143, %v1142
        %v1161 = vpack.c.b16 %v1145, %v1144
        %v1162 = vpack.c.b16 %v1147, %v1146
        %v1163 = vpack.c.b16 %v1149, %v1148
        %v1164 = vpack.c.b16 %v1151, %v1150
        %v1165 = vpack.c.b16 %v1153, %v1152
        %v1179 = vsel %vm332, %v743, 0
        %1181 = vmatprep.subr.bf16.mxu0 0
        %1182 = vmatpush1.bf16.msra.mxu0 %v1154
        %1183 = vmatprep.subr.bf16.mxu0 0
        %1184 = vmatpush1.bf16.msra.mxu0 %v1155
        %1185 = vmatprep.subr.bf16.mxu0 0
        %1186 = vmatpush1.bf16.msra.mxu0 %v1156
        %1187 = vmatprep.subr.bf16.mxu0 0
        %1188 = vmatpush1.bf16.msra.mxu0 %v1157
        %1189 = vmatprep.subr.bf16.mxu0 0
        %1190 = vmatpush1.bf16.msra.mxu0 %v1158
        %1191 = vmatprep.subr.bf16.mxu0 0
        %1192 = vmatpush1.bf16.msra.mxu0 %v1159
        %1193 = vmatprep.subr.bf16.mxu0 0
        %1194 = vmatpush1.bf16.msra.mxu0 %v1160
        %1195 = vmatprep.subr.bf16.mxu0 0
        %1196 = vmatpush1.bf16.msra.mxu0 %v1161
        %1197 = vmatprep.subr.bf16.mxu0 0
        %1198 = vmatpush1.bf16.msra.mxu0 %v1162
        %1199 = vmatprep.subr.bf16.mxu0 0
        %1200 = vmatpush1.bf16.msra.mxu0 %v1163
        %1201 = vmatprep.subr.bf16.mxu0 0
        %1202 = vmatpush1.bf16.msra.mxu0 %v1164
        %1203 = vmatprep.subr.bf16.mxu0 0
        %1204 = vmatpush1.bf16.msra.mxu0 %v1165
        %1205 = vmatprep.subr.bf16.mxu0 0
        %1206 = vmatpush1.bf16.msra.mxu0 0
        %1207 = vmatprep.subr.bf16.mxu0 0
        %1208 = vmatpush1.bf16.msra.mxu0 0
        %1209 = vmatprep.subr.bf16.mxu0 0
        %1210 = vmatpush1.bf16.msra.mxu0 0
        %1211 = vmatprep.subr.bf16.mxu0 0
        %1212 = vmatpush1.bf16.msra.mxu0 0
        %1213 = vmatprep.mubr.bf16.mxu0 %v1179
        %1214 = vmatmul.mubr.bf16.gmra.mrb[0].mxu0 %v742
        %v1215 = vpop.f32.mrb[0].mxu0
        %v1216 = vadd.f32 %v980, %v1215
        %v1217 = vpop.f32.mrb[0].mxu0
        %v1218 = vpop.f32.mrb[0].mxu0
        %v1219 = vadd.f32 %v983, %v1218
        %v1220 = vpop.f32.mrb[0].mxu0
        %1221 = vmatprep.mubr.bf16.mxu0 %v898
        %1222 = vmatmul.mubr.bf16.gmra.mrb[0].mxu0 %v744
        %v1223 = vpop.f32.mrb[0].mxu0
        %v1224 = vadd.f32 %v988, %v1223
        %v1225 = vpop.f32.mrb[0].mxu0
        %v1226 = vpop.f32.mrb[0].mxu0
        %v1227 = vadd.f32 %v991, %v1226
        %v1228 = vpop.f32.mrb[0].mxu0
        %1229 = vmatprep.mubr.bf16.mxu0 %v901
        %1230 = vmatmul.mubr.bf16.gmra.mrb[0].mxu0 %v746
        %v1231 = vpop.f32.mrb[0].mxu0
        %v1232 = vadd.f32 %v996, %v1231
        %v1233 = vpop.f32.mrb[0].mxu0
        %v1234 = vpop.f32.mrb[0].mxu0
        %v1235 = vadd.f32 %v999, %v1234
        %v1236 = vpop.f32.mrb[0].mxu0
        %1237 = vmatprep.mubr.bf16.mxu0 %v904
        %1238 = vmatmul.mubr.bf16.gmra.mrb[0].mxu0 %v748
        %v1239 = vpop.f32.mrb[0].mxu0
        %v1240 = vadd.f32 %v1004, %v1239
        %v1241 = vpop.f32.mrb[0].mxu0
        %v1242 = vpop.f32.mrb[0].mxu0
        %v1243 = vadd.f32 %v1007, %v1242
        %v1244 = vpop.f32.mrb[0].mxu0
        %1245 = vmatprep.mubr.bf16.mxu0 %v907
        %1246 = vmatmul.mubr.bf16.gmra.mrb[0].mxu0 %v750
        %v1247 = vpop.f32.mrb[0].mxu0
        %v1248 = vadd.f32 %v1012, %v1247
        %v1249 = vpop.f32.mrb[0].mxu0
        %v1250 = vpop.f32.mrb[0].mxu0
        %v1251 = vadd.f32 %v1015, %v1250
        %v1252 = vpop.f32.mrb[0].mxu0
        %1253 = vmatprep.mubr.bf16.mxu0 %v910
        %1254 = vmatmul.mubr.bf16.gmra.mrb[0].mxu0 %v752
        %v1255 = vpop.f32.mrb[0].mxu0
        %v1256 = vadd.f32 %v1020, %v1255
        %v1257 = vpop.f32.mrb[0].mxu0
        %v1258 = vpop.f32.mrb[0].mxu0
        %v1259 = vadd.f32 %v1023, %v1258
        %v1260 = vpop.f32.mrb[0].mxu0
        %1261 = vmatprep.mubr.bf16.mxu0 %v913
        %1262 = vmatmul.mubr.bf16.gmra.mrb[0].mxu0 %v754
        %v1263 = vpop.f32.mrb[0].mxu0
        %v1264 = vadd.f32 %v1028, %v1263
        %v1265 = vpop.f32.mrb[0].mxu0
        %v1266 = vpop.f32.mrb[0].mxu0
        %v1267 = vadd.f32 %v1031, %v1266
        %v1268 = vpop.f32.mrb[0].mxu0
        %1269 = vmatprep.mubr.bf16.mxu0 %v916
        %1270 = vmatmul.mubr.bf16.gmra.mrb[0].mxu0 %v756
        %v1271 = vpop.f32.mrb[0].mxu0
        %v1272 = vadd.f32 %v1036, %v1271
        %v1273 = vpop.f32.mrb[0].mxu0
        %v1274 = vpop.f32.mrb[0].mxu0
        %v1275 = vadd.f32 %v1039, %v1274
        %v1276 = vpop.f32.mrb[0].mxu0
        %1277 = vmatprep.mubr.bf16.mxu0 %v919
        %1278 = vmatmul.mubr.bf16.gmra.mrb[0].mxu0 %v758
        %v1279 = vpop.f32.mrb[0].mxu0
        %v1280 = vadd.f32 %v1044, %v1279
        %v1281 = vpop.f32.mrb[0].mxu0
        %v1282 = vpop.f32.mrb[0].mxu0
        %v1283 = vadd.f32 %v1047, %v1282
        %v1284 = vpop.f32.mrb[0].mxu0
        %1285 = vmatprep.mubr.bf16.mxu0 %v922
        %1286 = vmatmul.mubr.bf16.gmra.mrb[0].mxu0 %v760
        %v1287 = vpop.f32.mrb[0].mxu0
        %v1288 = vadd.f32 %v1052, %v1287
        %v1289 = vpop.f32.mrb[0].mxu0
        %v1290 = vpop.f32.mrb[0].mxu0
        %v1291 = vadd.f32 %v1055, %v1290
        %v1292 = vpop.f32.mrb[0].mxu0
        %1293 = vmatprep.mubr.bf16.mxu0 %v925
        %1294 = vmatmul.mubr.bf16.gmra.mrb[0].mxu0 %v762
        %v1295 = vpop.f32.mrb[0].mxu0
        %v1296 = vadd.f32 %v1060, %v1295
        %v1297 = vpop.f32.mrb[0].mxu0
        %v1298 = vpop.f32.mrb[0].mxu0
        %v1299 = vadd.f32 %v1063, %v1298
        %v1300 = vpop.f32.mrb[0].mxu0
        %1301 = vmatprep.mubr.bf16.mxu0 %v928
        %1302 = vmatmul.mubr.bf16.gmra.mrb[0].mxu0 %v764
        %v1303 = vpop.f32.mrb[0].mxu0
        %v1304 = vadd.f32 %v1068, %v1303
        %v1305 = vpop.f32.mrb[0].mxu0
        %v1306 = vpop.f32.mrb[0].mxu0
        %v1307 = vadd.f32 %v1071, %v1306
        %v1308 = vpop.f32.mrb[0].mxu0
        %1309 = vmatprep.mubr.bf16.mxu0 %v931
        %1310 = vmatmul.mubr.bf16.gmra.mrb[0].mxu0 %v766
        %v1311 = vpop.f32.mrb[0].mxu0
        %v1312 = vadd.f32 %v1076, %v1311
        %v1313 = vpop.f32.mrb[0].mxu0
        %v1314 = vpop.f32.mrb[0].mxu0
        %v1315 = vadd.f32 %v1079, %v1314
        %v1316 = vpop.f32.mrb[0].mxu0
        %1317 = vmatprep.mubr.bf16.mxu0 %v934
        %1318 = vmatmul.mubr.bf16.gmra.mrb[0].mxu0 %v768
        %v1319 = vpop.f32.mrb[0].mxu0
        %v1320 = vadd.f32 %v1084, %v1319
        %v1321 = vpop.f32.mrb[0].mxu0
        %v1322 = vpop.f32.mrb[0].mxu0
        %v1323 = vadd.f32 %v1087, %v1322
        %v1324 = vpop.f32.mrb[0].mxu0
        %1325 = vmatprep.mubr.bf16.mxu0 %v937
        %1326 = vmatmul.mubr.bf16.gmra.mrb[0].mxu0 %v770
        %v1327 = vpop.f32.mrb[0].mxu0
        %v1328 = vadd.f32 %v1092, %v1327
        %v1329 = vpop.f32.mrb[0].mxu0
        %v1330 = vpop.f32.mrb[0].mxu0
        %v1331 = vadd.f32 %v1095, %v1330
        %v1332 = vpop.f32.mrb[0].mxu0
        %1333 = vmatprep.mubr.bf16.mxu0 %v940
        %1334 = vmatmul.mubr.bf16.gmra.mrb[0].mxu0 %v772
        %v1335 = vpop.f32.mrb[0].mxu0
        %v1336 = vadd.f32 %v1100, %v1335
        %v1337 = vpop.f32.mrb[0].mxu0
        %v1338 = vpop.f32.mrb[0].mxu0
        %v1339 = vadd.f32 %v1103, %v1338
        %v1340 = vpop.f32.mrb[0].mxu0
        %1341 = vdwg.mxu0
        %v1342 = vld [vmem:[#allocation3 + $0x20] sm:$0xff]
        %v1343 = vld [vmem:[#allocation3 + $0x28] sm:$0xff]
        %v1344 = vld [vmem:[#allocation3 + $0x30] sm:$0xff]
        %v1345 = vld [vmem:[#allocation3 + $0x38] sm:$0xff]
        %v1346 = vld [vmem:[#allocation3 + $0x40] sm:$0xff]
        %v1347 = vld [vmem:[#allocation3 + $0x48] sm:$0xff]
        %v1348 = vld [vmem:[#allocation3 + $0x50] sm:$0xff]
        %v1349 = vld [vmem:[#allocation3 + $0x58] sm:$0xff]
        %v1350 = vld [vmem:[#allocation3 + $0x60] sm:$0xff]
        %v1351 = vld [vmem:[#allocation3 + $0x68] sm:$0xff]
        %v1352 = vld [vmem:[#allocation3 + $0x70] sm:$0xff]
        %v1353 = vld [vmem:[#allocation3 + $0x78] sm:$0xff]
        %v1354 = vld [vmem:[#allocation3 + $0x80] sm:$0xff]
        %v1355 = vld [vmem:[#allocation3 + $0x88] sm:$0xff]
        %v1356 = vld [vmem:[#allocation3 + $0x90] sm:$0xff]
        %v1357 = vld [vmem:[#allocation3 + $0x98] sm:$0xff]
        %v1358 = vld [vmem:[#allocation3 + $0xa0] sm:$0xff]
        %v1359 = vld [vmem:[#allocation3 + $0xa8] sm:$0xff]
        %v1360 = vld [vmem:[#allocation3 + $0xb0] sm:$0xff]
        %v1361 = vld [vmem:[#allocation3 + $0xb8] sm:$0xff]
        %v1362 = vld [vmem:[#allocation3 + $0xc0] sm:$0xff]
        %v1363 = vld [vmem:[#allocation3 + $0xc8] sm:$0xff]
        %v1364 = vld [vmem:[#allocation3 + $0xd0] sm:$0xff]
        %v1365 = vld [vmem:[#allocation3 + $0xd8] sm:$0xff]
        %v1366 = vld [vmem:[#allocation3 + $0xe0] sm:$0xff]
        %v1367 = vld [vmem:[#allocation3 + $0xe8] sm:$0xff]
        %v1368 = vld [vmem:[#allocation3 + $0xf0] sm:$0xff]
        %v1369 = vld [vmem:[#allocation3 + $0xf8] sm:$0xff]
        %v1370 = vld [vmem:[#allocation3 + $0x100] sm:$0xff]
        %v1371 = vld [vmem:[#allocation3 + $0x108] sm:$0xff]
        %v1372 = vld [vmem:[#allocation3 + $0x110] sm:$0xff]
        %v1373 = vld [vmem:[#allocation3 + $0x118] sm:$0xff]
        %s1374 = scalar_lea.vmem %s1, 192
        %v1375 = vld [vmem:[%s1374] sm:$0xf]
        %v1376 = vld [vmem:[%s1374 + $0x4] sm:$0xf]
        %v1377 = vld [vmem:[%s1374 + $0x8] sm:$0xf]
        %v1378 = vld [vmem:[%s1374 + $0xc] sm:$0xf]
        %v1379 = vld [vmem:[%s1374 + $0x10] sm:$0xf]
        %v1380 = vld [vmem:[%s1374 + $0x14] sm:$0xf]
        %v1381 = vld [vmem:[%s1374 + $0x18] sm:$0xf]
        %v1382 = vld [vmem:[%s1374 + $0x1c] sm:$0xf]
        %v1383 = vld [vmem:[%s1374 + $0x20] sm:$0xf]
        %v1384 = vld [vmem:[%s1374 + $0x24] sm:$0xf]
        %v1385 = vld [vmem:[%s1374 + $0x28] sm:$0xf]
        %v1386 = vld [vmem:[%s1374 + $0x2c] sm:$0xf]
        %v1387 = vld [vmem:[%s1374 + $0x30] sm:$0xf]
        %v1388 = vld [vmem:[%s1374 + $0x34] sm:$0xf]
        %v1389 = vld [vmem:[%s1374 + $0x38] sm:$0xf]
        %v1390 = vld [vmem:[%s1374 + $0x3c] sm:$0xf]
        %v1391 = vld [vmem:[%s1374 + $0x40] sm:$0xf]
        %v1392 = vld [vmem:[%s1374 + $0x44] sm:$0xf]
        %v1393 = vld [vmem:[%s1374 + $0x48] sm:$0xf]
        %v1394 = vld [vmem:[%s1374 + $0x4c] sm:$0xf]
        %v1395 = vld [vmem:[%s1374 + $0x50] sm:$0xf]
        %v1396 = vld [vmem:[%s1374 + $0x54] sm:$0xf]
        %v1397 = vld [vmem:[%s1374 + $0x58] sm:$0xf]
        %v1398 = vld [vmem:[%s1374 + $0x5c] sm:$0xf]
        %v1423 = vunpack.c.l.b16 %v1375
        %v1424 = vunpack.c.l.b16 %v1376
        %v1425 = vunpack.c.l.b16 %v1377
        %v1426 = vunpack.c.l.b16 %v1378
        %v1427 = vunpack.c.l.b16 %v1379
        %v1428 = vunpack.c.l.b16 %v1380
        %v1429 = vunpack.c.l.b16 %v1381
        %v1430 = vunpack.c.l.b16 %v1382
        %v1431 = vunpack.c.l.b16 %v1383
        %v1432 = vunpack.c.l.b16 %v1384
        %v1433 = vunpack.c.l.b16 %v1385
        %v1434 = vunpack.c.l.b16 %v1386
        %v1435 = vunpack.c.l.b16 %v1387
        %v1436 = vunpack.c.l.b16 %v1388
        %v1437 = vunpack.c.l.b16 %v1389
        %v1438 = vunpack.c.l.b16 %v1390
        %v1439 = vunpack.c.l.b16 %v1391
        %v1440 = vunpack.c.l.b16 %v1392
        %v1441 = vunpack.c.l.b16 %v1393
        %v1442 = vunpack.c.l.b16 %v1394
        %v1443 = vunpack.c.l.b16 %v1395
        %v1444 = vunpack.c.l.b16 %v1396
        %v1445 = vunpack.c.l.b16 %v1397
        %v1446 = vunpack.c.l.b16 %v1398
        %v1447 = vpack.c.b16 %v1424, %v1423
        %v1448 = vpack.c.b16 %v1426, %v1425
        %v1449 = vpack.c.b16 %v1428, %v1427
        %v1450 = vpack.c.b16 %v1430, %v1429
        %v1451 = vpack.c.b16 %v1432, %v1431
        %v1452 = vpack.c.b16 %v1434, %v1433
        %v1453 = vpack.c.b16 %v1436, %v1435
        %v1454 = vpack.c.b16 %v1438, %v1437
        %v1455 = vpack.c.b16 %v1440, %v1439
        %v1456 = vpack.c.b16 %v1442, %v1441
        %v1457 = vpack.c.b16 %v1444, %v1443
        %v1458 = vpack.c.b16 %v1446, %v1445
        %v1472 = vsel %vm332, %v1343, 0
        %v1475 = vsel %vm332, %v1345, 0
        %v1478 = vsel %vm332, %v1347, 0
        %v1481 = vsel %vm332, %v1349, 0
        %v1484 = vsel %vm332, %v1351, 0
        %v1487 = vsel %vm332, %v1353, 0
        %v1490 = vsel %vm332, %v1355, 0
        %v1493 = vsel %vm332, %v1357, 0
        %v1496 = vsel %vm332, %v1359, 0
        %v1499 = vsel %vm332, %v1361, 0
        %v1502 = vsel %vm332, %v1363, 0
        %v1505 = vsel %vm332, %v1365, 0
        %v1508 = vsel %vm332, %v1367, 0
        %v1511 = vsel %vm332, %v1369, 0
        %v1514 = vsel %vm332, %v1371, 0
        %v1517 = vsel %vm332, %v1373, 0
        %1519 = vmatprep.subr.bf16.mxu0 0
        %1520 = vmatpush1.bf16.msra.mxu0 %v1447
        %1521 = vmatprep.subr.bf16.mxu0 0
        %1522 = vmatpush1.bf16.msra.mxu0 %v1448
        %1523 = vmatprep.subr.bf16.mxu0 0
        %1524 = vmatpush1.bf16.msra.mxu0 %v1449
        %1525 = vmatprep.subr.bf16.mxu0 0
        %1526 = vmatpush1.bf16.msra.mxu0 %v1450
        %1527 = vmatprep.subr.bf16.mxu0 0
        %1528 = vmatpush1.bf16.msra.mxu0 %v1451
        %1529 = vmatprep.subr.bf16.mxu0 0
        %1530 = vmatpush1.bf16.msra.mxu0 %v1452
        %1531 = vmatprep.subr.bf16.mxu0 0
        %1532 = vmatpush1.bf16.msra.mxu0 %v1453
        %1533 = vmatprep.subr.bf16.mxu0 0
        %1534 = vmatpush1.bf16.msra.mxu0 %v1454
        %1535 = vmatprep.subr.bf16.mxu0 0
        %1536 = vmatpush1.bf16.msra.mxu0 %v1455
        %1537 = vmatprep.subr.bf16.mxu0 0
        %1538 = vmatpush1.bf16.msra.mxu0 %v1456
        %1539 = vmatprep.subr.bf16.mxu0 0
        %1540 = vmatpush1.bf16.msra.mxu0 %v1457
        %1541 = vmatprep.subr.bf16.mxu0 0
        %1542 = vmatpush1.bf16.msra.mxu0 %v1458
        %1543 = vmatprep.subr.bf16.mxu0 0
        %1544 = vmatpush1.bf16.msra.mxu0 0
        %1545 = vmatprep.subr.bf16.mxu0 0
        %1546 = vmatpush1.bf16.msra.mxu0 0
        %1547 = vmatprep.subr.bf16.mxu0 0
        %1548 = vmatpush1.bf16.msra.mxu0 0
        %1549 = vmatprep.subr.bf16.mxu0 0
        %1550 = vmatpush1.bf16.msra.mxu0 0
        %1551 = vmatprep.mubr.bf16.mxu0 %v1472
        %1552 = vmatmul.mubr.bf16.gmra.mrb[0].mxu0 %v1342
        %v1553 = vpop.f32.mrb[0].mxu0
        %v1554 = vadd.f32 0.0, %v1553
        %v1555 = vpop.f32.mrb[0].mxu0
        %v1556 = vpop.f32.mrb[0].mxu0
        %v1557 = vadd.f32 0.0, %v1556
        %v1558 = vpop.f32.mrb[0].mxu0
        %1559 = vmatprep.mubr.bf16.mxu0 %v1475
        %1560 = vmatmul.mubr.bf16.gmra.mrb[0].mxu0 %v1344
        %v1561 = vpop.f32.mrb[0].mxu0
        %v1562 = vadd.f32 0.0, %v1561
        %v1563 = vpop.f32.mrb[0].mxu0
        %v1564 = vpop.f32.mrb[0].mxu0
        %v1565 = vadd.f32 0.0, %v1564
        %v1566 = vpop.f32.mrb[0].mxu0
        %1567 = vmatprep.mubr.bf16.mxu0 %v1478
        %1568 = vmatmul.mubr.bf16.gmra.mrb[0].mxu0 %v1346
        %v1569 = vpop.f32.mrb[0].mxu0
        %v1570 = vadd.f32 0.0, %v1569
        %v1571 = vpop.f32.mrb[0].mxu0
        %v1572 = vpop.f32.mrb[0].mxu0
        %v1573 = vadd.f32 0.0, %v1572
        %v1574 = vpop.f32.mrb[0].mxu0
        %1575 = vmatprep.mubr.bf16.mxu0 %v1481
        %1576 = vmatmul.mubr.bf16.gmra.mrb[0].mxu0 %v1348
        %v1577 = vpop.f32.mrb[0].mxu0
        %v1578 = vadd.f32 0.0, %v1577
        %v1579 = vpop.f32.mrb[0].mxu0
        %v1580 = vpop.f32.mrb[0].mxu0
        %v1581 = vadd.f32 0.0, %v1580
        %v1582 = vpop.f32.mrb[0].mxu0
        %1583 = vmatprep.mubr.bf16.mxu0 %v1484
        %1584 = vmatmul.mubr.bf16.gmra.mrb[0].mxu0 %v1350
        %v1585 = vpop.f32.mrb[0].mxu0
        %v1586 = vadd.f32 0.0, %v1585
        %v1587 = vpop.f32.mrb[0].mxu0
        %v1588 = vpop.f32.mrb[0].mxu0
        %v1589 = vadd.f32 0.0, %v1588
        %v1590 = vpop.f32.mrb[0].mxu0
        %1591 = vmatprep.mubr.bf16.mxu0 %v1487
        %1592 = vmatmul.mubr.bf16.gmra.mrb[0].mxu0 %v1352
        %v1593 = vpop.f32.mrb[0].mxu0
        %v1594 = vadd.f32 0.0, %v1593
        %v1595 = vpop.f32.mrb[0].mxu0
        %v1596 = vpop.f32.mrb[0].mxu0
        %v1597 = vadd.f32 0.0, %v1596
        %v1598 = vpop.f32.mrb[0].mxu0
        %1599 = vmatprep.mubr.bf16.mxu0 %v1490
        %1600 = vmatmul.mubr.bf16.gmra.mrb[0].mxu0 %v1354
        %v1601 = vpop.f32.mrb[0].mxu0
        %v1602 = vadd.f32 0.0, %v1601
        %v1603 = vpop.f32.mrb[0].mxu0
        %v1604 = vpop.f32.mrb[0].mxu0
        %v1605 = vadd.f32 0.0, %v1604
        %v1606 = vpop.f32.mrb[0].mxu0
        %1607 = vmatprep.mubr.bf16.mxu0 %v1493
        %1608 = vmatmul.mubr.bf16.gmra.mrb[0].mxu0 %v1356
        %v1609 = vpop.f32.mrb[0].mxu0
        %v1610 = vadd.f32 0.0, %v1609
        %v1611 = vpop.f32.mrb[0].mxu0
        %v1612 = vpop.f32.mrb[0].mxu0
        %v1613 = vadd.f32 0.0, %v1612
        %v1614 = vpop.f32.mrb[0].mxu0
        %1615 = vmatprep.mubr.bf16.mxu0 %v1496
        %1616 = vmatmul.mubr.bf16.gmra.mrb[0].mxu0 %v1358
        %v1617 = vpop.f32.mrb[0].mxu0
        %v1618 = vadd.f32 0.0, %v1617
        %v1619 = vpop.f32.mrb[0].mxu0
        %v1620 = vpop.f32.mrb[0].mxu0
        %v1621 = vadd.f32 0.0, %v1620
        %v1622 = vpop.f32.mrb[0].mxu0
        %1623 = vmatprep.mubr.bf16.mxu0 %v1499
        %1624 = vmatmul.mubr.bf16.gmra.mrb[0].mxu0 %v1360
        %v1625 = vpop.f32.mrb[0].mxu0
        %v1626 = vadd.f32 0.0, %v1625
        %v1627 = vpop.f32.mrb[0].mxu0
        %v1628 = vpop.f32.mrb[0].mxu0
        %v1629 = vadd.f32 0.0, %v1628
        %v1630 = vpop.f32.mrb[0].mxu0
        %1631 = vmatprep.mubr.bf16.mxu0 %v1502
        %1632 = vmatmul.mubr.bf16.gmra.mrb[0].mxu0 %v1362
        %v1633 = vpop.f32.mrb[0].mxu0
        %v1634 = vadd.f32 0.0, %v1633
        %v1635 = vpop.f32.mrb[0].mxu0
        %v1636 = vpop.f32.mrb[0].mxu0
        %v1637 = vadd.f32 0.0, %v1636
        %v1638 = vpop.f32.mrb[0].mxu0
        %1639 = vmatprep.mubr.bf16.mxu0 %v1505
        %1640 = vmatmul.mubr.bf16.gmra.mrb[0].mxu0 %v1364
        %v1641 = vpop.f32.mrb[0].mxu0
        %v1642 = vadd.f32 0.0, %v1641
        %v1643 = vpop.f32.mrb[0].mxu0
        %v1644 = vpop.f32.mrb[0].mxu0
        %v1645 = vadd.f32 0.0, %v1644
        %v1646 = vpop.f32.mrb[0].mxu0
        %1647 = vmatprep.mubr.bf16.mxu0 %v1508
        %1648 = vmatmul.mubr.bf16.gmra.mrb[0].mxu0 %v1366
        %v1649 = vpop.f32.mrb[0].mxu0
        %v1650 = vadd.f32 0.0, %v1649
        %v1651 = vpop.f32.mrb[0].mxu0
        %v1652 = vpop.f32.mrb[0].mxu0
        %v1653 = vadd.f32 0.0, %v1652
        %v1654 = vpop.f32.mrb[0].mxu0
        %1655 = vmatprep.mubr.bf16.mxu0 %v1511
        %1656 = vmatmul.mubr.bf16.gmra.mrb[0].mxu0 %v1368
        %v1657 = vpop.f32.mrb[0].mxu0
        %v1658 = vadd.f32 0.0, %v1657
        %v1659 = vpop.f32.mrb[0].mxu0
        %v1660 = vpop.f32.mrb[0].mxu0
        %v1661 = vadd.f32 0.0, %v1660
        %v1662 = vpop.f32.mrb[0].mxu0
        %1663 = vmatprep.mubr.bf16.mxu0 %v1514
        %1664 = vmatmul.mubr.bf16.gmra.mrb[0].mxu0 %v1370
        %v1665 = vpop.f32.mrb[0].mxu0
        %v1666 = vadd.f32 0.0, %v1665
        %v1667 = vpop.f32.mrb[0].mxu0
        %v1668 = vpop.f32.mrb[0].mxu0
        %v1669 = vadd.f32 0.0, %v1668
        %v1670 = vpop.f32.mrb[0].mxu0
        %1671 = vmatprep.mubr.bf16.mxu0 %v1517
        %1672 = vmatmul.mubr.bf16.gmra.mrb[0].mxu0 %v1372
        %v1673 = vpop.f32.mrb[0].mxu0
        %v1674 = vadd.f32 0.0, %v1673
        %v1675 = vpop.f32.mrb[0].mxu0
        %v1676 = vpop.f32.mrb[0].mxu0
        %v1677 = vadd.f32 0.0, %v1676
        %v1678 = vpop.f32.mrb[0].mxu0
        %1679 = vdwg.mxu0
        %v1680 = vadd.f32 %v1216, %v1554
        %v1681 = vadd.f32 %v1219, %v1557
        %v1682 = vadd.f32 %v1224, %v1562
        %v1683 = vadd.f32 %v1227, %v1565
        %v1684 = vadd.f32 %v1232, %v1570
        %v1685 = vadd.f32 %v1235, %v1573
        %v1686 = vadd.f32 %v1240, %v1578
        %v1687 = vadd.f32 %v1243, %v1581
        %v1688 = vadd.f32 %v1248, %v1586
        %v1689 = vadd.f32 %v1251, %v1589
        %v1690 = vadd.f32 %v1256, %v1594
        %v1691 = vadd.f32 %v1259, %v1597
        %v1692 = vadd.f32 %v1264, %v1602
        %v1693 = vadd.f32 %v1267, %v1605
        %v1694 = vadd.f32 %v1272, %v1610
        %v1695 = vadd.f32 %v1275, %v1613
        %v1696 = vadd.f32 %v1280, %v1618
        %v1697 = vadd.f32 %v1283, %v1621
        %v1698 = vadd.f32 %v1288, %v1626
        %v1699 = vadd.f32 %v1291, %v1629
        %v1700 = vadd.f32 %v1296, %v1634
        %v1701 = vadd.f32 %v1299, %v1637
        %v1702 = vadd.f32 %v1304, %v1642
        %v1703 = vadd.f32 %v1307, %v1645
        %v1704 = vadd.f32 %v1312, %v1650
        %v1705 = vadd.f32 %v1315, %v1653
        %v1706 = vadd.f32 %v1320, %v1658
        %v1707 = vadd.f32 %v1323, %v1661
        %v1708 = vadd.f32 %v1328, %v1666
        %v1709 = vadd.f32 %v1331, %v1669
        %v1710 = vadd.f32 %v1336, %v1674
        %v1711 = vadd.f32 %v1339, %v1677
        %v1712 = vld [vmem:[%s2] sm:$0x1]
        %v1714 = vlaneseq
        %v1715 = vshrl.u32 %v1714, 7
        %v1716 = vsub.s32 0, %v1715
        %v1717 = vrot.slane %v1712, %v1716
        %v1719 = vadd.f32 %v1680, %v1717
        %v1720 = vadd.f32 %v1681, %v1717
        %v1721 = vadd.f32 %v1682, %v1717
        %v1722 = vadd.f32 %v1683, %v1717
        %v1723 = vadd.f32 %v1684, %v1717
        %v1724 = vadd.f32 %v1685, %v1717
        %v1725 = vadd.f32 %v1686, %v1717
        %v1726 = vadd.f32 %v1687, %v1717
        %v1727 = vadd.f32 %v1688, %v1717
        %v1728 = vadd.f32 %v1689, %v1717
        %v1729 = vadd.f32 %v1690, %v1717
        %v1730 = vadd.f32 %v1691, %v1717
        %v1731 = vadd.f32 %v1692, %v1717
        %v1732 = vadd.f32 %v1693, %v1717
        %v1733 = vadd.f32 %v1694, %v1717
        %v1734 = vadd.f32 %v1695, %v1717
        %v1735 = vadd.f32 %v1696, %v1717
        %v1736 = vadd.f32 %v1697, %v1717
        %v1737 = vadd.f32 %v1698, %v1717
        %v1738 = vadd.f32 %v1699, %v1717
        %v1739 = vadd.f32 %v1700, %v1717
        %v1740 = vadd.f32 %v1701, %v1717
        %v1741 = vadd.f32 %v1702, %v1717
        %v1742 = vadd.f32 %v1703, %v1717
        %v1743 = vadd.f32 %v1704, %v1717
        %v1744 = vadd.f32 %v1705, %v1717
        %v1745 = vadd.f32 %v1706, %v1717
        %v1746 = vadd.f32 %v1707, %v1717
        %v1747 = vadd.f32 %v1708, %v1717
        %v1748 = vadd.f32 %v1709, %v1717
        %v1749 = vadd.f32 %v1710, %v1717
        %v1750 = vadd.f32 %v1711, %v1717
        %v1751 = vmax.f32 %v1719, 0.0
        %v1752 = vmax.f32 %v1720, 0.0
        %v1753 = vmax.f32 %v1721, 0.0
        %v1754 = vmax.f32 %v1722, 0.0
        %v1755 = vmax.f32 %v1723, 0.0
        %v1756 = vmax.f32 %v1724, 0.0
        %v1757 = vmax.f32 %v1725, 0.0
        %v1758 = vmax.f32 %v1726, 0.0
        %v1759 = vmax.f32 %v1727, 0.0
        %v1760 = vmax.f32 %v1728, 0.0
        %v1761 = vmax.f32 %v1729, 0.0
        %v1762 = vmax.f32 %v1730, 0.0
        %v1763 = vmax.f32 %v1731, 0.0
        %v1764 = vmax.f32 %v1732, 0.0
        %v1765 = vmax.f32 %v1733, 0.0
        %v1766 = vmax.f32 %v1734, 0.0
        %v1767 = vmax.f32 %v1735, 0.0
        %v1768 = vmax.f32 %v1736, 0.0
        %v1769 = vmax.f32 %v1737, 0.0
        %v1770 = vmax.f32 %v1738, 0.0
        %v1771 = vmax.f32 %v1739, 0.0
        %v1772 = vmax.f32 %v1740, 0.0
        %v1773 = vmax.f32 %v1741, 0.0
        %v1774 = vmax.f32 %v1742, 0.0
        %v1775 = vmax.f32 %v1743, 0.0
        %v1776 = vmax.f32 %v1744, 0.0
        %v1777 = vmax.f32 %v1745, 0.0
        %v1778 = vmax.f32 %v1746, 0.0
        %v1779 = vmax.f32 %v1747, 0.0
        %v1780 = vmax.f32 %v1748, 0.0
        %v1781 = vmax.f32 %v1749, 0.0
        %v1782 = vmax.f32 %v1750, 0.0
        %1783 = vst.msk [vmem:[%s420 + $0x1] sm:$0xff] %vm332, %v1751
        %1784 = vst.msk [vmem:[%s420 + $0x9] sm:$0xff] %vm332, %v1752
        %1785 = vst.msk [vmem:[%s420 + $0x19] sm:$0xff] %vm332, %v1753
        %1786 = vst.msk [vmem:[%s420 + $0x21] sm:$0xff] %vm332, %v1754
        %1787 = vst.msk [vmem:[%s420 + $0x31] sm:$0xff] %vm332, %v1755
        %1788 = vst.msk [vmem:[%s420 + $0x39] sm:$0xff] %vm332, %v1756
        %1789 = vst.msk [vmem:[%s420 + $0x49] sm:$0xff] %vm332, %v1757
        %1790 = vst.msk [vmem:[%s420 + $0x51] sm:$0xff] %vm332, %v1758
        %1791 = vst.msk [vmem:[%s420 + $0x61] sm:$0xff] %vm332, %v1759
        %1792 = vst.msk [vmem:[%s420 + $0x69] sm:$0xff] %vm332, %v1760
        %1793 = vst.msk [vmem:[%s420 + $0x79] sm:$0xff] %vm332, %v1761
        %1794 = vst.msk [vmem:[%s420 + $0x81] sm:$0xff] %vm332, %v1762
        %1795 = vst.msk [vmem:[%s420 + $0x91] sm:$0xff] %vm332, %v1763
        %1796 = vst.msk [vmem:[%s420 + $0x99] sm:$0xff] %vm332, %v1764
        %1797 = vst.msk [vmem:[%s420 + $0xa9] sm:$0xff] %vm332, %v1765
        %1798 = vst.msk [vmem:[%s420 + $0xb1] sm:$0xff] %vm332, %v1766
        %1799 = vst.msk [vmem:[%s420 + $0xc1] sm:$0xff] %vm332, %v1767
        %1800 = vst.msk [vmem:[%s420 + $0xc9] sm:$0xff] %vm332, %v1768
        %1801 = vst.msk [vmem:[%s420 + $0xd9] sm:$0xff] %vm332, %v1769
        %1802 = vst.msk [vmem:[%s420 + $0xe1] sm:$0xff] %vm332, %v1770
        %1803 = vst.msk [vmem:[%s420 + $0xf1] sm:$0xff] %vm332, %v1771
        %1804 = vst.msk [vmem:[%s420 + $0xf9] sm:$0xff] %vm332, %v1772
        %1805 = vst.msk [vmem:[%s420 + $0x109] sm:$0xff] %vm332, %v1773
        %1806 = vst.msk [vmem:[%s420 + $0x111] sm:$0xff] %vm332, %v1774
        %1807 = vst.msk [vmem:[%s420 + $0x121] sm:$0xff] %vm332, %v1775
        %1808 = vst.msk [vmem:[%s420 + $0x129] sm:$0xff] %vm332, %v1776
        %1809 = vst.msk [vmem:[%s420 + $0x139] sm:$0xff] %vm332, %v1777
        %1810 = vst.msk [vmem:[%s420 + $0x141] sm:$0xff] %vm332, %v1778
        %1811 = vst.msk [vmem:[%s420 + $0x151] sm:$0xff] %vm332, %v1779
        %1812 = vst.msk [vmem:[%s420 + $0x159] sm:$0xff] %vm332, %v1780
        %1813 = vst.msk [vmem:[%s420 + $0x169] sm:$0xff] %vm332, %v1781
        %1814 = vst.msk [vmem:[%s420 + $0x171] sm:$0xff] %vm332, %v1782
        %v1815 = vld [vmem:[#allocation2] sm:$0xff]
        %v1816 = vld [vmem:[#allocation2 + $0x8] sm:$0xff]
        %v1817 = vld [vmem:[#allocation2 + $0x18] sm:$0xff]
        %v1818 = vld [vmem:[#allocation2 + $0x20] sm:$0xff]
        %v1819 = vld [vmem:[#allocation2 + $0x30] sm:$0xff]
        %v1820 = vld [vmem:[#allocation2 + $0x38] sm:$0xff]
        %v1821 = vld [vmem:[#allocation2 + $0x48] sm:$0xff]
        %v1822 = vld [vmem:[#allocation2 + $0x50] sm:$0xff]
        %v1823 = vld [vmem:[#allocation2 + $0x60] sm:$0xff]
        %v1824 = vld [vmem:[#allocation2 + $0x68] sm:$0xff]
        %v1825 = vld [vmem:[#allocation2 + $0x78] sm:$0xff]
        %v1826 = vld [vmem:[#allocation2 + $0x80] sm:$0xff]
        %v1827 = vld [vmem:[#allocation2 + $0x90] sm:$0xff]
        %v1828 = vld [vmem:[#allocation2 + $0x98] sm:$0xff]
        %v1829 = vld [vmem:[#allocation2 + $0xa8] sm:$0xff]
        %v1830 = vld [vmem:[#allocation2 + $0xb0] sm:$0xff]
        %v1831 = vld [vmem:[#allocation2 + $0xc0] sm:$0xff]
        %v1832 = vld [vmem:[#allocation2 + $0xc8] sm:$0xff]
        %v1833 = vld [vmem:[#allocation2 + $0xd8] sm:$0xff]
        %v1834 = vld [vmem:[#allocation2 + $0xe0] sm:$0xff]
        %v1835 = vld [vmem:[#allocation2 + $0xf0] sm:$0xff]
        %v1836 = vld [vmem:[#allocation2 + $0xf8] sm:$0xff]
        %v1837 = vld [vmem:[#allocation2 + $0x108] sm:$0xff]
        %v1838 = vld [vmem:[#allocation2 + $0x110] sm:$0xff]
        %v1839 = vld [vmem:[#allocation2 + $0x120] sm:$0xff]
        %v1840 = vld [vmem:[#allocation2 + $0x128] sm:$0xff]
        %v1841 = vld [vmem:[#allocation2 + $0x138] sm:$0xff]
        %v1842 = vld [vmem:[#allocation2 + $0x140] sm:$0xff]
        %v1843 = vld [vmem:[#allocation2 + $0x150] sm:$0xff]
        %v1844 = vld [vmem:[#allocation2 + $0x158] sm:$0xff]
        %v1845 = vld [vmem:[#allocation2 + $0x168] sm:$0xff]
        %v1846 = vld [vmem:[#allocation2 + $0x170] sm:$0xff]
        %v1847 = vld [vmem:[#allocation2 + $0x180] sm:$0xff]
        %v1848 = vld [vmem:[#allocation2 + $0x188] sm:$0xff]
        %v1849 = vld [vmem:[#allocation2 + $0x198] sm:$0xff]
        %v1850 = vld [vmem:[#allocation2 + $0x1a0] sm:$0xff]
        %v1851 = vpack.c.bf16 %v1816, %v1815
        %v1852 = vpack.c.bf16 %v1818, %v1817
        %v1853 = vpack.c.bf16 %v1820, %v1819
        %v1854 = vpack.c.bf16 %v1822, %v1821
        %v1855 = vpack.c.bf16 %v1824, %v1823
        %v1856 = vpack.c.bf16 %v1826, %v1825
        %v1857 = vpack.c.bf16 %v1828, %v1827
        %v1858 = vpack.c.bf16 %v1830, %v1829
        %v1859 = vpack.c.bf16 %v1832, %v1831
        %v1860 = vpack.c.bf16 %v1834, %v1833
        %v1861 = vpack.c.bf16 %v1836, %v1835
        %v1862 = vpack.c.bf16 %v1838, %v1837
        %v1863 = vpack.c.bf16 %v1840, %v1839
        %v1864 = vpack.c.bf16 %v1842, %v1841
        %v1865 = vpack.c.bf16 %v1844, %v1843
        %v1866 = vpack.c.bf16 %v1846, %v1845
        %v1867 = vpack.c.bf16 %v1848, %v1847
        %v1868 = vpack.c.bf16 %v1850, %v1849
        %1869 = vst.msk [vmem:[#allocation3] sm:$0xff] %vm332, %v1851
        %1870 = vst.msk [vmem:[#allocation3 + $0x10] sm:$0xff] %vm332, %v1852
        %1871 = vst.msk [vmem:[#allocation3 + $0x20] sm:$0xff] %vm332, %v1853
        %1872 = vst.msk [vmem:[#allocation3 + $0x30] sm:$0xff] %vm332, %v1854
        %1873 = vst.msk [vmem:[#allocation3 + $0x40] sm:$0xff] %vm332, %v1855
        %1874 = vst.msk [vmem:[#allocation3 + $0x50] sm:$0xff] %vm332, %v1856
        %1875 = vst.msk [vmem:[#allocation3 + $0x60] sm:$0xff] %vm332, %v1857
        %1876 = vst.msk [vmem:[#allocation3 + $0x70] sm:$0xff] %vm332, %v1858
        %1877 = vst.msk [vmem:[#allocation3 + $0x80] sm:$0xff] %vm332, %v1859
        %1878 = vst.msk [vmem:[#allocation3 + $0x90] sm:$0xff] %vm332, %v1860
        %1879 = vst.msk [vmem:[#allocation3 + $0xa0] sm:$0xff] %vm332, %v1861
        %1880 = vst.msk [vmem:[#allocation3 + $0xb0] sm:$0xff] %vm332, %v1862
        %1881 = vst.msk [vmem:[#allocation3 + $0xc0] sm:$0xff] %vm332, %v1863
        %1882 = vst.msk [vmem:[#allocation3 + $0xd0] sm:$0xff] %vm332, %v1864
        %1883 = vst.msk [vmem:[#allocation3 + $0xe0] sm:$0xff] %vm332, %v1865
        %1884 = vst.msk [vmem:[#allocation3 + $0xf0] sm:$0xff] %vm332, %v1866
        %1885 = vst.msk [vmem:[#allocation3 + $0x100] sm:$0xff] %vm332, %v1867
        %1886 = vst.msk [vmem:[#allocation3 + $0x110] sm:$0xff] %vm332, %v1868
        %v1887 = vld [vmem:[#allocation2 + $0x1] sm:$0xff]
        %v1888 = vld [vmem:[#allocation2 + $0x9] sm:$0xff]
        %v1889 = vld [vmem:[#allocation2 + $0x19] sm:$0xff]
        %v1890 = vld [vmem:[#allocation2 + $0x21] sm:$0xff]
        %v1891 = vld [vmem:[#allocation2 + $0x31] sm:$0xff]
        %v1892 = vld [vmem:[#allocation2 + $0x39] sm:$0xff]
        %v1893 = vld [vmem:[#allocation2 + $0x49] sm:$0xff]
        %v1894 = vld [vmem:[#allocation2 + $0x51] sm:$0xff]
        %v1895 = vld [vmem:[#allocation2 + $0x61] sm:$0xff]
        %v1896 = vld [vmem:[#allocation2 + $0x69] sm:$0xff]
        %v1897 = vld [vmem:[#allocation2 + $0x79] sm:$0xff]
        %v1898 = vld [vmem:[#allocation2 + $0x81] sm:$0xff]
        %v1899 = vld [vmem:[#allocation2 + $0x91] sm:$0xff]
        %v1900 = vld [vmem:[#allocation2 + $0x99] sm:$0xff]
        %v1901 = vld [vmem:[#allocation2 + $0xa9] sm:$0xff]
        %v1902 = vld [vmem:[#allocation2 + $0xb1] sm:$0xff]
        %v1903 = vld [vmem:[#allocation2 + $0xc1] sm:$0xff]
        %v1904 = vld [vmem:[#allocation2 + $0xc9] sm:$0xff]
        %v1905 = vld [vmem:[#allocation2 + $0xd9] sm:$0xff]
        %v1906 = vld [vmem:[#allocation2 + $0xe1] sm:$0xff]
        %v1907 = vld [vmem:[#allocation2 + $0xf1] sm:$0xff]
        %v1908 = vld [vmem:[#allocation2 + $0xf9] sm:$0xff]
        %v1909 = vld [vmem:[#allocation2 + $0x109] sm:$0xff]
        %v1910 = vld [vmem:[#allocation2 + $0x111] sm:$0xff]
        %v1911 = vld [vmem:[#allocation2 + $0x121] sm:$0xff]
        %v1912 = vld [vmem:[#allocation2 + $0x129] sm:$0xff]
        %v1913 = vld [vmem:[#allocation2 + $0x139] sm:$0xff]
        %v1914 = vld [vmem:[#allocation2 + $0x141] sm:$0xff]
        %v1915 = vld [vmem:[#allocation2 + $0x151] sm:$0xff]
        %v1916 = vld [vmem:[#allocation2 + $0x159] sm:$0xff]
        %v1917 = vld [vmem:[#allocation2 + $0x169] sm:$0xff]
        %v1918 = vld [vmem:[#allocation2 + $0x171] sm:$0xff]
        %v1919 = vld [vmem:[#allocation2 + $0x181] sm:$0xff]
        %v1920 = vld [vmem:[#allocation2 + $0x189] sm:$0xff]
        %v1921 = vld [vmem:[#allocation2 + $0x199] sm:$0xff]
        %v1922 = vld [vmem:[#allocation2 + $0x1a1] sm:$0xff]
        %v1923 = vpack.c.bf16 %v1888, %v1887
        %v1924 = vpack.c.bf16 %v1890, %v1889
        %v1925 = vpack.c.bf16 %v1892, %v1891
        %v1926 = vpack.c.bf16 %v1894, %v1893
        %v1927 = vpack.c.bf16 %v1896, %v1895
        %v1928 = vpack.c.bf16 %v1898, %v1897
        %v1929 = vpack.c.bf16 %v1900, %v1899
        %v1930 = vpack.c.bf16 %v1902, %v1901
        %v1931 = vpack.c.bf16 %v1904, %v1903
        %v1932 = vpack.c.bf16 %v1906, %v1905
        %v1933 = vpack.c.bf16 %v1908, %v1907
        %v1934 = vpack.c.bf16 %v1910, %v1909
        %v1935 = vpack.c.bf16 %v1912, %v1911
        %v1936 = vpack.c.bf16 %v1914, %v1913
        %v1937 = vpack.c.bf16 %v1916, %v1915
        %v1938 = vpack.c.bf16 %v1918, %v1917
        %v1939 = vpack.c.bf16 %v1920, %v1919
        %v1940 = vpack.c.bf16 %v1922, %v1921
        %1959 = vrot.lane.b32.xlu0 %v1923, 64
        %v1960 = vpop.permute.xlu0 %1959
        %1961 = vrot.lane.b32.xlu0 %v1924, 64
        %v1962 = vpop.permute.xlu0 %1961
        %1963 = vrot.lane.b32.xlu0 %v1925, 64
        %v1964 = vpop.permute.xlu0 %1963
        %1965 = vrot.lane.b32.xlu0 %v1926, 64
        %v1966 = vpop.permute.xlu0 %1965
        %1967 = vrot.lane.b32.xlu0 %v1927, 64
        %v1968 = vpop.permute.xlu0 %1967
        %1969 = vrot.lane.b32.xlu0 %v1928, 64
        %v1970 = vpop.permute.xlu0 %1969
        %1971 = vrot.lane.b32.xlu0 %v1929, 64
        %v1972 = vpop.permute.xlu0 %1971
        %1973 = vrot.lane.b32.xlu0 %v1930, 64
        %v1974 = vpop.permute.xlu0 %1973
        %1975 = vrot.lane.b32.xlu0 %v1931, 64
        %v1976 = vpop.permute.xlu0 %1975
        %1977 = vrot.lane.b32.xlu0 %v1932, 64
        %v1978 = vpop.permute.xlu0 %1977
        %1979 = vrot.lane.b32.xlu0 %v1933, 64
        %v1980 = vpop.permute.xlu0 %1979
        %1981 = vrot.lane.b32.xlu0 %v1934, 64
        %v1982 = vpop.permute.xlu0 %1981
        %1983 = vrot.lane.b32.xlu0 %v1935, 64
        %v1984 = vpop.permute.xlu0 %1983
        %1985 = vrot.lane.b32.xlu0 %v1936, 64
        %v1986 = vpop.permute.xlu0 %1985
        %1987 = vrot.lane.b32.xlu0 %v1937, 64
        %v1988 = vpop.permute.xlu0 %1987
        %1989 = vrot.lane.b32.xlu0 %v1938, 64
        %v1990 = vpop.permute.xlu0 %1989
        %1991 = vrot.lane.b32.xlu0 %v1939, 64
        %v1992 = vpop.permute.xlu0 %1991
        %1993 = vrot.lane.b32.xlu0 %v1940, 64
        %v1994 = vpop.permute.xlu0 %1993
        %2013 = vst.msk [vmem:[#allocation3] sm:$0xff] %vm651, %v1960
        %2014 = vst.msk [vmem:[#allocation3 + $0x10] sm:$0xff] %vm651, %v1962
        %2015 = vst.msk [vmem:[#allocation3 + $0x20] sm:$0xff] %vm651, %v1964
        %2016 = vst.msk [vmem:[#allocation3 + $0x30] sm:$0xff] %vm651, %v1966
        %2017 = vst.msk [vmem:[#allocation3 + $0x40] sm:$0xff] %vm651, %v1968
        %2018 = vst.msk [vmem:[#allocation3 + $0x50] sm:$0xff] %vm651, %v1970
        %2019 = vst.msk [vmem:[#allocation3 + $0x60] sm:$0xff] %vm651, %v1972
        %2020 = vst.msk [vmem:[#allocation3 + $0x70] sm:$0xff] %vm651, %v1974
        %2021 = vst.msk [vmem:[#allocation3 + $0x80] sm:$0xff] %vm651, %v1976
        %2022 = vst.msk [vmem:[#allocation3 + $0x90] sm:$0xff] %vm651, %v1978
        %2023 = vst.msk [vmem:[#allocation3 + $0xa0] sm:$0xff] %vm651, %v1980
        %2024 = vst.msk [vmem:[#allocation3 + $0xb0] sm:$0xff] %vm651, %v1982
        %2025 = vst.msk [vmem:[#allocation3 + $0xc0] sm:$0xff] %vm651, %v1984
        %2026 = vst.msk [vmem:[#allocation3 + $0xd0] sm:$0xff] %vm651, %v1986
        %2027 = vst.msk [vmem:[#allocation3 + $0xe0] sm:$0xff] %vm651, %v1988
        %2028 = vst.msk [vmem:[#allocation3 + $0xf0] sm:$0xff] %vm651, %v1990
        %2029 = vst.msk [vmem:[#allocation3 + $0x100] sm:$0xff] %vm651, %v1992
        %2030 = vst.msk [vmem:[#allocation3 + $0x110] sm:$0xff] %vm651, %v1994
        %v2031 = vld [vmem:[#allocation2 + $0x2] sm:$0xff]
        %v2032 = vld [vmem:[#allocation2 + $0xa] sm:$0xff]
        %v2033 = vld [vmem:[#allocation2 + $0x1a] sm:$0xff]
        %v2034 = vld [vmem:[#allocation2 + $0x22] sm:$0xff]
        %v2035 = vld [vmem:[#allocation2 + $0x32] sm:$0xff]
        %v2036 = vld [vmem:[#allocation2 + $0x3a] sm:$0xff]
        %v2037 = vld [vmem:[#allocation2 + $0x4a] sm:$0xff]
        %v2038 = vld [vmem:[#allocation2 + $0x52] sm:$0xff]
        %v2039 = vld [vmem:[#allocation2 + $0x62] sm:$0xff]
        %v2040 = vld [vmem:[#allocation2 + $0x6a] sm:$0xff]
        %v2041 = vld [vmem:[#allocation2 + $0x7a] sm:$0xff]
        %v2042 = vld [vmem:[#allocation2 + $0x82] sm:$0xff]
        %v2043 = vld [vmem:[#allocation2 + $0x92] sm:$0xff]
        %v2044 = vld [vmem:[#allocation2 + $0x9a] sm:$0xff]
        %v2045 = vld [vmem:[#allocation2 + $0xaa] sm:$0xff]
        %v2046 = vld [vmem:[#allocation2 + $0xb2] sm:$0xff]
        %v2047 = vld [vmem:[#allocation2 + $0xc2] sm:$0xff]
        %v2048 = vld [vmem:[#allocation2 + $0xca] sm:$0xff]
        %v2049 = vld [vmem:[#allocation2 + $0xda] sm:$0xff]
        %v2050 = vld [vmem:[#allocation2 + $0xe2] sm:$0xff]
        %v2051 = vld [vmem:[#allocation2 + $0xf2] sm:$0xff]
        %v2052 = vld [vmem:[#allocation2 + $0xfa] sm:$0xff]
        %v2053 = vld [vmem:[#allocation2 + $0x10a] sm:$0xff]
        %v2054 = vld [vmem:[#allocation2 + $0x112] sm:$0xff]
        %v2055 = vld [vmem:[#allocation2 + $0x122] sm:$0xff]
        %v2056 = vld [vmem:[#allocation2 + $0x12a] sm:$0xff]
        %v2057 = vld [vmem:[#allocation2 + $0x13a] sm:$0xff]
        %v2058 = vld [vmem:[#allocation2 + $0x142] sm:$0xff]
        %v2059 = vld [vmem:[#allocation2 + $0x152] sm:$0xff]
        %v2060 = vld [vmem:[#allocation2 + $0x15a] sm:$0xff]
        %v2061 = vld [vmem:[#allocation2 + $0x16a] sm:$0xff]
        %v2062 = vld [vmem:[#allocation2 + $0x172] sm:$0xff]
        %v2063 = vld [vmem:[#allocation2 + $0x182] sm:$0xff]
        %v2064 = vld [vmem:[#allocation2 + $0x18a] sm:$0xff]
        %v2065 = vld [vmem:[#allocation2 + $0x19a] sm:$0xff]
        %v2066 = vld [vmem:[#allocation2 + $0x1a2] sm:$0xff]
        %v2067 = vpack.c.bf16 %v2032, %v2031
        %v2068 = vpack.c.bf16 %v2034, %v2033
        %v2069 = vpack.c.bf16 %v2036, %v2035
        %v2070 = vpack.c.bf16 %v2038, %v2037
        %v2071 = vpack.c.bf16 %v2040, %v2039
        %v2072 = vpack.c.bf16 %v2042, %v2041
        %v2073 = vpack.c.bf16 %v2044, %v2043
        %v2074 = vpack.c.bf16 %v2046, %v2045
        %v2075 = vpack.c.bf16 %v2048, %v2047
        %v2076 = vpack.c.bf16 %v2050, %v2049
        %v2077 = vpack.c.bf16 %v2052, %v2051
        %v2078 = vpack.c.bf16 %v2054, %v2053
        %v2079 = vpack.c.bf16 %v2056, %v2055
        %v2080 = vpack.c.bf16 %v2058, %v2057
        %v2081 = vpack.c.bf16 %v2060, %v2059
        %v2082 = vpack.c.bf16 %v2062, %v2061
        %v2083 = vpack.c.bf16 %v2064, %v2063
        %v2084 = vpack.c.bf16 %v2066, %v2065
        %2085 = vst.msk [vmem:[#allocation3 + $0x8] sm:$0xff] %vm332, %v2067
        %2086 = vst.msk [vmem:[#allocation3 + $0x18] sm:$0xff] %vm332, %v2068
        %2087 = vst.msk [vmem:[#allocation3 + $0x28] sm:$0xff] %vm332, %v2069
        %2088 = vst.msk [vmem:[#allocation3 + $0x38] sm:$0xff] %vm332, %v2070
        %2089 = vst.msk [vmem:[#allocation3 + $0x48] sm:$0xff] %vm332, %v2071
        %2090 = vst.msk [vmem:[#allocation3 + $0x58] sm:$0xff] %vm332, %v2072
        %2091 = vst.msk [vmem:[#allocation3 + $0x68] sm:$0xff] %vm332, %v2073
        %2092 = vst.msk [vmem:[#allocation3 + $0x78] sm:$0xff] %vm332, %v2074
        %2093 = vst.msk [vmem:[#allocation3 + $0x88] sm:$0xff] %vm332, %v2075
        %2094 = vst.msk [vmem:[#allocation3 + $0x98] sm:$0xff] %vm332, %v2076
        %2095 = vst.msk [vmem:[#allocation3 + $0xa8] sm:$0xff] %vm332, %v2077
        %2096 = vst.msk [vmem:[#allocation3 + $0xb8] sm:$0xff] %vm332, %v2078
        %2097 = vst.msk [vmem:[#allocation3 + $0xc8] sm:$0xff] %vm332, %v2079
        %2098 = vst.msk [vmem:[#allocation3 + $0xd8] sm:$0xff] %vm332, %v2080
        %2099 = vst.msk [vmem:[#allocation3 + $0xe8] sm:$0xff] %vm332, %v2081
        %2100 = vst.msk [vmem:[#allocation3 + $0xf8] sm:$0xff] %vm332, %v2082
        %2101 = vst.msk [vmem:[#allocation3 + $0x108] sm:$0xff] %vm332, %v2083
        %2102 = vst.msk [vmem:[#allocation3 + $0x118] sm:$0xff] %vm332, %v2084
        %v2103 = vld [vmem:[#allocation3] sm:$0xff]
        %v2104 = vld [vmem:[#allocation3 + $0x8] sm:$0xff]
        %v2105 = vld [vmem:[#allocation3 + $0x10] sm:$0xff]
        %v2106 = vld [vmem:[#allocation3 + $0x18] sm:$0xff]
        %v2107 = vld [vmem:[#allocation3 + $0x20] sm:$0xff]
        %v2108 = vld [vmem:[#allocation3 + $0x28] sm:$0xff]
        %v2109 = vld [vmem:[#allocation3 + $0x30] sm:$0xff]
        %v2110 = vld [vmem:[#allocation3 + $0x38] sm:$0xff]
        %v2111 = vld [vmem:[#allocation3 + $0x40] sm:$0xff]
        %v2112 = vld [vmem:[#allocation3 + $0x48] sm:$0xff]
        %v2113 = vld [vmem:[#allocation3 + $0x50] sm:$0xff]
        %v2114 = vld [vmem:[#allocation3 + $0x58] sm:$0xff]
        %v2115 = vld [vmem:[#allocation3 + $0x60] sm:$0xff]
        %v2116 = vld [vmem:[#allocation3 + $0x68] sm:$0xff]
        %v2117 = vld [vmem:[#allocation3 + $0x70] sm:$0xff]
        %v2118 = vld [vmem:[#allocation3 + $0x78] sm:$0xff]
        %v2119 = vld [vmem:[#allocation3 + $0x80] sm:$0xff]
        %v2120 = vld [vmem:[#allocation3 + $0x88] sm:$0xff]
        %v2121 = vld [vmem:[#allocation3 + $0x90] sm:$0xff]
        %v2122 = vld [vmem:[#allocation3 + $0x98] sm:$0xff]
        %v2123 = vld [vmem:[#allocation3 + $0xa0] sm:$0xff]
        %v2124 = vld [vmem:[#allocation3 + $0xa8] sm:$0xff]
        %v2125 = vld [vmem:[#allocation3 + $0xb0] sm:$0xff]
        %v2126 = vld [vmem:[#allocation3 + $0xb8] sm:$0xff]
        %v2127 = vld [vmem:[#allocation3 + $0xc0] sm:$0xff]
        %v2128 = vld [vmem:[#allocation3 + $0xc8] sm:$0xff]
        %v2129 = vld [vmem:[#allocation3 + $0xd0] sm:$0xff]
        %v2130 = vld [vmem:[#allocation3 + $0xd8] sm:$0xff]
        %v2131 = vld [vmem:[#allocation3 + $0xe0] sm:$0xff]
        %v2132 = vld [vmem:[#allocation3 + $0xe8] sm:$0xff]
        %v2133 = vld [vmem:[#allocation3 + $0xf0] sm:$0xff]
        %v2134 = vld [vmem:[#allocation3 + $0xf8] sm:$0xff]
        %v2135 = vld [vmem:[%s3] sm:$0xf]
        %v2136 = vld [vmem:[%s3 + $0x4] sm:$0xf]
        %v2137 = vld [vmem:[%s3 + $0x8] sm:$0xf]
        %v2138 = vld [vmem:[%s3 + $0xc] sm:$0xf]
        %v2139 = vld [vmem:[%s3 + $0x10] sm:$0xf]
        %v2140 = vld [vmem:[%s3 + $0x14] sm:$0xf]
        %v2141 = vld [vmem:[%s3 + $0x18] sm:$0xf]
        %v2142 = vld [vmem:[%s3 + $0x1c] sm:$0xf]
        %v2143 = vld [vmem:[%s3 + $0x20] sm:$0xf]
        %v2144 = vld [vmem:[%s3 + $0x24] sm:$0xf]
        %v2145 = vld [vmem:[%s3 + $0x28] sm:$0xf]
        %v2146 = vld [vmem:[%s3 + $0x2c] sm:$0xf]
        %v2147 = vld [vmem:[%s3 + $0x30] sm:$0xf]
        %v2148 = vld [vmem:[%s3 + $0x34] sm:$0xf]
        %v2149 = vld [vmem:[%s3 + $0x38] sm:$0xf]
        %v2150 = vld [vmem:[%s3 + $0x3c] sm:$0xf]
        %v2151 = vld [vmem:[%s3 + $0x40] sm:$0xf]
        %v2152 = vld [vmem:[%s3 + $0x44] sm:$0xf]
        %v2153 = vld [vmem:[%s3 + $0x48] sm:$0xf]
        %v2154 = vld [vmem:[%s3 + $0x4c] sm:$0xf]
        %v2155 = vld [vmem:[%s3 + $0x50] sm:$0xf]
        %v2156 = vld [vmem:[%s3 + $0x54] sm:$0xf]
        %v2157 = vld [vmem:[%s3 + $0x58] sm:$0xf]
        %v2158 = vld [vmem:[%s3 + $0x5c] sm:$0xf]
        %v2159 = vld [vmem:[#allocation3 + $0x100] sm:$0xff]
        %v2160 = vld [vmem:[#allocation3 + $0x108] sm:$0xff]
        %s2161 = scalar_lea.vmem %s3, 96
        %v2162 = vld [vmem:[%s2161] sm:$0xf]
        %v2163 = vld [vmem:[%s2161 + $0x4] sm:$0xf]
        %v2164 = vld [vmem:[%s2161 + $0x8] sm:$0xf]
        %v2165 = vld [vmem:[%s2161 + $0xc] sm:$0xf]
        %v2166 = vld [vmem:[%s2161 + $0x10] sm:$0xf]
        %v2167 = vld [vmem:[%s2161 + $0x14] sm:$0xf]
        %v2168 = vld [vmem:[%s2161 + $0x18] sm:$0xf]
        %v2169 = vld [vmem:[%s2161 + $0x1c] sm:$0xf]
        %v2170 = vld [vmem:[%s2161 + $0x20] sm:$0xf]
        %v2171 = vld [vmem:[%s2161 + $0x24] sm:$0xf]
        %v2172 = vld [vmem:[%s2161 + $0x28] sm:$0xf]
        %v2173 = vld [vmem:[%s2161 + $0x2c] sm:$0xf]
        %v2174 = vld [vmem:[%s2161 + $0x30] sm:$0xf]
        %v2175 = vld [vmem:[%s2161 + $0x34] sm:$0xf]
        %v2176 = vld [vmem:[%s2161 + $0x38] sm:$0xf]
        %v2177 = vld [vmem:[%s2161 + $0x3c] sm:$0xf]
        %v2178 = vld [vmem:[%s2161 + $0x40] sm:$0xf]
        %v2179 = vld [vmem:[%s2161 + $0x44] sm:$0xf]
        %v2180 = vld [vmem:[%s2161 + $0x48] sm:$0xf]
        %v2181 = vld [vmem:[%s2161 + $0x4c] sm:$0xf]
        %v2182 = vld [vmem:[%s2161 + $0x50] sm:$0xf]
        %v2183 = vld [vmem:[%s2161 + $0x54] sm:$0xf]
        %v2184 = vld [vmem:[%s2161 + $0x58] sm:$0xf]
        %v2185 = vld [vmem:[%s2161 + $0x5c] sm:$0xf]
        %v2210 = vunpack.c.l.b16 %v2162
        %v2211 = vunpack.c.l.b16 %v2163
        %v2212 = vunpack.c.l.b16 %v2164
        %v2213 = vunpack.c.l.b16 %v2165
        %v2214 = vunpack.c.l.b16 %v2166
        %v2215 = vunpack.c.l.b16 %v2167
        %v2216 = vunpack.c.l.b16 %v2168
        %v2217 = vunpack.c.l.b16 %v2169
        %v2218 = vunpack.c.l.b16 %v2170
        %v2219 = vunpack.c.l.b16 %v2171
        %v2220 = vunpack.c.l.b16 %v2172
        %v2221 = vunpack.c.l.b16 %v2173
        %v2222 = vunpack.c.l.b16 %v2174
        %v2223 = vunpack.c.l.b16 %v2175
        %v2224 = vunpack.c.l.b16 %v2176
        %v2225 = vunpack.c.l.b16 %v2177
        %v2226 = vunpack.c.l.b16 %v2178
        %v2227 = vunpack.c.l.b16 %v2179
        %v2228 = vunpack.c.l.b16 %v2180
        %v2229 = vunpack.c.l.b16 %v2181
        %v2230 = vunpack.c.l.b16 %v2182
        %v2231 = vunpack.c.l.b16 %v2183
        %v2232 = vunpack.c.l.b16 %v2184
        %v2233 = vunpack.c.l.b16 %v2185
        %v2234 = vpack.c.b16 %v2211, %v2210
        %v2235 = vpack.c.b16 %v2213, %v2212
        %v2236 = vpack.c.b16 %v2215, %v2214
        %v2237 = vpack.c.b16 %v2217, %v2216
        %v2238 = vpack.c.b16 %v2219, %v2218
        %v2239 = vpack.c.b16 %v2221, %v2220
        %v2240 = vpack.c.b16 %v2223, %v2222
        %v2241 = vpack.c.b16 %v2225, %v2224
        %v2242 = vpack.c.b16 %v2227, %v2226
        %v2243 = vpack.c.b16 %v2229, %v2228
        %v2244 = vpack.c.b16 %v2231, %v2230
        %v2245 = vpack.c.b16 %v2233, %v2232
        %v2259 = vsel %vm332, %v2106, 0
        %v2262 = vsel %vm332, %v2108, 0
        %v2265 = vsel %vm332, %v2110, 0
        %v2268 = vsel %vm332, %v2112, 0
        %v2271 = vsel %vm332, %v2114, 0
        %v2274 = vsel %vm332, %v2116, 0
        %v2277 = vsel %vm332, %v2118, 0
        %v2280 = vsel %vm332, %v2120, 0
        %v2283 = vsel %vm332, %v2122, 0
        %v2286 = vsel %vm332, %v2124, 0
        %v2289 = vsel %vm332, %v2126, 0
        %v2292 = vsel %vm332, %v2128, 0
        %v2295 = vsel %vm332, %v2130, 0
        %v2298 = vsel %vm332, %v2132, 0
        %v2301 = vsel %vm332, %v2134, 0
        %v2304 = vsel %vm332, %v2160, 0
        %2306 = vmatprep.subr.bf16.mxu0 0
        %2307 = vmatpush1.bf16.msra.mxu0 %v2234
        %2308 = vmatprep.subr.bf16.mxu0 0
        %2309 = vmatpush1.bf16.msra.mxu0 %v2235
        %2310 = vmatprep.subr.bf16.mxu0 0
        %2311 = vmatpush1.bf16.msra.mxu0 %v2236
        %2312 = vmatprep.subr.bf16.mxu0 0
        %2313 = vmatpush1.bf16.msra.mxu0 %v2237
        %2314 = vmatprep.subr.bf16.mxu0 0
        %2315 = vmatpush1.bf16.msra.mxu0 %v2238
        %2316 = vmatprep.subr.bf16.mxu0 0
        %2317 = vmatpush1.bf16.msra.mxu0 %v2239
        %2318 = vmatprep.subr.bf16.mxu0 0
        %2319 = vmatpush1.bf16.msra.mxu0 %v2240
        %2320 = vmatprep.subr.bf16.mxu0 0
        %2321 = vmatpush1.bf16.msra.mxu0 %v2241
        %2322 = vmatprep.subr.bf16.mxu0 0
        %2323 = vmatpush1.bf16.msra.mxu0 %v2242
        %2324 = vmatprep.subr.bf16.mxu0 0
        %2325 = vmatpush1.bf16.msra.mxu0 %v2243
        %2326 = vmatprep.subr.bf16.mxu0 0
        %2327 = vmatpush1.bf16.msra.mxu0 %v2244
        %2328 = vmatprep.subr.bf16.mxu0 0
        %2329 = vmatpush1.bf16.msra.mxu0 %v2245
        %2330 = vmatprep.subr.bf16.mxu0 0
        %2331 = vmatpush1.bf16.msra.mxu0 0
        %2332 = vmatprep.subr.bf16.mxu0 0
        %2333 = vmatpush1.bf16.msra.mxu0 0
        %2334 = vmatprep.subr.bf16.mxu0 0
        %2335 = vmatpush1.bf16.msra.mxu0 0
        %2336 = vmatprep.subr.bf16.mxu0 0
        %2337 = vmatpush1.bf16.msra.mxu0 0
        %2338 = vmatprep.mubr.bf16.mxu0 %v2259
        %2339 = vmatmul.mubr.bf16.gmra.mrb[0].mxu0 %v2105
        %v2340 = vpop.f32.mrb[0].mxu0
        %v2341 = vadd.f32 0.0, %v2340
        %v2342 = vpop.f32.mrb[0].mxu0
        %v2343 = vpop.f32.mrb[0].mxu0
        %v2344 = vadd.f32 0.0, %v2343
        %v2345 = vpop.f32.mrb[0].mxu0
        %2346 = vmatprep.mubr.bf16.mxu0 %v2262
        %2347 = vmatmul.mubr.bf16.gmra.mrb[0].mxu0 %v2107
        %v2348 = vpop.f32.mrb[0].mxu0
        %v2349 = vadd.f32 0.0, %v2348
        %v2350 = vpop.f32.mrb[0].mxu0
        %v2351 = vpop.f32.mrb[0].mxu0
        %v2352 = vadd.f32 0.0, %v2351
        %v2353 = vpop.f32.mrb[0].mxu0
        %2354 = vmatprep.mubr.bf16.mxu0 %v2265
        %2355 = vmatmul.mubr.bf16.gmra.mrb[0].mxu0 %v2109
        %v2356 = vpop.f32.mrb[0].mxu0
        %v2357 = vadd.f32 0.0, %v2356
        %v2358 = vpop.f32.mrb[0].mxu0
        %v2359 = vpop.f32.mrb[0].mxu0
        %v2360 = vadd.f32 0.0, %v2359
        %v2361 = vpop.f32.mrb[0].mxu0
        %2362 = vmatprep.mubr.bf16.mxu0 %v2268
        %2363 = vmatmul.mubr.bf16.gmra.mrb[0].mxu0 %v2111
        %v2364 = vpop.f32.mrb[0].mxu0
        %v2365 = vadd.f32 0.0, %v2364
        %v2366 = vpop.f32.mrb[0].mxu0
        %v2367 = vpop.f32.mrb[0].mxu0
        %v2368 = vadd.f32 0.0, %v2367
        %v2369 = vpop.f32.mrb[0].mxu0
        %2370 = vmatprep.mubr.bf16.mxu0 %v2271
        %2371 = vmatmul.mubr.bf16.gmra.mrb[0].mxu0 %v2113
        %v2372 = vpop.f32.mrb[0].mxu0
        %v2373 = vadd.f32 0.0, %v2372
        %v2374 = vpop.f32.mrb[0].mxu0
        %v2375 = vpop.f32.mrb[0].mxu0
        %v2376 = vadd.f32 0.0, %v2375
        %v2377 = vpop.f32.mrb[0].mxu0
        %2378 = vmatprep.mubr.bf16.mxu0 %v2274
        %2379 = vmatmul.mubr.bf16.gmra.mrb[0].mxu0 %v2115
        %v2380 = vpop.f32.mrb[0].mxu0
        %v2381 = vadd.f32 0.0, %v2380
        %v2382 = vpop.f32.mrb[0].mxu0
        %v2383 = vpop.f32.mrb[0].mxu0
        %v2384 = vadd.f32 0.0, %v2383
        %v2385 = vpop.f32.mrb[0].mxu0
        %2386 = vmatprep.mubr.bf16.mxu0 %v2277
        %2387 = vmatmul.mubr.bf16.gmra.mrb[0].mxu0 %v2117
        %v2388 = vpop.f32.mrb[0].mxu0
        %v2389 = vadd.f32 0.0, %v2388
        %v2390 = vpop.f32.mrb[0].mxu0
        %v2391 = vpop.f32.mrb[0].mxu0
        %v2392 = vadd.f32 0.0, %v2391
        %v2393 = vpop.f32.mrb[0].mxu0
        %2394 = vmatprep.mubr.bf16.mxu0 %v2280
        %2395 = vmatmul.mubr.bf16.gmra.mrb[0].mxu0 %v2119
        %v2396 = vpop.f32.mrb[0].mxu0
        %v2397 = vadd.f32 0.0, %v2396
        %v2398 = vpop.f32.mrb[0].mxu0
        %v2399 = vpop.f32.mrb[0].mxu0
        %v2400 = vadd.f32 0.0, %v2399
        %v2401 = vpop.f32.mrb[0].mxu0
        %2402 = vmatprep.mubr.bf16.mxu0 %v2283
        %2403 = vmatmul.mubr.bf16.gmra.mrb[0].mxu0 %v2121
        %v2404 = vpop.f32.mrb[0].mxu0
        %v2405 = vadd.f32 0.0, %v2404
        %v2406 = vpop.f32.mrb[0].mxu0
        %v2407 = vpop.f32.mrb[0].mxu0
        %v2408 = vadd.f32 0.0, %v2407
        %v2409 = vpop.f32.mrb[0].mxu0
        %2410 = vmatprep.mubr.bf16.mxu0 %v2286
        %2411 = vmatmul.mubr.bf16.gmra.mrb[0].mxu0 %v2123
        %v2412 = vpop.f32.mrb[0].mxu0
        %v2413 = vadd.f32 0.0, %v2412
        %v2414 = vpop.f32.mrb[0].mxu0
        %v2415 = vpop.f32.mrb[0].mxu0
        %v2416 = vadd.f32 0.0, %v2415
        %v2417 = vpop.f32.mrb[0].mxu0
        %2418 = vmatprep.mubr.bf16.mxu0 %v2289
        %2419 = vmatmul.mubr.bf16.gmra.mrb[0].mxu0 %v2125
        %v2420 = vpop.f32.mrb[0].mxu0
        %v2421 = vadd.f32 0.0, %v2420
        %v2422 = vpop.f32.mrb[0].mxu0
        %v2423 = vpop.f32.mrb[0].mxu0
        %v2424 = vadd.f32 0.0, %v2423
        %v2425 = vpop.f32.mrb[0].mxu0
        %2426 = vmatprep.mubr.bf16.mxu0 %v2292
        %2427 = vmatmul.mubr.bf16.gmra.mrb[0].mxu0 %v2127
        %v2428 = vpop.f32.mrb[0].mxu0
        %v2429 = vadd.f32 0.0, %v2428
        %v2430 = vpop.f32.mrb[0].mxu0
        %v2431 = vpop.f32.mrb[0].mxu0
        %v2432 = vadd.f32 0.0, %v2431
        %v2433 = vpop.f32.mrb[0].mxu0
        %2434 = vmatprep.mubr.bf16.mxu0 %v2295
        %2435 = vmatmul.mubr.bf16.gmra.mrb[0].mxu0 %v2129
        %v2436 = vpop.f32.mrb[0].mxu0
        %v2437 = vadd.f32 0.0, %v2436
        %v2438 = vpop.f32.mrb[0].mxu0
        %v2439 = vpop.f32.mrb[0].mxu0
        %v2440 = vadd.f32 0.0, %v2439
        %v2441 = vpop.f32.mrb[0].mxu0
        %2442 = vmatprep.mubr.bf16.mxu0 %v2298
        %2443 = vmatmul.mubr.bf16.gmra.mrb[0].mxu0 %v2131
        %v2444 = vpop.f32.mrb[0].mxu0
        %v2445 = vadd.f32 0.0, %v2444
        %v2446 = vpop.f32.mrb[0].mxu0
        %v2447 = vpop.f32.mrb[0].mxu0
        %v2448 = vadd.f32 0.0, %v2447
        %v2449 = vpop.f32.mrb[0].mxu0
        %2450 = vmatprep.mubr.bf16.mxu0 %v2301
        %2451 = vmatmul.mubr.bf16.gmra.mrb[0].mxu0 %v2133
        %v2452 = vpop.f32.mrb[0].mxu0
        %v2453 = vadd.f32 0.0, %v2452
        %v2454 = vpop.f32.mrb[0].mxu0
        %v2455 = vpop.f32.mrb[0].mxu0
        %v2456 = vadd.f32 0.0, %v2455
        %v2457 = vpop.f32.mrb[0].mxu0
        %2458 = vmatprep.mubr.bf16.mxu0 %v2304
        %2459 = vmatmul.mubr.bf16.gmra.mrb[0].mxu0 %v2159
        %v2460 = vpop.f32.mrb[0].mxu0
        %v2461 = vadd.f32 0.0, %v2460
        %v2462 = vpop.f32.mrb[0].mxu0
        %v2463 = vpop.f32.mrb[0].mxu0
        %v2464 = vadd.f32 0.0, %v2463
        %v2465 = vpop.f32.mrb[0].mxu0
        %2466 = vdwg.mxu0
        %v2491 = vunpack.c.l.b16 %v2135
        %v2492 = vunpack.c.l.b16 %v2136
        %v2493 = vunpack.c.l.b16 %v2137
        %v2494 = vunpack.c.l.b16 %v2138
        %v2495 = vunpack.c.l.b16 %v2139
        %v2496 = vunpack.c.l.b16 %v2140
        %v2497 = vunpack.c.l.b16 %v2141
        %v2498 = vunpack.c.l.b16 %v2142
        %v2499 = vunpack.c.l.b16 %v2143
        %v2500 = vunpack.c.l.b16 %v2144
        %v2501 = vunpack.c.l.b16 %v2145
        %v2502 = vunpack.c.l.b16 %v2146
        %v2503 = vunpack.c.l.b16 %v2147
        %v2504 = vunpack.c.l.b16 %v2148
        %v2505 = vunpack.c.l.b16 %v2149
        %v2506 = vunpack.c.l.b16 %v2150
        %v2507 = vunpack.c.l.b16 %v2151
        %v2508 = vunpack.c.l.b16 %v2152
        %v2509 = vunpack.c.l.b16 %v2153
        %v2510 = vunpack.c.l.b16 %v2154
        %v2511 = vunpack.c.l.b16 %v2155
        %v2512 = vunpack.c.l.b16 %v2156
        %v2513 = vunpack.c.l.b16 %v2157
        %v2514 = vunpack.c.l.b16 %v2158
        %v2515 = vpack.c.b16 %v2492, %v2491
        %v2516 = vpack.c.b16 %v2494, %v2493
        %v2517 = vpack.c.b16 %v2496, %v2495
        %v2518 = vpack.c.b16 %v2498, %v2497
        %v2519 = vpack.c.b16 %v2500, %v2499
        %v2520 = vpack.c.b16 %v2502, %v2501
        %v2521 = vpack.c.b16 %v2504, %v2503
        %v2522 = vpack.c.b16 %v2506, %v2505
        %v2523 = vpack.c.b16 %v2508, %v2507
        %v2524 = vpack.c.b16 %v2510, %v2509
        %v2525 = vpack.c.b16 %v2512, %v2511
        %v2526 = vpack.c.b16 %v2514, %v2513
        %v2540 = vsel %vm332, %v2104, 0
        %2542 = vmatprep.subr.bf16.mxu0 0
        %2543 = vmatpush1.bf16.msra.mxu0 %v2515
        %2544 = vmatprep.subr.bf16.mxu0 0
        %2545 = vmatpush1.bf16.msra.mxu0 %v2516
        %2546 = vmatprep.subr.bf16.mxu0 0
        %2547 = vmatpush1.bf16.msra.mxu0 %v2517
        %2548 = vmatprep.subr.bf16.mxu0 0
        %2549 = vmatpush1.bf16.msra.mxu0 %v2518
        %2550 = vmatprep.subr.bf16.mxu0 0
        %2551 = vmatpush1.bf16.msra.mxu0 %v2519
        %2552 = vmatprep.subr.bf16.mxu0 0
        %2553 = vmatpush1.bf16.msra.mxu0 %v2520
        %2554 = vmatprep.subr.bf16.mxu0 0
        %2555 = vmatpush1.bf16.msra.mxu0 %v2521
        %2556 = vmatprep.subr.bf16.mxu0 0
        %2557 = vmatpush1.bf16.msra.mxu0 %v2522
        %2558 = vmatprep.subr.bf16.mxu0 0
        %2559 = vmatpush1.bf16.msra.mxu0 %v2523
        %2560 = vmatprep.subr.bf16.mxu0 0
        %2561 = vmatpush1.bf16.msra.mxu0 %v2524
        %2562 = vmatprep.subr.bf16.mxu0 0
        %2563 = vmatpush1.bf16.msra.mxu0 %v2525
        %2564 = vmatprep.subr.bf16.mxu0 0
        %2565 = vmatpush1.bf16.msra.mxu0 %v2526
        %2566 = vmatprep.subr.bf16.mxu0 0
        %2567 = vmatpush1.bf16.msra.mxu0 0
        %2568 = vmatprep.subr.bf16.mxu0 0
        %2569 = vmatpush1.bf16.msra.mxu0 0
        %2570 = vmatprep.subr.bf16.mxu0 0
        %2571 = vmatpush1.bf16.msra.mxu0 0
        %2572 = vmatprep.subr.bf16.mxu0 0
        %2573 = vmatpush1.bf16.msra.mxu0 0
        %2574 = vmatprep.mubr.bf16.mxu0 %v2540
        %2575 = vmatmul.mubr.bf16.gmra.mrb[0].mxu0 %v2103
        %v2576 = vpop.f32.mrb[0].mxu0
        %v2577 = vadd.f32 %v2341, %v2576
        %v2578 = vpop.f32.mrb[0].mxu0
        %v2579 = vpop.f32.mrb[0].mxu0
        %v2580 = vadd.f32 %v2344, %v2579
        %v2581 = vpop.f32.mrb[0].mxu0
        %2582 = vmatprep.mubr.bf16.mxu0 %v2259
        %2583 = vmatmul.mubr.bf16.gmra.mrb[0].mxu0 %v2105
        %v2584 = vpop.f32.mrb[0].mxu0
        %v2585 = vadd.f32 %v2349, %v2584
        %v2586 = vpop.f32.mrb[0].mxu0
        %v2587 = vpop.f32.mrb[0].mxu0
        %v2588 = vadd.f32 %v2352, %v2587
        %v2589 = vpop.f32.mrb[0].mxu0
        %2590 = vmatprep.mubr.bf16.mxu0 %v2262
        %2591 = vmatmul.mubr.bf16.gmra.mrb[0].mxu0 %v2107
        %v2592 = vpop.f32.mrb[0].mxu0
        %v2593 = vadd.f32 %v2357, %v2592
        %v2594 = vpop.f32.mrb[0].mxu0
        %v2595 = vpop.f32.mrb[0].mxu0
        %v2596 = vadd.f32 %v2360, %v2595
        %v2597 = vpop.f32.mrb[0].mxu0
        %2598 = vmatprep.mubr.bf16.mxu0 %v2265
        %2599 = vmatmul.mubr.bf16.gmra.mrb[0].mxu0 %v2109
        %v2600 = vpop.f32.mrb[0].mxu0
        %v2601 = vadd.f32 %v2365, %v2600
        %v2602 = vpop.f32.mrb[0].mxu0
        %v2603 = vpop.f32.mrb[0].mxu0
        %v2604 = vadd.f32 %v2368, %v2603
        %v2605 = vpop.f32.mrb[0].mxu0
        %2606 = vmatprep.mubr.bf16.mxu0 %v2268
        %2607 = vmatmul.mubr.bf16.gmra.mrb[0].mxu0 %v2111
        %v2608 = vpop.f32.mrb[0].mxu0
        %v2609 = vadd.f32 %v2373, %v2608
        %v2610 = vpop.f32.mrb[0].mxu0
        %v2611 = vpop.f32.mrb[0].mxu0
        %v2612 = vadd.f32 %v2376, %v2611
        %v2613 = vpop.f32.mrb[0].mxu0
        %2614 = vmatprep.mubr.bf16.mxu0 %v2271
        %2615 = vmatmul.mubr.bf16.gmra.mrb[0].mxu0 %v2113
        %v2616 = vpop.f32.mrb[0].mxu0
        %v2617 = vadd.f32 %v2381, %v2616
        %v2618 = vpop.f32.mrb[0].mxu0
        %v2619 = vpop.f32.mrb[0].mxu0
        %v2620 = vadd.f32 %v2384, %v2619
        %v2621 = vpop.f32.mrb[0].mxu0
        %2622 = vmatprep.mubr.bf16.mxu0 %v2274
        %2623 = vmatmul.mubr.bf16.gmra.mrb[0].mxu0 %v2115
        %v2624 = vpop.f32.mrb[0].mxu0
        %v2625 = vadd.f32 %v2389, %v2624
        %v2626 = vpop.f32.mrb[0].mxu0
        %v2627 = vpop.f32.mrb[0].mxu0
        %v2628 = vadd.f32 %v2392, %v2627
        %v2629 = vpop.f32.mrb[0].mxu0
        %2630 = vmatprep.mubr.bf16.mxu0 %v2277
        %2631 = vmatmul.mubr.bf16.gmra.mrb[0].mxu0 %v2117
        %v2632 = vpop.f32.mrb[0].mxu0
        %v2633 = vadd.f32 %v2397, %v2632
        %v2634 = vpop.f32.mrb[0].mxu0
        %v2635 = vpop.f32.mrb[0].mxu0
        %v2636 = vadd.f32 %v2400, %v2635
        %v2637 = vpop.f32.mrb[0].mxu0
        %2638 = vmatprep.mubr.bf16.mxu0 %v2280
        %2639 = vmatmul.mubr.bf16.gmra.mrb[0].mxu0 %v2119
        %v2640 = vpop.f32.mrb[0].mxu0
        %v2641 = vadd.f32 %v2405, %v2640
        %v2642 = vpop.f32.mrb[0].mxu0
        %v2643 = vpop.f32.mrb[0].mxu0
        %v2644 = vadd.f32 %v2408, %v2643
        %v2645 = vpop.f32.mrb[0].mxu0
        %2646 = vmatprep.mubr.bf16.mxu0 %v2283
        %2647 = vmatmul.mubr.bf16.gmra.mrb[0].mxu0 %v2121
        %v2648 = vpop.f32.mrb[0].mxu0
        %v2649 = vadd.f32 %v2413, %v2648
        %v2650 = vpop.f32.mrb[0].mxu0
        %v2651 = vpop.f32.mrb[0].mxu0
        %v2652 = vadd.f32 %v2416, %v2651
        %v2653 = vpop.f32.mrb[0].mxu0
        %2654 = vmatprep.mubr.bf16.mxu0 %v2286
        %2655 = vmatmul.mubr.bf16.gmra.mrb[0].mxu0 %v2123
        %v2656 = vpop.f32.mrb[0].mxu0
        %v2657 = vadd.f32 %v2421, %v2656
        %v2658 = vpop.f32.mrb[0].mxu0
        %v2659 = vpop.f32.mrb[0].mxu0
        %v2660 = vadd.f32 %v2424, %v2659
        %v2661 = vpop.f32.mrb[0].mxu0
        %2662 = vmatprep.mubr.bf16.mxu0 %v2289
        %2663 = vmatmul.mubr.bf16.gmra.mrb[0].mxu0 %v2125
        %v2664 = vpop.f32.mrb[0].mxu0
        %v2665 = vadd.f32 %v2429, %v2664
        %v2666 = vpop.f32.mrb[0].mxu0
        %v2667 = vpop.f32.mrb[0].mxu0
        %v2668 = vadd.f32 %v2432, %v2667
        %v2669 = vpop.f32.mrb[0].mxu0
        %2670 = vmatprep.mubr.bf16.mxu0 %v2292
        %2671 = vmatmul.mubr.bf16.gmra.mrb[0].mxu0 %v2127
        %v2672 = vpop.f32.mrb[0].mxu0
        %v2673 = vadd.f32 %v2437, %v2672
        %v2674 = vpop.f32.mrb[0].mxu0
        %v2675 = vpop.f32.mrb[0].mxu0
        %v2676 = vadd.f32 %v2440, %v2675
        %v2677 = vpop.f32.mrb[0].mxu0
        %2678 = vmatprep.mubr.bf16.mxu0 %v2295
        %2679 = vmatmul.mubr.bf16.gmra.mrb[0].mxu0 %v2129
        %v2680 = vpop.f32.mrb[0].mxu0
        %v2681 = vadd.f32 %v2445, %v2680
        %v2682 = vpop.f32.mrb[0].mxu0
        %v2683 = vpop.f32.mrb[0].mxu0
        %v2684 = vadd.f32 %v2448, %v2683
        %v2685 = vpop.f32.mrb[0].mxu0
        %2686 = vmatprep.mubr.bf16.mxu0 %v2298
        %2687 = vmatmul.mubr.bf16.gmra.mrb[0].mxu0 %v2131
        %v2688 = vpop.f32.mrb[0].mxu0
        %v2689 = vadd.f32 %v2453, %v2688
        %v2690 = vpop.f32.mrb[0].mxu0
        %v2691 = vpop.f32.mrb[0].mxu0
        %v2692 = vadd.f32 %v2456, %v2691
        %v2693 = vpop.f32.mrb[0].mxu0
        %2694 = vmatprep.mubr.bf16.mxu0 %v2301
        %2695 = vmatmul.mubr.bf16.gmra.mrb[0].mxu0 %v2133
        %v2696 = vpop.f32.mrb[0].mxu0
        %v2697 = vadd.f32 %v2461, %v2696
        %v2698 = vpop.f32.mrb[0].mxu0
        %v2699 = vpop.f32.mrb[0].mxu0
        %v2700 = vadd.f32 %v2464, %v2699
        %v2701 = vpop.f32.mrb[0].mxu0
        %2702 = vdwg.mxu0
        %v2703 = vld [vmem:[#allocation3 + $0x20] sm:$0xff]
        %v2704 = vld [vmem:[#allocation3 + $0x28] sm:$0xff]
        %v2705 = vld [vmem:[#allocation3 + $0x30] sm:$0xff]
        %v2706 = vld [vmem:[#allocation3 + $0x38] sm:$0xff]
        %v2707 = vld [vmem:[#allocation3 + $0x40] sm:$0xff]
        %v2708 = vld [vmem:[#allocation3 + $0x48] sm:$0xff]
        %v2709 = vld [vmem:[#allocation3 + $0x50] sm:$0xff]
        %v2710 = vld [vmem:[#allocation3 + $0x58] sm:$0xff]
        %v2711 = vld [vmem:[#allocation3 + $0x60] sm:$0xff]
        %v2712 = vld [vmem:[#allocation3 + $0x68] sm:$0xff]
        %v2713 = vld [vmem:[#allocation3 + $0x70] sm:$0xff]
        %v2714 = vld [vmem:[#allocation3 + $0x78] sm:$0xff]
        %v2715 = vld [vmem:[#allocation3 + $0x80] sm:$0xff]
        %v2716 = vld [vmem:[#allocation3 + $0x88] sm:$0xff]
        %v2717 = vld [vmem:[#allocation3 + $0x90] sm:$0xff]
        %v2718 = vld [vmem:[#allocation3 + $0x98] sm:$0xff]
        %v2719 = vld [vmem:[#allocation3 + $0xa0] sm:$0xff]
        %v2720 = vld [vmem:[#allocation3 + $0xa8] sm:$0xff]
        %v2721 = vld [vmem:[#allocation3 + $0xb0] sm:$0xff]
        %v2722 = vld [vmem:[#allocation3 + $0xb8] sm:$0xff]
        %v2723 = vld [vmem:[#allocation3 + $0xc0] sm:$0xff]
        %v2724 = vld [vmem:[#allocation3 + $0xc8] sm:$0xff]
        %v2725 = vld [vmem:[#allocation3 + $0xd0] sm:$0xff]
        %v2726 = vld [vmem:[#allocation3 + $0xd8] sm:$0xff]
        %v2727 = vld [vmem:[#allocation3 + $0xe0] sm:$0xff]
        %v2728 = vld [vmem:[#allocation3 + $0xe8] sm:$0xff]
        %v2729 = vld [vmem:[#allocation3 + $0xf0] sm:$0xff]
        %v2730 = vld [vmem:[#allocation3 + $0xf8] sm:$0xff]
        %v2731 = vld [vmem:[#allocation3 + $0x100] sm:$0xff]
        %v2732 = vld [vmem:[#allocation3 + $0x108] sm:$0xff]
        %v2733 = vld [vmem:[#allocation3 + $0x110] sm:$0xff]
        %v2734 = vld [vmem:[#allocation3 + $0x118] sm:$0xff]
        %s2735 = scalar_lea.vmem %s3, 192
        %v2736 = vld [vmem:[%s2735] sm:$0xf]
        %v2737 = vld [vmem:[%s2735 + $0x4] sm:$0xf]
        %v2738 = vld [vmem:[%s2735 + $0x8] sm:$0xf]
        %v2739 = vld [vmem:[%s2735 + $0xc] sm:$0xf]
        %v2740 = vld [vmem:[%s2735 + $0x10] sm:$0xf]
        %v2741 = vld [vmem:[%s2735 + $0x14] sm:$0xf]
        %v2742 = vld [vmem:[%s2735 + $0x18] sm:$0xf]
        %v2743 = vld [vmem:[%s2735 + $0x1c] sm:$0xf]
        %v2744 = vld [vmem:[%s2735 + $0x20] sm:$0xf]
        %v2745 = vld [vmem:[%s2735 + $0x24] sm:$0xf]
        %v2746 = vld [vmem:[%s2735 + $0x28] sm:$0xf]
        %v2747 = vld [vmem:[%s2735 + $0x2c] sm:$0xf]
        %v2748 = vld [vmem:[%s2735 + $0x30] sm:$0xf]
        %v2749 = vld [vmem:[%s2735 + $0x34] sm:$0xf]
        %v2750 = vld [vmem:[%s2735 + $0x38] sm:$0xf]
        %v2751 = vld [vmem:[%s2735 + $0x3c] sm:$0xf]
        %v2752 = vld [vmem:[%s2735 + $0x40] sm:$0xf]
        %v2753 = vld [vmem:[%s2735 + $0x44] sm:$0xf]
        %v2754 = vld [vmem:[%s2735 + $0x48] sm:$0xf]
        %v2755 = vld [vmem:[%s2735 + $0x4c] sm:$0xf]
        %v2756 = vld [vmem:[%s2735 + $0x50] sm:$0xf]
        %v2757 = vld [vmem:[%s2735 + $0x54] sm:$0xf]
        %v2758 = vld [vmem:[%s2735 + $0x58] sm:$0xf]
        %v2759 = vld [vmem:[%s2735 + $0x5c] sm:$0xf]
        %v2784 = vunpack.c.l.b16 %v2736
        %v2785 = vunpack.c.l.b16 %v2737
        %v2786 = vunpack.c.l.b16 %v2738
        %v2787 = vunpack.c.l.b16 %v2739
        %v2788 = vunpack.c.l.b16 %v2740
        %v2789 = vunpack.c.l.b16 %v2741
        %v2790 = vunpack.c.l.b16 %v2742
        %v2791 = vunpack.c.l.b16 %v2743
        %v2792 = vunpack.c.l.b16 %v2744
        %v2793 = vunpack.c.l.b16 %v2745
        %v2794 = vunpack.c.l.b16 %v2746
        %v2795 = vunpack.c.l.b16 %v2747
        %v2796 = vunpack.c.l.b16 %v2748
        %v2797 = vunpack.c.l.b16 %v2749
        %v2798 = vunpack.c.l.b16 %v2750
        %v2799 = vunpack.c.l.b16 %v2751
        %v2800 = vunpack.c.l.b16 %v2752
        %v2801 = vunpack.c.l.b16 %v2753
        %v2802 = vunpack.c.l.b16 %v2754
        %v2803 = vunpack.c.l.b16 %v2755
        %v2804 = vunpack.c.l.b16 %v2756
        %v2805 = vunpack.c.l.b16 %v2757
        %v2806 = vunpack.c.l.b16 %v2758
        %v2807 = vunpack.c.l.b16 %v2759
        %v2808 = vpack.c.b16 %v2785, %v2784
        %v2809 = vpack.c.b16 %v2787, %v2786
        %v2810 = vpack.c.b16 %v2789, %v2788
        %v2811 = vpack.c.b16 %v2791, %v2790
        %v2812 = vpack.c.b16 %v2793, %v2792
        %v2813 = vpack.c.b16 %v2795, %v2794
        %v2814 = vpack.c.b16 %v2797, %v2796
        %v2815 = vpack.c.b16 %v2799, %v2798
        %v2816 = vpack.c.b16 %v2801, %v2800
        %v2817 = vpack.c.b16 %v2803, %v2802
        %v2818 = vpack.c.b16 %v2805, %v2804
        %v2819 = vpack.c.b16 %v2807, %v2806
        %v2833 = vsel %vm332, %v2704, 0
        %v2836 = vsel %vm332, %v2706, 0
        %v2839 = vsel %vm332, %v2708, 0
        %v2842 = vsel %vm332, %v2710, 0
        %v2845 = vsel %vm332, %v2712, 0
        %v2848 = vsel %vm332, %v2714, 0
        %v2851 = vsel %vm332, %v2716, 0
        %v2854 = vsel %vm332, %v2718, 0
        %v2857 = vsel %vm332, %v2720, 0
        %v2860 = vsel %vm332, %v2722, 0
        %v2863 = vsel %vm332, %v2724, 0
        %v2866 = vsel %vm332, %v2726, 0
        %v2869 = vsel %vm332, %v2728, 0
        %v2872 = vsel %vm332, %v2730, 0
        %v2875 = vsel %vm332, %v2732, 0
        %v2878 = vsel %vm332, %v2734, 0
        %2880 = vmatprep.subr.bf16.mxu0 0
        %2881 = vmatpush1.bf16.msra.mxu0 %v2808
        %2882 = vmatprep.subr.bf16.mxu0 0
        %2883 = vmatpush1.bf16.msra.mxu0 %v2809
        %2884 = vmatprep.subr.bf16.mxu0 0
        %2885 = vmatpush1.bf16.msra.mxu0 %v2810
        %2886 = vmatprep.subr.bf16.mxu0 0
        %2887 = vmatpush1.bf16.msra.mxu0 %v2811
        %2888 = vmatprep.subr.bf16.mxu0 0
        %2889 = vmatpush1.bf16.msra.mxu0 %v2812
        %2890 = vmatprep.subr.bf16.mxu0 0
        %2891 = vmatpush1.bf16.msra.mxu0 %v2813
        %2892 = vmatprep.subr.bf16.mxu0 0
        %2893 = vmatpush1.bf16.msra.mxu0 %v2814
        %2894 = vmatprep.subr.bf16.mxu0 0
        %2895 = vmatpush1.bf16.msra.mxu0 %v2815
        %2896 = vmatprep.subr.bf16.mxu0 0
        %2897 = vmatpush1.bf16.msra.mxu0 %v2816
        %2898 = vmatprep.subr.bf16.mxu0 0
        %2899 = vmatpush1.bf16.msra.mxu0 %v2817
        %2900 = vmatprep.subr.bf16.mxu0 0
        %2901 = vmatpush1.bf16.msra.mxu0 %v2818
        %2902 = vmatprep.subr.bf16.mxu0 0
        %2903 = vmatpush1.bf16.msra.mxu0 %v2819
        %2904 = vmatprep.subr.bf16.mxu0 0
        %2905 = vmatpush1.bf16.msra.mxu0 0
        %2906 = vmatprep.subr.bf16.mxu0 0
        %2907 = vmatpush1.bf16.msra.mxu0 0
        %2908 = vmatprep.subr.bf16.mxu0 0
        %2909 = vmatpush1.bf16.msra.mxu0 0
        %2910 = vmatprep.subr.bf16.mxu0 0
        %2911 = vmatpush1.bf16.msra.mxu0 0
        %2912 = vmatprep.mubr.bf16.mxu0 %v2833
        %2913 = vmatmul.mubr.bf16.gmra.mrb[0].mxu0 %v2703
        %v2914 = vpop.f32.mrb[0].mxu0
        %v2915 = vadd.f32 0.0, %v2914
        %v2916 = vpop.f32.mrb[0].mxu0
        %v2917 = vpop.f32.mrb[0].mxu0
        %v2918 = vadd.f32 0.0, %v2917
        %v2919 = vpop.f32.mrb[0].mxu0
        %2920 = vmatprep.mubr.bf16.mxu0 %v2836
        %2921 = vmatmul.mubr.bf16.gmra.mrb[0].mxu0 %v2705
        %v2922 = vpop.f32.mrb[0].mxu0
        %v2923 = vadd.f32 0.0, %v2922
        %v2924 = vpop.f32.mrb[0].mxu0
        %v2925 = vpop.f32.mrb[0].mxu0
        %v2926 = vadd.f32 0.0, %v2925
        %v2927 = vpop.f32.mrb[0].mxu0
        %2928 = vmatprep.mubr.bf16.mxu0 %v2839
        %2929 = vmatmul.mubr.bf16.gmra.mrb[0].mxu0 %v2707
        %v2930 = vpop.f32.mrb[0].mxu0
        %v2931 = vadd.f32 0.0, %v2930
        %v2932 = vpop.f32.mrb[0].mxu0
        %v2933 = vpop.f32.mrb[0].mxu0
        %v2934 = vadd.f32 0.0, %v2933
        %v2935 = vpop.f32.mrb[0].mxu0
        %2936 = vmatprep.mubr.bf16.mxu0 %v2842
        %2937 = vmatmul.mubr.bf16.gmra.mrb[0].mxu0 %v2709
        %v2938 = vpop.f32.mrb[0].mxu0
        %v2939 = vadd.f32 0.0, %v2938
        %v2940 = vpop.f32.mrb[0].mxu0
        %v2941 = vpop.f32.mrb[0].mxu0
        %v2942 = vadd.f32 0.0, %v2941
        %v2943 = vpop.f32.mrb[0].mxu0
        %2944 = vmatprep.mubr.bf16.mxu0 %v2845
        %2945 = vmatmul.mubr.bf16.gmra.mrb[0].mxu0 %v2711
        %v2946 = vpop.f32.mrb[0].mxu0
        %v2947 = vadd.f32 0.0, %v2946
        %v2948 = vpop.f32.mrb[0].mxu0
        %v2949 = vpop.f32.mrb[0].mxu0
        %v2950 = vadd.f32 0.0, %v2949
        %v2951 = vpop.f32.mrb[0].mxu0
        %2952 = vmatprep.mubr.bf16.mxu0 %v2848
        %2953 = vmatmul.mubr.bf16.gmra.mrb[0].mxu0 %v2713
        %v2954 = vpop.f32.mrb[0].mxu0
        %v2955 = vadd.f32 0.0, %v2954
        %v2956 = vpop.f32.mrb[0].mxu0
        %v2957 = vpop.f32.mrb[0].mxu0
        %v2958 = vadd.f32 0.0, %v2957
        %v2959 = vpop.f32.mrb[0].mxu0
        %2960 = vmatprep.mubr.bf16.mxu0 %v2851
        %2961 = vmatmul.mubr.bf16.gmra.mrb[0].mxu0 %v2715
        %v2962 = vpop.f32.mrb[0].mxu0
        %v2963 = vadd.f32 0.0, %v2962
        %v2964 = vpop.f32.mrb[0].mxu0
        %v2965 = vpop.f32.mrb[0].mxu0
        %v2966 = vadd.f32 0.0, %v2965
        %v2967 = vpop.f32.mrb[0].mxu0
        %2968 = vmatprep.mubr.bf16.mxu0 %v2854
        %2969 = vmatmul.mubr.bf16.gmra.mrb[0].mxu0 %v2717
        %v2970 = vpop.f32.mrb[0].mxu0
        %v2971 = vadd.f32 0.0, %v2970
        %v2972 = vpop.f32.mrb[0].mxu0
        %v2973 = vpop.f32.mrb[0].mxu0
        %v2974 = vadd.f32 0.0, %v2973
        %v2975 = vpop.f32.mrb[0].mxu0
        %2976 = vmatprep.mubr.bf16.mxu0 %v2857
        %2977 = vmatmul.mubr.bf16.gmra.mrb[0].mxu0 %v2719
        %v2978 = vpop.f32.mrb[0].mxu0
        %v2979 = vadd.f32 0.0, %v2978
        %v2980 = vpop.f32.mrb[0].mxu0
        %v2981 = vpop.f32.mrb[0].mxu0
        %v2982 = vadd.f32 0.0, %v2981
        %v2983 = vpop.f32.mrb[0].mxu0
        %2984 = vmatprep.mubr.bf16.mxu0 %v2860
        %2985 = vmatmul.mubr.bf16.gmra.mrb[0].mxu0 %v2721
        %v2986 = vpop.f32.mrb[0].mxu0
        %v2987 = vadd.f32 0.0, %v2986
        %v2988 = vpop.f32.mrb[0].mxu0
        %v2989 = vpop.f32.mrb[0].mxu0
        %v2990 = vadd.f32 0.0, %v2989
        %v2991 = vpop.f32.mrb[0].mxu0
        %2992 = vmatprep.mubr.bf16.mxu0 %v2863
        %2993 = vmatmul.mubr.bf16.gmra.mrb[0].mxu0 %v2723
        %v2994 = vpop.f32.mrb[0].mxu0
        %v2995 = vadd.f32 0.0, %v2994
        %v2996 = vpop.f32.mrb[0].mxu0
        %v2997 = vpop.f32.mrb[0].mxu0
        %v2998 = vadd.f32 0.0, %v2997
        %v2999 = vpop.f32.mrb[0].mxu0
        %3000 = vmatprep.mubr.bf16.mxu0 %v2866
        %3001 = vmatmul.mubr.bf16.gmra.mrb[0].mxu0 %v2725
        %v3002 = vpop.f32.mrb[0].mxu0
        %v3003 = vadd.f32 0.0, %v3002
        %v3004 = vpop.f32.mrb[0].mxu0
        %v3005 = vpop.f32.mrb[0].mxu0
        %v3006 = vadd.f32 0.0, %v3005
        %v3007 = vpop.f32.mrb[0].mxu0
        %3008 = vmatprep.mubr.bf16.mxu0 %v2869
        %3009 = vmatmul.mubr.bf16.gmra.mrb[0].mxu0 %v2727
        %v3010 = vpop.f32.mrb[0].mxu0
        %v3011 = vadd.f32 0.0, %v3010
        %v3012 = vpop.f32.mrb[0].mxu0
        %v3013 = vpop.f32.mrb[0].mxu0
        %v3014 = vadd.f32 0.0, %v3013
        %v3015 = vpop.f32.mrb[0].mxu0
        %3016 = vmatprep.mubr.bf16.mxu0 %v2872
        %3017 = vmatmul.mubr.bf16.gmra.mrb[0].mxu0 %v2729
        %v3018 = vpop.f32.mrb[0].mxu0
        %v3019 = vadd.f32 0.0, %v3018
        %v3020 = vpop.f32.mrb[0].mxu0
        %v3021 = vpop.f32.mrb[0].mxu0
        %v3022 = vadd.f32 0.0, %v3021
        %v3023 = vpop.f32.mrb[0].mxu0
        %3024 = vmatprep.mubr.bf16.mxu0 %v2875
        %3025 = vmatmul.mubr.bf16.gmra.mrb[0].mxu0 %v2731
        %v3026 = vpop.f32.mrb[0].mxu0
        %v3027 = vadd.f32 0.0, %v3026
        %v3028 = vpop.f32.mrb[0].mxu0
        %v3029 = vpop.f32.mrb[0].mxu0
        %v3030 = vadd.f32 0.0, %v3029
        %v3031 = vpop.f32.mrb[0].mxu0
        %3032 = vmatprep.mubr.bf16.mxu0 %v2878
        %3033 = vmatmul.mubr.bf16.gmra.mrb[0].mxu0 %v2733
        %v3034 = vpop.f32.mrb[0].mxu0
        %v3035 = vadd.f32 0.0, %v3034
        %v3036 = vpop.f32.mrb[0].mxu0
        %v3037 = vpop.f32.mrb[0].mxu0
        %v3038 = vadd.f32 0.0, %v3037
        %v3039 = vpop.f32.mrb[0].mxu0
        %3040 = vdwg.mxu0
        %v3041 = vadd.f32 %v2577, %v2915
        %v3042 = vadd.f32 %v2580, %v2918
        %v3043 = vadd.f32 %v2585, %v2923
        %v3044 = vadd.f32 %v2588, %v2926
        %v3045 = vadd.f32 %v2593, %v2931
        %v3046 = vadd.f32 %v2596, %v2934
        %v3047 = vadd.f32 %v2601, %v2939
        %v3048 = vadd.f32 %v2604, %v2942
        %v3049 = vadd.f32 %v2609, %v2947
        %v3050 = vadd.f32 %v2612, %v2950
        %v3051 = vadd.f32 %v2617, %v2955
        %v3052 = vadd.f32 %v2620, %v2958
        %v3053 = vadd.f32 %v2625, %v2963
        %v3054 = vadd.f32 %v2628, %v2966
        %v3055 = vadd.f32 %v2633, %v2971
        %v3056 = vadd.f32 %v2636, %v2974
        %v3057 = vadd.f32 %v2641, %v2979
        %v3058 = vadd.f32 %v2644, %v2982
        %v3059 = vadd.f32 %v2649, %v2987
        %v3060 = vadd.f32 %v2652, %v2990
        %v3061 = vadd.f32 %v2657, %v2995
        %v3062 = vadd.f32 %v2660, %v2998
        %v3063 = vadd.f32 %v2665, %v3003
        %v3064 = vadd.f32 %v2668, %v3006
        %v3065 = vadd.f32 %v2673, %v3011
        %v3066 = vadd.f32 %v2676, %v3014
        %v3067 = vadd.f32 %v2681, %v3019
        %v3068 = vadd.f32 %v2684, %v3022
        %v3069 = vadd.f32 %v2689, %v3027
        %v3070 = vadd.f32 %v2692, %v3030
        %v3071 = vadd.f32 %v2697, %v3035
        %v3072 = vadd.f32 %v2700, %v3038
        %v3073 = vld [vmem:[%s4] sm:$0x1]
        %v3075 = vlaneseq
        %v3076 = vshrl.u32 %v3075, 7
        %v3077 = vsub.s32 0, %v3076
        %v3078 = vrot.slane %v3073, %v3077
        %v3080 = vadd.f32 %v3041, %v3078
        %v3081 = vadd.f32 %v3042, %v3078
        %v3082 = vadd.f32 %v3043, %v3078
        %v3083 = vadd.f32 %v3044, %v3078
        %v3084 = vadd.f32 %v3045, %v3078
        %v3085 = vadd.f32 %v3046, %v3078
        %v3086 = vadd.f32 %v3047, %v3078
        %v3087 = vadd.f32 %v3048, %v3078
        %v3088 = vadd.f32 %v3049, %v3078
        %v3089 = vadd.f32 %v3050, %v3078
        %v3090 = vadd.f32 %v3051, %v3078
        %v3091 = vadd.f32 %v3052, %v3078
        %v3092 = vadd.f32 %v3053, %v3078
        %v3093 = vadd.f32 %v3054, %v3078
        %v3094 = vadd.f32 %v3055, %v3078
        %v3095 = vadd.f32 %v3056, %v3078
        %v3096 = vadd.f32 %v3057, %v3078
        %v3097 = vadd.f32 %v3058, %v3078
        %v3098 = vadd.f32 %v3059, %v3078
        %v3099 = vadd.f32 %v3060, %v3078
        %v3100 = vadd.f32 %v3061, %v3078
        %v3101 = vadd.f32 %v3062, %v3078
        %v3102 = vadd.f32 %v3063, %v3078
        %v3103 = vadd.f32 %v3064, %v3078
        %v3104 = vadd.f32 %v3065, %v3078
        %v3105 = vadd.f32 %v3066, %v3078
        %v3106 = vadd.f32 %v3067, %v3078
        %v3107 = vadd.f32 %v3068, %v3078
        %v3108 = vadd.f32 %v3069, %v3078
        %v3109 = vadd.f32 %v3070, %v3078
        %v3110 = vadd.f32 %v3071, %v3078
        %v3111 = vadd.f32 %v3072, %v3078
        %v3112 = vsel %vm332, %v3080, 0.0
        %v3113 = vsel %vm332, %v3081, 0.0
        %v3114 = vadd.f32 %v3112, %v3113
        %v3115 = vsel %vm332, %v3082, 0.0
        %v3116 = vadd.f32 %v3114, %v3115
        %v3117 = vsel %vm332, %v3083, 0.0
        %v3118 = vadd.f32 %v3116, %v3117
        %v3119 = vsel %vm332, %v3084, 0.0
        %v3120 = vadd.f32 %v3118, %v3119
        %v3121 = vsel %vm332, %v3085, 0.0
        %v3122 = vadd.f32 %v3120, %v3121
        %v3123 = vsel %vm332, %v3086, 0.0
        %v3124 = vadd.f32 %v3122, %v3123
        %v3125 = vsel %vm332, %v3087, 0.0
        %v3126 = vadd.f32 %v3124, %v3125
        %v3127 = vsel %vm332, %v3088, 0.0
        %v3128 = vadd.f32 %v3126, %v3127
        %v3129 = vsel %vm332, %v3089, 0.0
        %v3130 = vadd.f32 %v3128, %v3129
        %v3131 = vsel %vm332, %v3090, 0.0
        %v3132 = vadd.f32 %v3130, %v3131
        %v3133 = vsel %vm332, %v3091, 0.0
        %v3134 = vadd.f32 %v3132, %v3133
        %v3135 = vsel %vm332, %v3092, 0.0
        %v3136 = vadd.f32 %v3134, %v3135
        %v3137 = vsel %vm332, %v3093, 0.0
        %v3138 = vadd.f32 %v3136, %v3137
        %v3139 = vsel %vm332, %v3094, 0.0
        %v3140 = vadd.f32 %v3138, %v3139
        %v3141 = vsel %vm332, %v3095, 0.0
        %v3142 = vadd.f32 %v3140, %v3141
        %v3143 = vsel %vm332, %v3096, 0.0
        %v3144 = vadd.f32 %v3142, %v3143
        %v3145 = vsel %vm332, %v3097, 0.0
        %v3146 = vadd.f32 %v3144, %v3145
        %v3147 = vsel %vm332, %v3098, 0.0
        %v3148 = vadd.f32 %v3146, %v3147
        %v3149 = vsel %vm332, %v3099, 0.0
        %v3150 = vadd.f32 %v3148, %v3149
        %v3151 = vsel %vm332, %v3100, 0.0
        %v3152 = vadd.f32 %v3150, %v3151
        %v3153 = vsel %vm332, %v3101, 0.0
        %v3154 = vadd.f32 %v3152, %v3153
        %v3155 = vsel %vm332, %v3102, 0.0
        %v3156 = vadd.f32 %v3154, %v3155
        %v3157 = vsel %vm332, %v3103, 0.0
        %v3158 = vadd.f32 %v3156, %v3157
        %v3159 = vsel %vm332, %v3104, 0.0
        %v3160 = vadd.f32 %v3158, %v3159
        %v3161 = vsel %vm332, %v3105, 0.0
        %v3162 = vadd.f32 %v3160, %v3161
        %v3163 = vsel %vm332, %v3106, 0.0
        %v3164 = vadd.f32 %v3162, %v3163
        %v3165 = vsel %vm332, %v3107, 0.0
        %v3166 = vadd.f32 %v3164, %v3165
        %v3167 = vsel %vm332, %v3108, 0.0
        %v3168 = vadd.f32 %v3166, %v3167
        %v3169 = vsel %vm332, %v3109, 0.0
        %v3170 = vadd.f32 %v3168, %v3169
        %v3171 = vsel %vm332, %v3110, 0.0
        %v3172 = vadd.f32 %v3170, %v3171
        %v3173 = vsel %vm332, %v3111, 0.0
        %v3174 = vadd.f32 %v3172, %v3173
        %v3175 = vrot.slane %v3174, 4
        %v3176 = vadd.f32 %v3174, %v3175
        %v3177 = vrot.slane %v3176, 2
        %v3178 = vadd.f32 %v3176, %v3177
        %v3179 = vrot.slane %v3178, 1
        %v3180 = vadd.f32 %v3178, %v3179
        %v3181 = vrcp.pop 256.0
        %v3182 = vmul.f32 %v3180, %v3181
        %v3183 = vld [vmem:[%s5] sm:$0xff]
        %v3184 = vld [vmem:[%s5 + $0x8] sm:$0xff]
        %v3185 = vld [vmem:[%s5 + $0x10] sm:$0xff]
        %v3186 = vld [vmem:[%s5 + $0x18] sm:$0xff]
        %v3187 = vld [vmem:[%s5 + $0x20] sm:$0xff]
        %v3188 = vld [vmem:[%s5 + $0x28] sm:$0xff]
        %v3189 = vld [vmem:[%s5 + $0x30] sm:$0xff]
        %v3190 = vld [vmem:[%s5 + $0x38] sm:$0xff]
        %v3191 = vld [vmem:[%s6] sm:$0x1]
        %v3193 = vsel %vm332, %v3182, 0
        %3195 = vmatprep.subr.mxu0 0.0
        %3196 = vmatpush1.msra.mxu0 %v3183
        %3197 = vmatprep.subr.mxu0 0.0
        %3198 = vmatpush1.msra.mxu0 %v3184
        %3199 = vmatprep.subr.mxu0 0.0
        %3200 = vmatpush1.msra.mxu0 %v3185
        %3201 = vmatprep.subr.mxu0 0.0
        %3202 = vmatpush1.msra.mxu0 %v3186
        %3203 = vmatprep.subr.mxu0 0.0
        %3204 = vmatpush1.msra.mxu0 %v3187
        %3205 = vmatprep.subr.mxu0 0.0
        %3206 = vmatpush1.msra.mxu0 %v3188
        %3207 = vmatprep.subr.mxu0 0.0
        %3208 = vmatpush1.msra.mxu0 %v3189
        %3209 = vmatprep.subr.mxu0 0.0
        %3210 = vmatpush1.msra.mxu0 %v3190
        %3211 = vmatprep.subr.mxu0 0.0
        %3212 = vmatpush1.msra.mxu0 0.0
        %3213 = vmatprep.subr.mxu0 0.0
        %3214 = vmatpush1.msra.mxu0 0.0
        %3215 = vmatprep.subr.mxu0 0.0
        %3216 = vmatpush1.msra.mxu0 0.0
        %3217 = vmatprep.subr.mxu0 0.0
        %3218 = vmatpush1.msra.mxu0 0.0
        %3219 = vmatprep.subr.mxu0 0.0
        %3220 = vmatpush1.msra.mxu0 0.0
        %3221 = vmatprep.subr.mxu0 0.0
        %3222 = vmatpush1.msra.mxu0 0.0
        %3223 = vmatprep.subr.mxu0 0.0
        %3224 = vmatpush1.msra.mxu0 0.0
        %3225 = vmatprep.subr.mxu0 0.0
        %3226 = vmatpush1.msra.mxu0 0.0
        %3227 = vmatprep.subr.mxu0 0.0
        %3228 = vmatpush1.msra.mxu0 0.0
        %3229 = vmatprep.subr.mxu0 0.0
        %3230 = vmatpush1.msra.mxu0 0.0
        %3231 = vmatprep.subr.mxu0 0.0
        %3232 = vmatpush1.msra.mxu0 0.0
        %3233 = vmatprep.subr.mxu0 0.0
        %3234 = vmatpush1.msra.mxu0 0.0
        %3235 = vmatprep.subr.mxu0 0.0
        %3236 = vmatpush1.msra.mxu0 0.0
        %3237 = vmatprep.subr.mxu0 0.0
        %3238 = vmatpush1.msra.mxu0 0.0
        %3239 = vmatprep.subr.mxu0 0.0
        %3240 = vmatpush1.msra.mxu0 0.0
        %3241 = vmatprep.subr.mxu0 0.0
        %3242 = vmatpush1.msra.mxu0 0.0
        %3243 = vmatprep.subr.mxu0 0.0
        %3244 = vmatpush1.msra.mxu0 0.0
        %3245 = vmatprep.subr.mxu0 0.0
        %3246 = vmatpush1.msra.mxu0 0.0
        %3247 = vmatprep.subr.mxu0 0.0
        %3248 = vmatpush1.msra.mxu0 0.0
        %3249 = vmatprep.subr.mxu0 0.0
        %3250 = vmatpush1.msra.mxu0 0.0
        %3251 = vmatprep.subr.mxu0 0.0
        %3252 = vmatpush1.msra.mxu0 0.0
        %3253 = vmatprep.subr.mxu0 0.0
        %3254 = vmatpush1.msra.mxu0 0.0
        %3255 = vmatprep.subr.mxu0 0.0
        %3256 = vmatpush1.msra.mxu0 0.0
        %3257 = vmatprep.subr.mxu0 0.0
        %3258 = vmatpush1.msra.mxu0 0.0
        %3259 = vmatprep.mubr.f32.mxu0 0.0
        %3260 = vmatmul.mubr.f32.gmra.mrb[0].mxu0 %v3193
        %v3261 = vpop.f32.mrb[0].mxu0
        %v3262 = vadd.f32 %v3191, %v3261
        %v3263 = vpop.f32.mrb[0].mxu0
        %3264 = vdwg.mxu0
        %v3265 = vmax.f32 %v3262, 0.0
        %v3266 = vld [vmem:[%s7] sm:$0xf]
        %v3267 = vld [vmem:[%s8] sm:$0x1]
        %vm3268 = vcmask 31744
        %v3270 = vsel %vm3268, %v3265, 0
        %vm3272 = vcmask 1043456
        %v3274 = vsel %vm3272, %v3266, 0
        %3276 = vmatprep.subr.mxu0 0.0
        %3277 = vmatpush1.msra.mxu0 %v3274
        %3278 = vmatprep.subr.mxu0 0.0
        %3279 = vmatpush1.msra.mxu0 0.0
        %3280 = vmatprep.subr.mxu0 0.0
        %3281 = vmatpush1.msra.mxu0 0.0
        %3282 = vmatprep.subr.mxu0 0.0
        %3283 = vmatpush1.msra.mxu0 0.0
        %3284 = vmatprep.subr.mxu0 0.0
        %3285 = vmatpush1.msra.mxu0 0.0
        %3286 = vmatprep.subr.mxu0 0.0
        %3287 = vmatpush1.msra.mxu0 0.0
        %3288 = vmatprep.subr.mxu0 0.0
        %3289 = vmatpush1.msra.mxu0 0.0
        %3290 = vmatprep.subr.mxu0 0.0
        %3291 = vmatpush1.msra.mxu0 0.0
        %3292 = vmatprep.subr.mxu0 0.0
        %3293 = vmatpush1.msra.mxu0 0.0
        %3294 = vmatprep.subr.mxu0 0.0
        %3295 = vmatpush1.msra.mxu0 0.0
        %3296 = vmatprep.subr.mxu0 0.0
        %3297 = vmatpush1.msra.mxu0 0.0
        %3298 = vmatprep.subr.mxu0 0.0
        %3299 = vmatpush1.msra.mxu0 0.0
        %3300 = vmatprep.subr.mxu0 0.0
        %3301 = vmatpush1.msra.mxu0 0.0
        %3302 = vmatprep.subr.mxu0 0.0
        %3303 = vmatpush1.msra.mxu0 0.0
        %3304 = vmatprep.subr.mxu0 0.0
        %3305 = vmatpush1.msra.mxu0 0.0
        %3306 = vmatprep.subr.mxu0 0.0
        %3307 = vmatpush1.msra.mxu0 0.0
        %3308 = vmatprep.subr.mxu0 0.0
        %3309 = vmatpush1.msra.mxu0 0.0
        %3310 = vmatprep.subr.mxu0 0.0
        %3311 = vmatpush1.msra.mxu0 0.0
        %3312 = vmatprep.subr.mxu0 0.0
        %3313 = vmatpush1.msra.mxu0 0.0
        %3314 = vmatprep.subr.mxu0 0.0
        %3315 = vmatpush1.msra.mxu0 0.0
        %3316 = vmatprep.subr.mxu0 0.0
        %3317 = vmatpush1.msra.mxu0 0.0
        %3318 = vmatprep.subr.mxu0 0.0
        %3319 = vmatpush1.msra.mxu0 0.0
        %3320 = vmatprep.subr.mxu0 0.0
        %3321 = vmatpush1.msra.mxu0 0.0
        %3322 = vmatprep.subr.mxu0 0.0
        %3323 = vmatpush1.msra.mxu0 0.0
        %3324 = vmatprep.subr.mxu0 0.0
        %3325 = vmatpush1.msra.mxu0 0.0
        %3326 = vmatprep.subr.mxu0 0.0
        %3327 = vmatpush1.msra.mxu0 0.0
        %3328 = vmatprep.subr.mxu0 0.0
        %3329 = vmatpush1.msra.mxu0 0.0
        %3330 = vmatprep.subr.mxu0 0.0
        %3331 = vmatpush1.msra.mxu0 0.0
        %3332 = vmatprep.subr.mxu0 0.0
        %3333 = vmatpush1.msra.mxu0 0.0
        %3334 = vmatprep.subr.mxu0 0.0
        %3335 = vmatpush1.msra.mxu0 0.0
        %3336 = vmatprep.subr.mxu0 0.0
        %3337 = vmatpush1.msra.mxu0 0.0
        %3338 = vmatprep.subr.mxu0 0.0
        %3339 = vmatpush1.msra.mxu0 0.0
        %3340 = vmatprep.mubr.f32.mxu0 0.0
        %3341 = vmatmul.mubr.f32.gmra.mrb[0].mxu0 %v3270
        %v3342 = vpop.f32.mrb[0].mxu0
        %v3343 = vadd.f32 %v3267, %v3342
        %v3344 = vpop.f32.mrb[0].mxu0
        %3345 = vdwg.mxu0
        %v3346 = vxor.u32 %v3343, 2147483648
        %v3347 = vmul.f32 %v3346, 1.442695
        %v3348 = vpow.pop %v3347
        %v3349 = vadd.f32 %v3348, 1.0
        %v3350 = vrcp.pop %v3349
        %v3351 = vmul.f32 1.0, %v3350
        %v3352 = vlaneseq
        %v3353 = vshrl.u32 %v3352, 7
        %v3354 = vsub.s32 0, %v3353
        %v3355 = vrot.slane %v3351, %v3354
        %v3356 = vmul.f32 %v3080, %v3355
        %v3357 = vmul.f32 %v3081, %v3355
        %v3358 = vmul.f32 %v3082, %v3355
        %v3359 = vmul.f32 %v3083, %v3355
        %v3360 = vmul.f32 %v3084, %v3355
        %v3361 = vmul.f32 %v3085, %v3355
        %v3362 = vmul.f32 %v3086, %v3355
        %v3363 = vmul.f32 %v3087, %v3355
        %v3364 = vmul.f32 %v3088, %v3355
        %v3365 = vmul.f32 %v3089, %v3355
        %v3366 = vmul.f32 %v3090, %v3355
        %v3367 = vmul.f32 %v3091, %v3355
        %v3368 = vmul.f32 %v3092, %v3355
        %v3369 = vmul.f32 %v3093, %v3355
        %v3370 = vmul.f32 %v3094, %v3355
        %v3371 = vmul.f32 %v3095, %v3355
        %v3372 = vmul.f32 %v3096, %v3355
        %v3373 = vmul.f32 %v3097, %v3355
        %v3374 = vmul.f32 %v3098, %v3355
        %v3375 = vmul.f32 %v3099, %v3355
        %v3376 = vmul.f32 %v3100, %v3355
        %v3377 = vmul.f32 %v3101, %v3355
        %v3378 = vmul.f32 %v3102, %v3355
        %v3379 = vmul.f32 %v3103, %v3355
        %v3380 = vmul.f32 %v3104, %v3355
        %v3381 = vmul.f32 %v3105, %v3355
        %v3382 = vmul.f32 %v3106, %v3355
        %v3383 = vmul.f32 %v3107, %v3355
        %v3384 = vmul.f32 %v3108, %v3355
        %v3385 = vmul.f32 %v3109, %v3355
        %v3386 = vmul.f32 %v3110, %v3355
        %v3387 = vmul.f32 %v3111, %v3355
        %v3388 = vadd.f32 %v388, %v3356
        %v3389 = vadd.f32 %v389, %v3357
        %v3390 = vadd.f32 %v390, %v3358
        %v3391 = vadd.f32 %v391, %v3359
        %v3392 = vadd.f32 %v392, %v3360
        %v3393 = vadd.f32 %v393, %v3361
        %v3394 = vadd.f32 %v394, %v3362
        %v3395 = vadd.f32 %v395, %v3363
        %v3396 = vadd.f32 %v396, %v3364
        %v3397 = vadd.f32 %v397, %v3365
        %v3398 = vadd.f32 %v398, %v3366
        %v3399 = vadd.f32 %v399, %v3367
        %v3400 = vadd.f32 %v400, %v3368
        %v3401 = vadd.f32 %v401, %v3369
        %v3402 = vadd.f32 %v402, %v3370
        %v3403 = vadd.f32 %v403, %v3371
        %v3404 = vadd.f32 %v404, %v3372
        %v3405 = vadd.f32 %v405, %v3373
        %v3406 = vadd.f32 %v406, %v3374
        %v3407 = vadd.f32 %v407, %v3375
        %v3408 = vadd.f32 %v408, %v3376
        %v3409 = vadd.f32 %v409, %v3377
        %v3410 = vadd.f32 %v410, %v3378
        %v3411 = vadd.f32 %v411, %v3379
        %v3412 = vadd.f32 %v412, %v3380
        %v3413 = vadd.f32 %v413, %v3381
        %v3414 = vadd.f32 %v414, %v3382
        %v3415 = vadd.f32 %v415, %v3383
        %v3416 = vadd.f32 %v416, %v3384
        %v3417 = vadd.f32 %v417, %v3385
        %v3418 = vadd.f32 %v418, %v3386
        %v3419 = vadd.f32 %v419, %v3387
        %3420 = vst.msk [vmem:[%s325] sm:$0xff] %vm332, %v3388
        %3421 = vst.msk [vmem:[%s325 + $0x8] sm:$0xff] %vm332, %v3389
        %3422 = vst.msk [vmem:[%s325 + $0x10] sm:$0xff] %vm332, %v3390
        %3423 = vst.msk [vmem:[%s325 + $0x18] sm:$0xff] %vm332, %v3391
        %3424 = vst.msk [vmem:[%s325 + $0x20] sm:$0xff] %vm332, %v3392
        %3425 = vst.msk [vmem:[%s325 + $0x28] sm:$0xff] %vm332, %v3393
        %3426 = vst.msk [vmem:[%s325 + $0x30] sm:$0xff] %vm332, %v3394
        %3427 = vst.msk [vmem:[%s325 + $0x38] sm:$0xff] %vm332, %v3395
        %3428 = vst.msk [vmem:[%s325 + $0x40] sm:$0xff] %vm332, %v3396
        %3429 = vst.msk [vmem:[%s325 + $0x48] sm:$0xff] %vm332, %v3397
        %3430 = vst.msk [vmem:[%s325 + $0x50] sm:$0xff] %vm332, %v3398
        %3431 = vst.msk [vmem:[%s325 + $0x58] sm:$0xff] %vm332, %v3399
        %3432 = vst.msk [vmem:[%s325 + $0x60] sm:$0xff] %vm332, %v3400
        %3433 = vst.msk [vmem:[%s325 + $0x68] sm:$0xff] %vm332, %v3401
        %3434 = vst.msk [vmem:[%s325 + $0x70] sm:$0xff] %vm332, %v3402
        %3435 = vst.msk [vmem:[%s325 + $0x78] sm:$0xff] %vm332, %v3403
        %3436 = vst.msk [vmem:[%s325 + $0x80] sm:$0xff] %vm332, %v3404
        %3437 = vst.msk [vmem:[%s325 + $0x88] sm:$0xff] %vm332, %v3405
        %3438 = vst.msk [vmem:[%s325 + $0x90] sm:$0xff] %vm332, %v3406
        %3439 = vst.msk [vmem:[%s325 + $0x98] sm:$0xff] %vm332, %v3407
        %3440 = vst.msk [vmem:[%s325 + $0xa0] sm:$0xff] %vm332, %v3408
        %3441 = vst.msk [vmem:[%s325 + $0xa8] sm:$0xff] %vm332, %v3409
        %3442 = vst.msk [vmem:[%s325 + $0xb0] sm:$0xff] %vm332, %v3410
        %3443 = vst.msk [vmem:[%s325 + $0xb8] sm:$0xff] %vm332, %v3411
        %3444 = vst.msk [vmem:[%s325 + $0xc0] sm:$0xff] %vm332, %v3412
        %3445 = vst.msk [vmem:[%s325 + $0xc8] sm:$0xff] %vm332, %v3413
        %3446 = vst.msk [vmem:[%s325 + $0xd0] sm:$0xff] %vm332, %v3414
        %3447 = vst.msk [vmem:[%s325 + $0xd8] sm:$0xff] %vm332, %v3415
        %3448 = vst.msk [vmem:[%s325 + $0xe0] sm:$0xff] %vm332, %v3416
        %3449 = vst.msk [vmem:[%s325 + $0xe8] sm:$0xff] %vm332, %v3417
        %3450 = vst.msk [vmem:[%s325 + $0xf0] sm:$0xff] %vm332, %v3418
        %3451 = vst.msk [vmem:[%s325 + $0xf8] sm:$0xff] %vm332, %v3419
        %s3452 = sand.u32 %s225, 1
        %s3453 = scalar_lea.sflag [#allocation5], %s3452
        %s3454 = sand.u32 %s225, 1
        %s3455 = smul.addr %s3454, 256
        %s3456 = scalar_lea.vmem [#allocation4], %s3455
        // Predicated region
        $region57: #{tpu_custom_call.1} parent=55 // pred_check
          %p3457 = pneg %p235
        $region58: #{tpu_custom_call.1} parent=55 // pred_check_branch
          %3459 = sbr.rel (%p3457) target = $region60
        $region59: #{tpu_custom_call.1} parent=55 // pred_region
          %s3461 = ssub.s32 4096, 4096
          %3462 = vsyncadd %s3453, %s3461
          %s3463 = smul.addr %s23, 32
          %s3464 = smul.addr %s3463, 128
          %s3465 = scalar_lea.hbm %s9, %s3464
          %s3466 = sshll.u32 %s3456, 4
          %s3467 = int_to_ptr.vmem [resolvable:$true] %s3466
          %3472 = dma.vmem_to_hbm [thread:$0]  %s3467, 4096, %s3465, %s3453, 128, 128, 8
        $region60: #{tpu_custom_call.1} parent=55 // pred_fallthru
          _
      $region56: #{tpu_custom_call.1} parent=5 // pred_fallthru
        _
      %p3473 = scmp.le.s32.totalorder 2, %s18
      // Predicated region
      $region61: #{tpu_custom_call.1} parent=5 // pred_check
        %p3474 = pneg %p3473
      $region62: #{tpu_custom_call.1} parent=5 // pred_check_branch
        %3476 = sbr.rel (%p3474) target = $region64
      $region63: #{tpu_custom_call.1} parent=5 // pred_region
        %s3477 = ssub.s32 %s18, 2
        // Predicated region
        $region65: #{tpu_custom_call.1} parent=63 // pred_check
          %p3478 = pneg %p241
        $region66: #{tpu_custom_call.1} parent=63 // pred_check_branch
          %3480 = sbr.rel (%p3478) target = $region68
        $region67: #{tpu_custom_call.1} parent=63 // pred_region
          %s3481 = sand.u32 %s226, 1
          %s3482 = scalar_lea.sflag [#allocation5], %s3481
          %s3483 = sand.u32 %s226, 1
          %s3484 = smul.addr %s3483, 256
          %s3485 = scalar_lea.vmem [#allocation4], %s3484
          %3486 = dma.done %s3482, 4096
        $region68: #{tpu_custom_call.1} parent=63 // pred_fallthru
          _
      $region64: #{tpu_custom_call.1} parent=5 // pred_fallthru
        _
    $region6: #{tpu_custom_call.1} parent=1 // loop_footer
      %s22 = sadd.s32 1, %s18
    $region7: #{tpu_custom_call.1} parent=1 // loop_footer_branch
      %17 = sbr.rel target = $region3
    $region8: #{tpu_custom_call.1} parent=1 // loop_exit
      _
    %3487 = vsyncpa [#allocation5], 1
    %s3488 = scalar_lea.sflag [#allocation5], 1
    %3489 = vsyncpa %s3488, 1

</llo_original>
